<compile_context>
chip_gen: v5e
topology: v5e:2x2
jax: 0.10.0
libtpu: 0.0.40
codegen_flags: <defaults>
</compile_context>

<pallas_src>
import functools

import jax
import jax.numpy as jnp
from jax import lax
from jax.experimental import pallas as pl
from jax.experimental.pallas import tpu as pltpu


def _round_up(x, m):
    return (x + m - 1) // m * m


# ---------------------------------------------------------------------------
# Fused Pallas kernel: all layers, all time steps, single invocation (no grid).
# ---------------------------------------------------------------------------
def encoder_lstm_kernel(x_ref, wih_ref, whh_ref, b_ref,
                        out_ref, hN_ref, cN_ref,
                        act_buf, gate_buf):
    # x_ref:    (T*Bp, P)    time-major padded embeddings, flattened (tile-aligned slab)
    # wih_ref:  (L, P, 4P)   padded, pre-transposed input weights
    # whh_ref:  (L, P, 4P)   padded, pre-transposed recurrent weights
    # b_ref:    (L, 1, 4P)   padded b_ih + b_hh
    # out_ref:  (Bp, T*P)    batch-first last-layer outputs (lane-dense column tiles)
    # hN_ref:   (L, Bp, P)   final hidden per layer
    # cN_ref:   (L, Bp, P)   final cell per layer
    # act_buf:  (T*Bp, P)    VMEM scratch: inter-layer activations (time-major slab)
    # gate_buf: (T*Bp, 4P)   VMEM scratch: hoisted input-projection gates
    L, Bp, P = hN_ref.shape
    T = x_ref.shape[0] // Bp

    for layer in range(L):                               # static layer loop (L is small)
        w_ih = wih_ref[layer]                            # (P, 4P), VMEM resident
        w_hh = whh_ref[layer]                            # (P, 4P)
        bias = b_ref[layer]                              # (1, 4P)

        # ---- hoisted input projection: ONE MXU matmul over all T time steps ----
        xs = x_ref[...] if layer == 0 else act_buf[...]  # (T*Bp, P)
        gate_buf[...] = jnp.dot(xs, w_ih,
                                preferred_element_type=jnp.float32) + bias

        # ---- recurrence: only h @ W_hh^T stays on the serial path ----
        # T is small & static here, so a fully static (unrolled) loop with static,
        # tile-aligned indices keeps every access a plain dense load/store.  Live
        # cross-iteration state is just h/c (one vreg each).  For long T, chunk the
        # time axis with a grid instead.
        h = jnp.zeros((Bp, P), jnp.float32)
        c = jnp.zeros((Bp, P), jnp.float32)
        for t in range(T):
            r = t * Bp
            g = gate_buf[r:r + Bp, :] + jnp.dot(h, w_hh,
                                                preferred_element_type=jnp.float32)
            # PyTorch gate order i, f, g, o; each slice is a whole 128-lane tile.
            i_g = jax.nn.sigmoid(g[:, 0 * P:1 * P])
            f_g = jax.nn.sigmoid(g[:, 1 * P:2 * P])
            g_g = jnp.tanh(g[:, 2 * P:3 * P])
            o_g = jax.nn.sigmoid(g[:, 3 * P:4 * P])
            c = f_g * c + i_g * g_g
            h = o_g * jnp.tanh(c)
            if layer < L - 1:
                act_buf[r:r + Bp, :] = h                 # feed next layer (stays in VMEM)
            else:
                # batch-first, lane-dense store: column tile t of (Bp, T*P)
                out_ref[:, t * P:(t + 1) * P] = h

        hN_ref[layer] = h                                # final states written once per layer
        cN_ref[layer] = c


# ---------------------------------------------------------------------------
# EncoderLSTM forward (wrapper = glue: embedding gather, padding, one pallas_call)
# ---------------------------------------------------------------------------
def encoder_lstm_forward(packed, src, *, hidden_dim):
    """src: (B, T) int32 token ids. Returns (outputs (B,T,H), hidden (L,B,H), cell (L,B,H))."""
    emb_pad = packed["embedding"]                        # (vocab, P), zero-padded columns
    wih, whh, bias = packed["wih"], packed["whh"], packed["bias"]
    L, P, G = wih.shape
    B, T = src.shape
    Bp = _round_up(B, 8)                                 # f32 sublane count

    # Embedding gather directly into the time-major layout the kernel wants (no
    # full-tensor transpose pass).  Dropout: eval-mode identity.
    x = jnp.take(emb_pad, jnp.transpose(src), axis=0).astype(jnp.float32)   # (T, B, P)
    if Bp != B:
        x = jnp.pad(x, ((0, 0), (0, Bp - B), (0, 0)))    # zero rows, sliced off below
    x = x.reshape(T * Bp, P)                             # tile-aligned 2-D slab

    out_flat, h_n, c_n = pl.pallas_call(
        encoder_lstm_kernel,
        out_shape=(
            jax.ShapeDtypeStruct((Bp, T * P), jnp.float32),   # batch-first outputs
            jax.ShapeDtypeStruct((L, Bp, P), jnp.float32),    # final hidden per layer
            jax.ShapeDtypeStruct((L, Bp, P), jnp.float32),    # final cell per layer
        ),
        scratch_shapes=[
            pltpu.VMEM((T * Bp, P), jnp.float32),             # inter-layer activations
            pltpu.VMEM((T * Bp, G), jnp.float32),             # hoisted input-projection gates
        ],
    )(x, wih, whh, bias)

    H = hidden_dim
    outputs = out_flat.reshape(Bp, T, P)[:B, :, :H]      # metadata reshape + small slice
    hidden = h_n[:, :B, :H]
    cell = c_n[:, :B, :H]
    return outputs, hidden, cell


# ---------------------------------------------------------------------------
# Parameter init (PyTorch layout) + packing into the padded kernel layout
# ---------------------------------------------------------------------------
def init_params(key, input_dim, emb_dim, enc_hid_dim, num_layers):
    keys = jax.random.split(key, 1 + 4 * num_layers)
    emb = jax.random.normal(keys[0], (input_dim, emb_dim), jnp.float32) * 0.1
    emb = emb.at[0].set(0.0)                             # padding_idx=0

    H = enc_hid_dim
    bound = 1.0 / jnp.sqrt(jnp.float32(H))
    layers = []
    for l in range(num_layers):
        in_dim = emb_dim if l == 0 else H
        k_ih, k_hh, k_bi, k_bh = keys[1 + 4 * l: 1 + 4 * (l + 1)]
        layers.append({
            "w_ih": jax.random.uniform(k_ih, (4 * H, in_dim), jnp.float32, -bound, bound),
            "w_hh": jax.random.uniform(k_hh, (4 * H, H), jnp.float32, -bound, bound),
            "b_ih": jax.random.uniform(k_bi, (4 * H,), jnp.float32, -bound, bound),
            "b_hh": jax.random.uniform(k_bh, (4 * H,), jnp.float32, -bound, bound),
        })
    return {"embedding": emb, "lstm": layers}


def pack_params(params):
    """Pad & stack PyTorch-layout LSTM params into the lane-aligned layout the kernel uses."""
    emb = params["embedding"]                            # (vocab, E)
    vocab, E = emb.shape
    H = params["lstm"][0]["w_hh"].shape[1]
    P = max(_round_up(E, 128), _round_up(H, 128))        # per-gate / feature padded width

    emb_pad = jnp.zeros((vocab, P), jnp.float32).at[:, :E].set(emb)

    wih_l, whh_l, b_l = [], [], []
    for layer in params["lstm"]:
        w_ih, w_hh = layer["w_ih"], layer["w_hh"]        # (4H, in_dim), (4H, H)
        b = layer["b_ih"] + layer["b_hh"]                # (4H,)
        in_dim = w_ih.shape[1]
        wih_p = jnp.zeros((P, 4 * P), jnp.float32)
        whh_p = jnp.zeros((P, 4 * P), jnp.float32)
        bias_p = jnp.zeros((1, 4 * P), jnp.float32)
        for k in range(4):                               # PyTorch gate order: i, f, g, o
            wih_p = wih_p.at[:in_dim, k * P:k * P + H].set(w_ih[k * H:(k + 1) * H, :].T)
            whh_p = whh_p.at[:H, k * P:k * P + H].set(w_hh[k * H:(k + 1) * H, :].T)
            bias_p = bias_p.at[0, k * P:k * P + H].set(b[k * H:(k + 1) * H])
        wih_l.append(wih_p)
        whh_l.append(whh_p)
        b_l.append(bias_p)

    return {"embedding": emb_pad,
            "wih": jnp.stack(wih_l),                     # (L, P, 4P)
            "whh": jnp.stack(whh_l),                     # (L, P, 4P)
            "bias": jnp.stack(b_l)}                      # (L, 1, 4P)


# ---------------------------------------------------------------------------
# Pure-JAX reference (unpadded) for a correctness sanity check
# ---------------------------------------------------------------------------
def encoder_lstm_reference(params, src):
    emb = params["embedding"]
    embedded = jnp.take(emb, src, axis=0).astype(jnp.float32)    # (B, T, E)
    x = jnp.transpose(embedded, (1, 0, 2))                       # (T, B, E)

    hiddens, cells = [], []
    for layer in params["lstm"]:
        w_ih_t = layer["w_ih"].T
        w_hh_t = layer["w_hh"].T
        bias = layer["b_ih"] + layer["b_hh"]
        H = layer["w_hh"].shape[1]
        B = x.shape[1]

        def step(carry, x_t):
            h, c = carry
            gates = x_t @ w_ih_t + h @ w_hh_t + bias
            i = jax.nn.sigmoid(gates[:, 0 * H:1 * H])
            f = jax.nn.sigmoid(gates[:, 1 * H:2 * H])
            g = jnp.tanh(gates[:, 2 * H:3 * H])
            o = jax.nn.sigmoid(gates[:, 3 * H:4 * H])
            c_new = f * c + i * g
            h_new = o * jnp.tanh(c_new)
            return (h_new, c_new), h_new

        init = (jnp.zeros((B, H), jnp.float32), jnp.zeros((B, H), jnp.float32))
        (h_n, c_n), outs = lax.scan(step, init, x)
        hiddens.append(h_n)
        cells.append(c_n)
        x = outs

    return jnp.transpose(x, (1, 0, 2)), jnp.stack(hiddens), jnp.stack(cells)


if __name__ == "__main__":
    INPUT_DIM = 50       # vocab size
    EMB_DIM = 32
    ENC_HID_DIM = 32
    NUM_LAYERS = 2
    BATCH = 2
    SEQ = 8

    key = jax.random.PRNGKey(0)
    k_params, k_src = jax.random.split(key)
    params = init_params(k_params, INPUT_DIM, EMB_DIM, ENC_HID_DIM, NUM_LAYERS)
    packed = pack_params(params)
    src = jax.random.randint(k_src, (BATCH, SEQ), 0, INPUT_DIM, dtype=jnp.int32)

    fwd = jax.jit(functools.partial(encoder_lstm_forward, packed, hidden_dim=ENC_HID_DIM))
    outputs, hidden, cell = fwd(src)
    jax.block_until_ready((outputs, hidden, cell))

    # Sanity check against the pure-JAX (unpadded) reference.
    ref_out, ref_h, ref_c = encoder_lstm_reference(params, src)
    assert outputs.shape == (BATCH, SEQ, ENC_HID_DIM)
    assert hidden.shape == (NUM_LAYERS, BATCH, ENC_HID_DIM)
    assert cell.shape == (NUM_LAYERS, BATCH, ENC_HID_DIM)
    assert jnp.allclose(outputs, ref_out, rtol=1e-4, atol=1e-5)
    assert jnp.allclose(hidden, ref_h, rtol=1e-4, atol=1e-5)
    assert jnp.allclose(cell, ref_c, rtol=1e-4, atol=1e-5)

    print("KERNEL_OK")
</pallas_src>

<mosaic_0001>
module attributes {stable_mosaic.version = 11 : i64} {
  func.func @encoder_lstm_kernel(%arg0: memref<64x128xf32, #tpu.memory_space<vmem>>, %arg1: memref<2x128x512xf32, #tpu.memory_space<vmem>>, %arg2: memref<2x128x512xf32, #tpu.memory_space<vmem>>, %arg3: memref<2x1x512xf32, #tpu.memory_space<vmem>>, %arg4: memref<8x1024xf32, #tpu.memory_space<vmem>>, %arg5: memref<2x8x128xf32, #tpu.memory_space<vmem>>, %arg6: memref<2x8x128xf32, #tpu.memory_space<vmem>>, %arg7: memref<64x128xf32, #tpu.memory_space<vmem>>, %arg8: memref<64x512xf32, #tpu.memory_space<vmem>>) attributes {dimension_semantics = [], scalar_prefetch = 0 : i64, scratch_operands = 2 : i64, tpu.core_type = #tpu.core_type<tc>} {
    %c0 = arith.constant 0 : index
    %c0_0 = arith.constant 0 : index
    %c0_1 = arith.constant 0 : index
    %0 = vector.load %arg1[%c0, %c0_0, %c0_1] : memref<2x128x512xf32, #tpu.memory_space<vmem>>, vector<1x128x512xf32>
    %1 = vector.shape_cast %0 : vector<1x128x512xf32> to vector<128x512xf32>
    %c0_2 = arith.constant 0 : index
    %c0_3 = arith.constant 0 : index
    %c0_4 = arith.constant 0 : index
    %2 = vector.load %arg2[%c0_2, %c0_3, %c0_4] : memref<2x128x512xf32, #tpu.memory_space<vmem>>, vector<1x128x512xf32>
    %3 = vector.shape_cast %2 : vector<1x128x512xf32> to vector<128x512xf32>
    %c0_5 = arith.constant 0 : index
    %c0_6 = arith.constant 0 : index
    %c0_7 = arith.constant 0 : index
    %4 = vector.load %arg3[%c0_5, %c0_6, %c0_7] : memref<2x1x512xf32, #tpu.memory_space<vmem>>, vector<1x1x512xf32>
    %5 = vector.shape_cast %4 : vector<1x1x512xf32> to vector<1x512xf32>
    %c0_8 = arith.constant 0 : index
    %c0_9 = arith.constant 0 : index
    %6 = vector.load %arg0[%c0_8, %c0_9] : memref<64x128xf32, #tpu.memory_space<vmem>>, vector<64x128xf32>
    %cst = arith.constant dense<0.000000e+00> : vector<64x512xf32>
    %7 = tpu.matmul %6, %1, %cst {dimension_numbers = #tpu.dot_dimension_numbers<[1], [0], [0], [1], [0, 0, 1, 1], [], []>} : vector<64x128xf32>, vector<128x512xf32>, vector<64x512xf32> -> vector<64x512xf32>
    %8 = vector.broadcast %5 : vector<1x512xf32> to vector<64x512xf32>
    %9 = arith.addf %7, %8 : vector<64x512xf32>
    %c0_10 = arith.constant 0 : index
    %c0_11 = arith.constant 0 : index
    %10 = vector.load %arg8[%c0_10, %c0_11] : memref<64x512xf32, #tpu.memory_space<vmem>>, vector<64x512xf32>
    tpu.vector_store %arg8[%c0_10, %c0_11], %9 {strides = array<i32>} : memref<64x512xf32, #tpu.memory_space<vmem>>, vector<64x512xf32>,
    %cst_12 = arith.constant 0.000000e+00 : f32
    %11 = vector.broadcast %cst_12 : f32 to vector<8x128xf32>
    %cst_13 = arith.constant 0.000000e+00 : f32
    %12 = vector.broadcast %cst_13 : f32 to vector<8x128xf32>
    %c0_14 = arith.constant 0 : index
    %c0_15 = arith.constant 0 : index
    %13 = vector.load %arg8[%c0_14, %c0_15] : memref<64x512xf32, #tpu.memory_space<vmem>>, vector<8x512xf32>
    %cst_16 = arith.constant dense<0.000000e+00> : vector<8x512xf32>
    %14 = tpu.matmul %11, %3, %cst_16 {dimension_numbers = #tpu.dot_dimension_numbers<[1], [0], [0], [1], [0, 0, 1, 1], [], []>} : vector<8x128xf32>, vector<128x512xf32>, vector<8x512xf32> -> vector<8x512xf32>
    %15 = arith.addf %13, %14 : vector<8x512xf32>
    %16 = vector.extract_strided_slice %15 {offsets = [0, 0], sizes = [8, 128], strides = [1, 1]} : vector<8x512xf32> to vector<8x128xf32>
    %17 = arith.negf %16 : vector<8x128xf32>
    %18 = math.exp %17 : vector<8x128xf32>
    %cst_17 = arith.constant 1.000000e+00 : f32
    %19 = vector.broadcast %cst_17 : f32 to vector<8x128xf32>
    %20 = arith.addf %19, %18 : vector<8x128xf32>
    %21 = arith.divf %19, %20 : vector<8x128xf32>
    %22 = vector.extract_strided_slice %15 {offsets = [0, 128], sizes = [8, 128], strides = [1, 1]} : vector<8x512xf32> to vector<8x128xf32>
    %23 = arith.negf %22 : vector<8x128xf32>
    %24 = math.exp %23 : vector<8x128xf32>
    %cst_18 = arith.constant 1.000000e+00 : f32
    %25 = vector.broadcast %cst_18 : f32 to vector<8x128xf32>
    %26 = arith.addf %25, %24 : vector<8x128xf32>
    %27 = arith.divf %25, %26 : vector<8x128xf32>
    %28 = vector.extract_strided_slice %15 {offsets = [0, 256], sizes = [8, 128], strides = [1, 1]} : vector<8x512xf32> to vector<8x128xf32>
    %29 = math.tanh %28 : vector<8x128xf32>
    %30 = vector.extract_strided_slice %15 {offsets = [0, 384], sizes = [8, 128], strides = [1, 1]} : vector<8x512xf32> to vector<8x128xf32>
    %31 = arith.negf %30 : vector<8x128xf32>
    %32 = math.exp %31 : vector<8x128xf32>
    %cst_19 = arith.constant 1.000000e+00 : f32
    %33 = vector.broadcast %cst_19 : f32 to vector<8x128xf32>
    %34 = arith.addf %33, %32 : vector<8x128xf32>
    %35 = arith.divf %33, %34 : vector<8x128xf32>
    %36 = arith.mulf %27, %12 : vector<8x128xf32>
    %37 = arith.mulf %21, %29 : vector<8x128xf32>
    %38 = arith.addf %36, %37 : vector<8x128xf32>
    %39 = math.tanh %38 : vector<8x128xf32>
    %40 = arith.mulf %35, %39 : vector<8x128xf32>
    %c0_20 = arith.constant 0 : index
    %c0_21 = arith.constant 0 : index
    %41 = vector.load %arg7[%c0_20, %c0_21] : memref<64x128xf32, #tpu.memory_space<vmem>>, vector<8x128xf32>
    tpu.vector_store %arg7[%c0_20, %c0_21], %40 {strides = array<i32>} : memref<64x128xf32, #tpu.memory_space<vmem>>, vector<8x128xf32>,
    %c8 = arith.constant 8 : index
    %c0_22 = arith.constant 0 : index
    %42 = vector.load %arg8[%c8, %c0_22] : memref<64x512xf32, #tpu.memory_space<vmem>>, vector<8x512xf32>
    %cst_23 = arith.constant dense<0.000000e+00> : vector<8x512xf32>
    %43 = tpu.matmul %40, %3, %cst_23 {dimension_numbers = #tpu.dot_dimension_numbers<[1], [0], [0], [1], [0, 0, 1, 1], [], []>} : vector<8x128xf32>, vector<128x512xf32>, vector<8x512xf32> -> vector<8x512xf32>
    %44 = arith.addf %42, %43 : vector<8x512xf32>
    %45 = vector.extract_strided_slice %44 {offsets = [0, 0], sizes = [8, 128], strides = [1, 1]} : vector<8x512xf32> to vector<8x128xf32>
    %46 = arith.negf %45 : vector<8x128xf32>
    %47 = math.exp %46 : vector<8x128xf32>
    %cst_24 = arith.constant 1.000000e+00 : f32
    %48 = vector.broadcast %cst_24 : f32 to vector<8x128xf32>
    %49 = arith.addf %48, %47 : vector<8x128xf32>
    %50 = arith.divf %48, %49 : vector<8x128xf32>
    %51 = vector.extract_strided_slice %44 {offsets = [0, 128], sizes = [8, 128], strides = [1, 1]} : vector<8x512xf32> to vector<8x128xf32>
    %52 = arith.negf %51 : vector<8x128xf32>
    %53 = math.exp %52 : vector<8x128xf32>
    %cst_25 = arith.constant 1.000000e+00 : f32
    %54 = vector.broadcast %cst_25 : f32 to vector<8x128xf32>
    %55 = arith.addf %54, %53 : vector<8x128xf32>
    %56 = arith.divf %54, %55 : vector<8x128xf32>
    %57 = vector.extract_strided_slice %44 {offsets = [0, 256], sizes = [8, 128], strides = [1, 1]} : vector<8x512xf32> to vector<8x128xf32>
    %58 = math.tanh %57 : vector<8x128xf32>
    %59 = vector.extract_strided_slice %44 {offsets = [0, 384], sizes = [8, 128], strides = [1, 1]} : vector<8x512xf32> to vector<8x128xf32>
    %60 = arith.negf %59 : vector<8x128xf32>
    %61 = math.exp %60 : vector<8x128xf32>
    %cst_26 = arith.constant 1.000000e+00 : f32
    %62 = vector.broadcast %cst_26 : f32 to vector<8x128xf32>
    %63 = arith.addf %62, %61 : vector<8x128xf32>
    %64 = arith.divf %62, %63 : vector<8x128xf32>
    %65 = arith.mulf %56, %38 : vector<8x128xf32>
    %66 = arith.mulf %50, %58 : vector<8x128xf32>
    %67 = arith.addf %65, %66 : vector<8x128xf32>
    %68 = math.tanh %67 : vector<8x128xf32>
    %69 = arith.mulf %64, %68 : vector<8x128xf32>
    %c8_27 = arith.constant 8 : index
    %c0_28 = arith.constant 0 : index
    %70 = vector.load %arg7[%c8_27, %c0_28] : memref<64x128xf32, #tpu.memory_space<vmem>>, vector<8x128xf32>
    tpu.vector_store %arg7[%c8_27, %c0_28], %69 {strides = array<i32>} : memref<64x128xf32, #tpu.memory_space<vmem>>, vector<8x128xf32>,
    %c16 = arith.constant 16 : index
    %c0_29 = arith.constant 0 : index
    %71 = vector.load %arg8[%c16, %c0_29] : memref<64x512xf32, #tpu.memory_space<vmem>>, vector<8x512xf32>
    %cst_30 = arith.constant dense<0.000000e+00> : vector<8x512xf32>
    %72 = tpu.matmul %69, %3, %cst_30 {dimension_numbers = #tpu.dot_dimension_numbers<[1], [0], [0], [1], [0, 0, 1, 1], [], []>} : vector<8x128xf32>, vector<128x512xf32>, vector<8x512xf32> -> vector<8x512xf32>
    %73 = arith.addf %71, %72 : vector<8x512xf32>
    %74 = vector.extract_strided_slice %73 {offsets = [0, 0], sizes = [8, 128], strides = [1, 1]} : vector<8x512xf32> to vector<8x128xf32>
    %75 = arith.negf %74 : vector<8x128xf32>
    %76 = math.exp %75 : vector<8x128xf32>
    %cst_31 = arith.constant 1.000000e+00 : f32
    %77 = vector.broadcast %cst_31 : f32 to vector<8x128xf32>
    %78 = arith.addf %77, %76 : vector<8x128xf32>
    %79 = arith.divf %77, %78 : vector<8x128xf32>
    %80 = vector.extract_strided_slice %73 {offsets = [0, 128], sizes = [8, 128], strides = [1, 1]} : vector<8x512xf32> to vector<8x128xf32>
    %81 = arith.negf %80 : vector<8x128xf32>
    %82 = math.exp %81 : vector<8x128xf32>
    %cst_32 = arith.constant 1.000000e+00 : f32
    %83 = vector.broadcast %cst_32 : f32 to vector<8x128xf32>
    %84 = arith.addf %83, %82 : vector<8x128xf32>
    %85 = arith.divf %83, %84 : vector<8x128xf32>
    %86 = vector.extract_strided_slice %73 {offsets = [0, 256], sizes = [8, 128], strides = [1, 1]} : vector<8x512xf32> to vector<8x128xf32>
    %87 = math.tanh %86 : vector<8x128xf32>
    %88 = vector.extract_strided_slice %73 {offsets = [0, 384], sizes = [8, 128], strides = [1, 1]} : vector<8x512xf32> to vector<8x128xf32>
    %89 = arith.negf %88 : vector<8x128xf32>
    %90 = math.exp %89 : vector<8x128xf32>
    %cst_33 = arith.constant 1.000000e+00 : f32
    %91 = vector.broadcast %cst_33 : f32 to vector<8x128xf32>
    %92 = arith.addf %91, %90 : vector<8x128xf32>
    %93 = arith.divf %91, %92 : vector<8x128xf32>
    %94 = arith.mulf %85, %67 : vector<8x128xf32>
    %95 = arith.mulf %79, %87 : vector<8x128xf32>
    %96 = arith.addf %94, %95 : vector<8x128xf32>
    %97 = math.tanh %96 : vector<8x128xf32>
    %98 = arith.mulf %93, %97 : vector<8x128xf32>
    %c16_34 = arith.constant 16 : index
    %c0_35 = arith.constant 0 : index
    %99 = vector.load %arg7[%c16_34, %c0_35] : memref<64x128xf32, #tpu.memory_space<vmem>>, vector<8x128xf32>
    tpu.vector_store %arg7[%c16_34, %c0_35], %98 {strides = array<i32>} : memref<64x128xf32, #tpu.memory_space<vmem>>, vector<8x128xf32>,
    %c24 = arith.constant 24 : index
    %c0_36 = arith.constant 0 : index
    %100 = vector.load %arg8[%c24, %c0_36] : memref<64x512xf32, #tpu.memory_space<vmem>>, vector<8x512xf32>
    %cst_37 = arith.constant dense<0.000000e+00> : vector<8x512xf32>
    %101 = tpu.matmul %98, %3, %cst_37 {dimension_numbers = #tpu.dot_dimension_numbers<[1], [0], [0], [1], [0, 0, 1, 1], [], []>} : vector<8x128xf32>, vector<128x512xf32>, vector<8x512xf32> -> vector<8x512xf32>
    %102 = arith.addf %100, %101 : vector<8x512xf32>
    %103 = vector.extract_strided_slice %102 {offsets = [0, 0], sizes = [8, 128], strides = [1, 1]} : vector<8x512xf32> to vector<8x128xf32>
    %104 = arith.negf %103 : vector<8x128xf32>
    %105 = math.exp %104 : vector<8x128xf32>
    %cst_38 = arith.constant 1.000000e+00 : f32
    %106 = vector.broadcast %cst_38 : f32 to vector<8x128xf32>
    %107 = arith.addf %106, %105 : vector<8x128xf32>
    %108 = arith.divf %106, %107 : vector<8x128xf32>
    %109 = vector.extract_strided_slice %102 {offsets = [0, 128], sizes = [8, 128], strides = [1, 1]} : vector<8x512xf32> to vector<8x128xf32>
    %110 = arith.negf %109 : vector<8x128xf32>
    %111 = math.exp %110 : vector<8x128xf32>
    %cst_39 = arith.constant 1.000000e+00 : f32
    %112 = vector.broadcast %cst_39 : f32 to vector<8x128xf32>
    %113 = arith.addf %112, %111 : vector<8x128xf32>
    %114 = arith.divf %112, %113 : vector<8x128xf32>
    %115 = vector.extract_strided_slice %102 {offsets = [0, 256], sizes = [8, 128], strides = [1, 1]} : vector<8x512xf32> to vector<8x128xf32>
    %116 = math.tanh %115 : vector<8x128xf32>
    %117 = vector.extract_strided_slice %102 {offsets = [0, 384], sizes = [8, 128], strides = [1, 1]} : vector<8x512xf32> to vector<8x128xf32>
    %118 = arith.negf %117 : vector<8x128xf32>
    %119 = math.exp %118 : vector<8x128xf32>
    %cst_40 = arith.constant 1.000000e+00 : f32
    %120 = vector.broadcast %cst_40 : f32 to vector<8x128xf32>
    %121 = arith.addf %120, %119 : vector<8x128xf32>
    %122 = arith.divf %120, %121 : vector<8x128xf32>
    %123 = arith.mulf %114, %96 : vector<8x128xf32>
    %124 = arith.mulf %108, %116 : vector<8x128xf32>
    %125 = arith.addf %123, %124 : vector<8x128xf32>
    %126 = math.tanh %125 : vector<8x128xf32>
    %127 = arith.mulf %122, %126 : vector<8x128xf32>
    %c24_41 = arith.constant 24 : index
    %c0_42 = arith.constant 0 : index
    %128 = vector.load %arg7[%c24_41, %c0_42] : memref<64x128xf32, #tpu.memory_space<vmem>>, vector<8x128xf32>
    tpu.vector_store %arg7[%c24_41, %c0_42], %127 {strides = array<i32>} : memref<64x128xf32, #tpu.memory_space<vmem>>, vector<8x128xf32>,
    %c32 = arith.constant 32 : index
    %c0_43 = arith.constant 0 : index
    %129 = vector.load %arg8[%c32, %c0_43] : memref<64x512xf32, #tpu.memory_space<vmem>>, vector<8x512xf32>
    %cst_44 = arith.constant dense<0.000000e+00> : vector<8x512xf32>
    %130 = tpu.matmul %127, %3, %cst_44 {dimension_numbers = #tpu.dot_dimension_numbers<[1], [0], [0], [1], [0, 0, 1, 1], [], []>} : vector<8x128xf32>, vector<128x512xf32>, vector<8x512xf32> -> vector<8x512xf32>
    %131 = arith.addf %129, %130 : vector<8x512xf32>
    %132 = vector.extract_strided_slice %131 {offsets = [0, 0], sizes = [8, 128], strides = [1, 1]} : vector<8x512xf32> to vector<8x128xf32>
    %133 = arith.negf %132 : vector<8x128xf32>
    %134 = math.exp %133 : vector<8x128xf32>
    %cst_45 = arith.constant 1.000000e+00 : f32
    %135 = vector.broadcast %cst_45 : f32 to vector<8x128xf32>
    %136 = arith.addf %135, %134 : vector<8x128xf32>
    %137 = arith.divf %135, %136 : vector<8x128xf32>
    %138 = vector.extract_strided_slice %131 {offsets = [0, 128], sizes = [8, 128], strides = [1, 1]} : vector<8x512xf32> to vector<8x128xf32>
    %139 = arith.negf %138 : vector<8x128xf32>
    %140 = math.exp %139 : vector<8x128xf32>
    %cst_46 = arith.constant 1.000000e+00 : f32
    %141 = vector.broadcast %cst_46 : f32 to vector<8x128xf32>
    %142 = arith.addf %141, %140 : vector<8x128xf32>
    %143 = arith.divf %141, %142 : vector<8x128xf32>
    %144 = vector.extract_strided_slice %131 {offsets = [0, 256], sizes = [8, 128], strides = [1, 1]} : vector<8x512xf32> to vector<8x128xf32>
    %145 = math.tanh %144 : vector<8x128xf32>
    %146 = vector.extract_strided_slice %131 {offsets = [0, 384], sizes = [8, 128], strides = [1, 1]} : vector<8x512xf32> to vector<8x128xf32>
    %147 = arith.negf %146 : vector<8x128xf32>
    %148 = math.exp %147 : vector<8x128xf32>
    %cst_47 = arith.constant 1.000000e+00 : f32
    %149 = vector.broadcast %cst_47 : f32 to vector<8x128xf32>
    %150 = arith.addf %149, %148 : vector<8x128xf32>
    %151 = arith.divf %149, %150 : vector<8x128xf32>
    %152 = arith.mulf %143, %125 : vector<8x128xf32>
    %153 = arith.mulf %137, %145 : vector<8x128xf32>
    %154 = arith.addf %152, %153 : vector<8x128xf32>
    %155 = math.tanh %154 : vector<8x128xf32>
    %156 = arith.mulf %151, %155 : vector<8x128xf32>
    %c32_48 = arith.constant 32 : index
    %c0_49 = arith.constant 0 : index
    %157 = vector.load %arg7[%c32_48, %c0_49] : memref<64x128xf32, #tpu.memory_space<vmem>>, vector<8x128xf32>
    tpu.vector_store %arg7[%c32_48, %c0_49], %156 {strides = array<i32>} : memref<64x128xf32, #tpu.memory_space<vmem>>, vector<8x128xf32>,
    %c40 = arith.constant 40 : index
    %c0_50 = arith.constant 0 : index
    %158 = vector.load %arg8[%c40, %c0_50] : memref<64x512xf32, #tpu.memory_space<vmem>>, vector<8x512xf32>
    %cst_51 = arith.constant dense<0.000000e+00> : vector<8x512xf32>
    %159 = tpu.matmul %156, %3, %cst_51 {dimension_numbers = #tpu.dot_dimension_numbers<[1], [0], [0], [1], [0, 0, 1, 1], [], []>} : vector<8x128xf32>, vector<128x512xf32>, vector<8x512xf32> -> vector<8x512xf32>
    %160 = arith.addf %158, %159 : vector<8x512xf32>
    %161 = vector.extract_strided_slice %160 {offsets = [0, 0], sizes = [8, 128], strides = [1, 1]} : vector<8x512xf32> to vector<8x128xf32>
    %162 = arith.negf %161 : vector<8x128xf32>
    %163 = math.exp %162 : vector<8x128xf32>
    %cst_52 = arith.constant 1.000000e+00 : f32
    %164 = vector.broadcast %cst_52 : f32 to vector<8x128xf32>
    %165 = arith.addf %164, %163 : vector<8x128xf32>
    %166 = arith.divf %164, %165 : vector<8x128xf32>
    %167 = vector.extract_strided_slice %160 {offsets = [0, 128], sizes = [8, 128], strides = [1, 1]} : vector<8x512xf32> to vector<8x128xf32>
    %168 = arith.negf %167 : vector<8x128xf32>
    %169 = math.exp %168 : vector<8x128xf32>
    %cst_53 = arith.constant 1.000000e+00 : f32
    %170 = vector.broadcast %cst_53 : f32 to vector<8x128xf32>
    %171 = arith.addf %170, %169 : vector<8x128xf32>
    %172 = arith.divf %170, %171 : vector<8x128xf32>
    %173 = vector.extract_strided_slice %160 {offsets = [0, 256], sizes = [8, 128], strides = [1, 1]} : vector<8x512xf32> to vector<8x128xf32>
    %174 = math.tanh %173 : vector<8x128xf32>
    %175 = vector.extract_strided_slice %160 {offsets = [0, 384], sizes = [8, 128], strides = [1, 1]} : vector<8x512xf32> to vector<8x128xf32>
    %176 = arith.negf %175 : vector<8x128xf32>
    %177 = math.exp %176 : vector<8x128xf32>
    %cst_54 = arith.constant 1.000000e+00 : f32
    %178 = vector.broadcast %cst_54 : f32 to vector<8x128xf32>
    %179 = arith.addf %178, %177 : vector<8x128xf32>
    %180 = arith.divf %178, %179 : vector<8x128xf32>
    %181 = arith.mulf %172, %154 : vector<8x128xf32>
    %182 = arith.mulf %166, %174 : vector<8x128xf32>
    %183 = arith.addf %181, %182 : vector<8x128xf32>
    %184 = math.tanh %183 : vector<8x128xf32>
    %185 = arith.mulf %180, %184 : vector<8x128xf32>
    %c40_55 = arith.constant 40 : index
    %c0_56 = arith.constant 0 : index
    %186 = vector.load %arg7[%c40_55, %c0_56] : memref<64x128xf32, #tpu.memory_space<vmem>>, vector<8x128xf32>
    tpu.vector_store %arg7[%c40_55, %c0_56], %185 {strides = array<i32>} : memref<64x128xf32, #tpu.memory_space<vmem>>, vector<8x128xf32>,
    %c48 = arith.constant 48 : index
    %c0_57 = arith.constant 0 : index
    %187 = vector.load %arg8[%c48, %c0_57] : memref<64x512xf32, #tpu.memory_space<vmem>>, vector<8x512xf32>
    %cst_58 = arith.constant dense<0.000000e+00> : vector<8x512xf32>
    %188 = tpu.matmul %185, %3, %cst_58 {dimension_numbers = #tpu.dot_dimension_numbers<[1], [0], [0], [1], [0, 0, 1, 1], [], []>} : vector<8x128xf32>, vector<128x512xf32>, vector<8x512xf32> -> vector<8x512xf32>
    %189 = arith.addf %187, %188 : vector<8x512xf32>
    %190 = vector.extract_strided_slice %189 {offsets = [0, 0], sizes = [8, 128], strides = [1, 1]} : vector<8x512xf32> to vector<8x128xf32>
    %191 = arith.negf %190 : vector<8x128xf32>
    %192 = math.exp %191 : vector<8x128xf32>
    %cst_59 = arith.constant 1.000000e+00 : f32
    %193 = vector.broadcast %cst_59 : f32 to vector<8x128xf32>
    %194 = arith.addf %193, %192 : vector<8x128xf32>
    %195 = arith.divf %193, %194 : vector<8x128xf32>
    %196 = vector.extract_strided_slice %189 {offsets = [0, 128], sizes = [8, 128], strides = [1, 1]} : vector<8x512xf32> to vector<8x128xf32>
    %197 = arith.negf %196 : vector<8x128xf32>
    %198 = math.exp %197 : vector<8x128xf32>
    %cst_60 = arith.constant 1.000000e+00 : f32
    %199 = vector.broadcast %cst_60 : f32 to vector<8x128xf32>
    %200 = arith.addf %199, %198 : vector<8x128xf32>
    %201 = arith.divf %199, %200 : vector<8x128xf32>
    %202 = vector.extract_strided_slice %189 {offsets = [0, 256], sizes = [8, 128], strides = [1, 1]} : vector<8x512xf32> to vector<8x128xf32>
    %203 = math.tanh %202 : vector<8x128xf32>
    %204 = vector.extract_strided_slice %189 {offsets = [0, 384], sizes = [8, 128], strides = [1, 1]} : vector<8x512xf32> to vector<8x128xf32>
    %205 = arith.negf %204 : vector<8x128xf32>
    %206 = math.exp %205 : vector<8x128xf32>
    %cst_61 = arith.constant 1.000000e+00 : f32
    %207 = vector.broadcast %cst_61 : f32 to vector<8x128xf32>
    %208 = arith.addf %207, %206 : vector<8x128xf32>
    %209 = arith.divf %207, %208 : vector<8x128xf32>
    %210 = arith.mulf %201, %183 : vector<8x128xf32>
    %211 = arith.mulf %195, %203 : vector<8x128xf32>
    %212 = arith.addf %210, %211 : vector<8x128xf32>
    %213 = math.tanh %212 : vector<8x128xf32>
    %214 = arith.mulf %209, %213 : vector<8x128xf32>
    %c48_62 = arith.constant 48 : index
    %c0_63 = arith.constant 0 : index
    %215 = vector.load %arg7[%c48_62, %c0_63] : memref<64x128xf32, #tpu.memory_space<vmem>>, vector<8x128xf32>
    tpu.vector_store %arg7[%c48_62, %c0_63], %214 {strides = array<i32>} : memref<64x128xf32, #tpu.memory_space<vmem>>, vector<8x128xf32>,
    %c56 = arith.constant 56 : index
    %c0_64 = arith.constant 0 : index
    %216 = vector.load %arg8[%c56, %c0_64] : memref<64x512xf32, #tpu.memory_space<vmem>>, vector<8x512xf32>
    %cst_65 = arith.constant dense<0.000000e+00> : vector<8x512xf32>
    %217 = tpu.matmul %214, %3, %cst_65 {dimension_numbers = #tpu.dot_dimension_numbers<[1], [0], [0], [1], [0, 0, 1, 1], [], []>} : vector<8x128xf32>, vector<128x512xf32>, vector<8x512xf32> -> vector<8x512xf32>
    %218 = arith.addf %216, %217 : vector<8x512xf32>
    %219 = vector.extract_strided_slice %218 {offsets = [0, 0], sizes = [8, 128], strides = [1, 1]} : vector<8x512xf32> to vector<8x128xf32>
    %220 = arith.negf %219 : vector<8x128xf32>
    %221 = math.exp %220 : vector<8x128xf32>
    %cst_66 = arith.constant 1.000000e+00 : f32
    %222 = vector.broadcast %cst_66 : f32 to vector<8x128xf32>
    %223 = arith.addf %222, %221 : vector<8x128xf32>
    %224 = arith.divf %222, %223 : vector<8x128xf32>
    %225 = vector.extract_strided_slice %218 {offsets = [0, 128], sizes = [8, 128], strides = [1, 1]} : vector<8x512xf32> to vector<8x128xf32>
    %226 = arith.negf %225 : vector<8x128xf32>
    %227 = math.exp %226 : vector<8x128xf32>
    %cst_67 = arith.constant 1.000000e+00 : f32
    %228 = vector.broadcast %cst_67 : f32 to vector<8x128xf32>
    %229 = arith.addf %228, %227 : vector<8x128xf32>
    %230 = arith.divf %228, %229 : vector<8x128xf32>
    %231 = vector.extract_strided_slice %218 {offsets = [0, 256], sizes = [8, 128], strides = [1, 1]} : vector<8x512xf32> to vector<8x128xf32>
    %232 = math.tanh %231 : vector<8x128xf32>
    %233 = vector.extract_strided_slice %218 {offsets = [0, 384], sizes = [8, 128], strides = [1, 1]} : vector<8x512xf32> to vector<8x128xf32>
    %234 = arith.negf %233 : vector<8x128xf32>
    %235 = math.exp %234 : vector<8x128xf32>
    %cst_68 = arith.constant 1.000000e+00 : f32
    %236 = vector.broadcast %cst_68 : f32 to vector<8x128xf32>
    %237 = arith.addf %236, %235 : vector<8x128xf32>
    %238 = arith.divf %236, %237 : vector<8x128xf32>
    %239 = arith.mulf %230, %212 : vector<8x128xf32>
    %240 = arith.mulf %224, %232 : vector<8x128xf32>
    %241 = arith.addf %239, %240 : vector<8x128xf32>
    %242 = math.tanh %241 : vector<8x128xf32>
    %243 = arith.mulf %238, %242 : vector<8x128xf32>
    %c56_69 = arith.constant 56 : index
    %c0_70 = arith.constant 0 : index
    %244 = vector.load %arg7[%c56_69, %c0_70] : memref<64x128xf32, #tpu.memory_space<vmem>>, vector<8x128xf32>
    tpu.vector_store %arg7[%c56_69, %c0_70], %243 {strides = array<i32>} : memref<64x128xf32, #tpu.memory_space<vmem>>, vector<8x128xf32>,
    %c0_71 = arith.constant 0 : index
    %c0_72 = arith.constant 0 : index
    %c0_73 = arith.constant 0 : index
    %245 = vector.load %arg5[%c0_71, %c0_72, %c0_73] : memref<2x8x128xf32, #tpu.memory_space<vmem>>, vector<1x8x128xf32>
    %246 = vector.shape_cast %245 : vector<1x8x128xf32> to vector<8x128xf32>
    %247 = vector.shape_cast %243 : vector<8x128xf32> to vector<1x8x128xf32>
    tpu.vector_store %arg5[%c0_71, %c0_72, %c0_73], %247 {strides = array<i32>} : memref<2x8x128xf32, #tpu.memory_space<vmem>>, vector<1x8x128xf32>,
    %c0_74 = arith.constant 0 : index
    %c0_75 = arith.constant 0 : index
    %c0_76 = arith.constant 0 : index
    %248 = vector.load %arg6[%c0_74, %c0_75, %c0_76] : memref<2x8x128xf32, #tpu.memory_space<vmem>>, vector<1x8x128xf32>
    %249 = vector.shape_cast %248 : vector<1x8x128xf32> to vector<8x128xf32>
    %250 = vector.shape_cast %241 : vector<8x128xf32> to vector<1x8x128xf32>
    tpu.vector_store %arg6[%c0_74, %c0_75, %c0_76], %250 {strides = array<i32>} : memref<2x8x128xf32, #tpu.memory_space<vmem>>, vector<1x8x128xf32>,
    %c1 = arith.constant 1 : index
    %c0_77 = arith.constant 0 : index
    %c0_78 = arith.constant 0 : index
    %251 = vector.load %arg1[%c1, %c0_77, %c0_78] : memref<2x128x512xf32, #tpu.memory_space<vmem>>, vector<1x128x512xf32>
    %252 = vector.shape_cast %251 : vector<1x128x512xf32> to vector<128x512xf32>
    %c1_79 = arith.constant 1 : index
    %c0_80 = arith.constant 0 : index
    %c0_81 = arith.constant 0 : index
    %253 = vector.load %arg2[%c1_79, %c0_80, %c0_81] : memref<2x128x512xf32, #tpu.memory_space<vmem>>, vector<1x128x512xf32>
    %254 = vector.shape_cast %253 : vector<1x128x512xf32> to vector<128x512xf32>
    %c1_82 = arith.constant 1 : index
    %c0_83 = arith.constant 0 : index
    %c0_84 = arith.constant 0 : index
    %255 = vector.load %arg3[%c1_82, %c0_83, %c0_84] : memref<2x1x512xf32, #tpu.memory_space<vmem>>, vector<1x1x512xf32>
    %256 = vector.shape_cast %255 : vector<1x1x512xf32> to vector<1x512xf32>
    %c0_85 = arith.constant 0 : index
    %c0_86 = arith.constant 0 : index
    %257 = vector.load %arg7[%c0_85, %c0_86] : memref<64x128xf32, #tpu.memory_space<vmem>>, vector<64x128xf32>
    %cst_87 = arith.constant dense<0.000000e+00> : vector<64x512xf32>
    %258 = tpu.matmul %257, %252, %cst_87 {dimension_numbers = #tpu.dot_dimension_numbers<[1], [0], [0], [1], [0, 0, 1, 1], [], []>} : vector<64x128xf32>, vector<128x512xf32>, vector<64x512xf32> -> vector<64x512xf32>
    %259 = vector.broadcast %256 : vector<1x512xf32> to vector<64x512xf32>
    %260 = arith.addf %258, %259 : vector<64x512xf32>
    %c0_88 = arith.constant 0 : index
    %c0_89 = arith.constant 0 : index
    %261 = vector.load %arg8[%c0_88, %c0_89] : memref<64x512xf32, #tpu.memory_space<vmem>>, vector<64x512xf32>
    tpu.vector_store %arg8[%c0_88, %c0_89], %260 {strides = array<i32>} : memref<64x512xf32, #tpu.memory_space<vmem>>, vector<64x512xf32>,
    %cst_90 = arith.constant 0.000000e+00 : f32
    %262 = vector.broadcast %cst_90 : f32 to vector<8x128xf32>
    %cst_91 = arith.constant 0.000000e+00 : f32
    %263 = vector.broadcast %cst_91 : f32 to vector<8x128xf32>
    %c0_92 = arith.constant 0 : index
    %c0_93 = arith.constant 0 : index
    %264 = vector.load %arg8[%c0_92, %c0_93] : memref<64x512xf32, #tpu.memory_space<vmem>>, vector<8x512xf32>
    %cst_94 = arith.constant dense<0.000000e+00> : vector<8x512xf32>
    %265 = tpu.matmul %262, %254, %cst_94 {dimension_numbers = #tpu.dot_dimension_numbers<[1], [0], [0], [1], [0, 0, 1, 1], [], []>} : vector<8x128xf32>, vector<128x512xf32>, vector<8x512xf32> -> vector<8x512xf32>
    %266 = arith.addf %264, %265 : vector<8x512xf32>
    %267 = vector.extract_strided_slice %266 {offsets = [0, 0], sizes = [8, 128], strides = [1, 1]} : vector<8x512xf32> to vector<8x128xf32>
    %268 = arith.negf %267 : vector<8x128xf32>
    %269 = math.exp %268 : vector<8x128xf32>
    %cst_95 = arith.constant 1.000000e+00 : f32
    %270 = vector.broadcast %cst_95 : f32 to vector<8x128xf32>
    %271 = arith.addf %270, %269 : vector<8x128xf32>
    %272 = arith.divf %270, %271 : vector<8x128xf32>
    %273 = vector.extract_strided_slice %266 {offsets = [0, 128], sizes = [8, 128], strides = [1, 1]} : vector<8x512xf32> to vector<8x128xf32>
    %274 = arith.negf %273 : vector<8x128xf32>
    %275 = math.exp %274 : vector<8x128xf32>
    %cst_96 = arith.constant 1.000000e+00 : f32
    %276 = vector.broadcast %cst_96 : f32 to vector<8x128xf32>
    %277 = arith.addf %276, %275 : vector<8x128xf32>
    %278 = arith.divf %276, %277 : vector<8x128xf32>
    %279 = vector.extract_strided_slice %266 {offsets = [0, 256], sizes = [8, 128], strides = [1, 1]} : vector<8x512xf32> to vector<8x128xf32>
    %280 = math.tanh %279 : vector<8x128xf32>
    %281 = vector.extract_strided_slice %266 {offsets = [0, 384], sizes = [8, 128], strides = [1, 1]} : vector<8x512xf32> to vector<8x128xf32>
    %282 = arith.negf %281 : vector<8x128xf32>
    %283 = math.exp %282 : vector<8x128xf32>
    %cst_97 = arith.constant 1.000000e+00 : f32
    %284 = vector.broadcast %cst_97 : f32 to vector<8x128xf32>
    %285 = arith.addf %284, %283 : vector<8x128xf32>
    %286 = arith.divf %284, %285 : vector<8x128xf32>
    %287 = arith.mulf %278, %263 : vector<8x128xf32>
    %288 = arith.mulf %272, %280 : vector<8x128xf32>
    %289 = arith.addf %287, %288 : vector<8x128xf32>
    %290 = math.tanh %289 : vector<8x128xf32>
    %291 = arith.mulf %286, %290 : vector<8x128xf32>
    %c0_98 = arith.constant 0 : index
    %c0_99 = arith.constant 0 : index
    %292 = vector.load %arg4[%c0_98, %c0_99] : memref<8x1024xf32, #tpu.memory_space<vmem>>, vector<8x128xf32>
    tpu.vector_store %arg4[%c0_98, %c0_99], %291 {strides = array<i32>} : memref<8x1024xf32, #tpu.memory_space<vmem>>, vector<8x128xf32>,
    %c8_100 = arith.constant 8 : index
    %c0_101 = arith.constant 0 : index
    %293 = vector.load %arg8[%c8_100, %c0_101] : memref<64x512xf32, #tpu.memory_space<vmem>>, vector<8x512xf32>
    %cst_102 = arith.constant dense<0.000000e+00> : vector<8x512xf32>
    %294 = tpu.matmul %291, %254, %cst_102 {dimension_numbers = #tpu.dot_dimension_numbers<[1], [0], [0], [1], [0, 0, 1, 1], [], []>} : vector<8x128xf32>, vector<128x512xf32>, vector<8x512xf32> -> vector<8x512xf32>
    %295 = arith.addf %293, %294 : vector<8x512xf32>
    %296 = vector.extract_strided_slice %295 {offsets = [0, 0], sizes = [8, 128], strides = [1, 1]} : vector<8x512xf32> to vector<8x128xf32>
    %297 = arith.negf %296 : vector<8x128xf32>
    %298 = math.exp %297 : vector<8x128xf32>
    %cst_103 = arith.constant 1.000000e+00 : f32
    %299 = vector.broadcast %cst_103 : f32 to vector<8x128xf32>
    %300 = arith.addf %299, %298 : vector<8x128xf32>
    %301 = arith.divf %299, %300 : vector<8x128xf32>
    %302 = vector.extract_strided_slice %295 {offsets = [0, 128], sizes = [8, 128], strides = [1, 1]} : vector<8x512xf32> to vector<8x128xf32>
    %303 = arith.negf %302 : vector<8x128xf32>
    %304 = math.exp %303 : vector<8x128xf32>
    %cst_104 = arith.constant 1.000000e+00 : f32
    %305 = vector.broadcast %cst_104 : f32 to vector<8x128xf32>
    %306 = arith.addf %305, %304 : vector<8x128xf32>
    %307 = arith.divf %305, %306 : vector<8x128xf32>
    %308 = vector.extract_strided_slice %295 {offsets = [0, 256], sizes = [8, 128], strides = [1, 1]} : vector<8x512xf32> to vector<8x128xf32>
    %309 = math.tanh %308 : vector<8x128xf32>
    %310 = vector.extract_strided_slice %295 {offsets = [0, 384], sizes = [8, 128], strides = [1, 1]} : vector<8x512xf32> to vector<8x128xf32>
    %311 = arith.negf %310 : vector<8x128xf32>
    %312 = math.exp %311 : vector<8x128xf32>
    %cst_105 = arith.constant 1.000000e+00 : f32
    %313 = vector.broadcast %cst_105 : f32 to vector<8x128xf32>
    %314 = arith.addf %313, %312 : vector<8x128xf32>
    %315 = arith.divf %313, %314 : vector<8x128xf32>
    %316 = arith.mulf %307, %289 : vector<8x128xf32>
    %317 = arith.mulf %301, %309 : vector<8x128xf32>
    %318 = arith.addf %316, %317 : vector<8x128xf32>
    %319 = math.tanh %318 : vector<8x128xf32>
    %320 = arith.mulf %315, %319 : vector<8x128xf32>
    %c0_106 = arith.constant 0 : index
    %c128 = arith.constant 128 : index
    %321 = vector.load %arg4[%c0_106, %c128] : memref<8x1024xf32, #tpu.memory_space<vmem>>, vector<8x128xf32>
    tpu.vector_store %arg4[%c0_106, %c128], %320 {strides = array<i32>} : memref<8x1024xf32, #tpu.memory_space<vmem>>, vector<8x128xf32>,
    %c16_107 = arith.constant 16 : index
    %c0_108 = arith.constant 0 : index
    %322 = vector.load %arg8[%c16_107, %c0_108] : memref<64x512xf32, #tpu.memory_space<vmem>>, vector<8x512xf32>
    %cst_109 = arith.constant dense<0.000000e+00> : vector<8x512xf32>
    %323 = tpu.matmul %320, %254, %cst_109 {dimension_numbers = #tpu.dot_dimension_numbers<[1], [0], [0], [1], [0, 0, 1, 1], [], []>} : vector<8x128xf32>, vector<128x512xf32>, vector<8x512xf32> -> vector<8x512xf32>
    %324 = arith.addf %322, %323 : vector<8x512xf32>
    %325 = vector.extract_strided_slice %324 {offsets = [0, 0], sizes = [8, 128], strides = [1, 1]} : vector<8x512xf32> to vector<8x128xf32>
    %326 = arith.negf %325 : vector<8x128xf32>
    %327 = math.exp %326 : vector<8x128xf32>
    %cst_110 = arith.constant 1.000000e+00 : f32
    %328 = vector.broadcast %cst_110 : f32 to vector<8x128xf32>
    %329 = arith.addf %328, %327 : vector<8x128xf32>
    %330 = arith.divf %328, %329 : vector<8x128xf32>
    %331 = vector.extract_strided_slice %324 {offsets = [0, 128], sizes = [8, 128], strides = [1, 1]} : vector<8x512xf32> to vector<8x128xf32>
    %332 = arith.negf %331 : vector<8x128xf32>
    %333 = math.exp %332 : vector<8x128xf32>
    %cst_111 = arith.constant 1.000000e+00 : f32
    %334 = vector.broadcast %cst_111 : f32 to vector<8x128xf32>
    %335 = arith.addf %334, %333 : vector<8x128xf32>
    %336 = arith.divf %334, %335 : vector<8x128xf32>
    %337 = vector.extract_strided_slice %324 {offsets = [0, 256], sizes = [8, 128], strides = [1, 1]} : vector<8x512xf32> to vector<8x128xf32>
    %338 = math.tanh %337 : vector<8x128xf32>
    %339 = vector.extract_strided_slice %324 {offsets = [0, 384], sizes = [8, 128], strides = [1, 1]} : vector<8x512xf32> to vector<8x128xf32>
    %340 = arith.negf %339 : vector<8x128xf32>
    %341 = math.exp %340 : vector<8x128xf32>
    %cst_112 = arith.constant 1.000000e+00 : f32
    %342 = vector.broadcast %cst_112 : f32 to vector<8x128xf32>
    %343 = arith.addf %342, %341 : vector<8x128xf32>
    %344 = arith.divf %342, %343 : vector<8x128xf32>
    %345 = arith.mulf %336, %318 : vector<8x128xf32>
    %346 = arith.mulf %330, %338 : vector<8x128xf32>
    %347 = arith.addf %345, %346 : vector<8x128xf32>
    %348 = math.tanh %347 : vector<8x128xf32>
    %349 = arith.mulf %344, %348 : vector<8x128xf32>
    %c0_113 = arith.constant 0 : index
    %c256 = arith.constant 256 : index
    %350 = vector.load %arg4[%c0_113, %c256] : memref<8x1024xf32, #tpu.memory_space<vmem>>, vector<8x128xf32>
    tpu.vector_store %arg4[%c0_113, %c256], %349 {strides = array<i32>} : memref<8x1024xf32, #tpu.memory_space<vmem>>, vector<8x128xf32>,
    %c24_114 = arith.constant 24 : index
    %c0_115 = arith.constant 0 : index
    %351 = vector.load %arg8[%c24_114, %c0_115] : memref<64x512xf32, #tpu.memory_space<vmem>>, vector<8x512xf32>
    %cst_116 = arith.constant dense<0.000000e+00> : vector<8x512xf32>
    %352 = tpu.matmul %349, %254, %cst_116 {dimension_numbers = #tpu.dot_dimension_numbers<[1], [0], [0], [1], [0, 0, 1, 1], [], []>} : vector<8x128xf32>, vector<128x512xf32>, vector<8x512xf32> -> vector<8x512xf32>
    %353 = arith.addf %351, %352 : vector<8x512xf32>
    %354 = vector.extract_strided_slice %353 {offsets = [0, 0], sizes = [8, 128], strides = [1, 1]} : vector<8x512xf32> to vector<8x128xf32>
    %355 = arith.negf %354 : vector<8x128xf32>
    %356 = math.exp %355 : vector<8x128xf32>
    %cst_117 = arith.constant 1.000000e+00 : f32
    %357 = vector.broadcast %cst_117 : f32 to vector<8x128xf32>
    %358 = arith.addf %357, %356 : vector<8x128xf32>
    %359 = arith.divf %357, %358 : vector<8x128xf32>
    %360 = vector.extract_strided_slice %353 {offsets = [0, 128], sizes = [8, 128], strides = [1, 1]} : vector<8x512xf32> to vector<8x128xf32>
    %361 = arith.negf %360 : vector<8x128xf32>
    %362 = math.exp %361 : vector<8x128xf32>
    %cst_118 = arith.constant 1.000000e+00 : f32
    %363 = vector.broadcast %cst_118 : f32 to vector<8x128xf32>
    %364 = arith.addf %363, %362 : vector<8x128xf32>
    %365 = arith.divf %363, %364 : vector<8x128xf32>
    %366 = vector.extract_strided_slice %353 {offsets = [0, 256], sizes = [8, 128], strides = [1, 1]} : vector<8x512xf32> to vector<8x128xf32>
    %367 = math.tanh %366 : vector<8x128xf32>
    %368 = vector.extract_strided_slice %353 {offsets = [0, 384], sizes = [8, 128], strides = [1, 1]} : vector<8x512xf32> to vector<8x128xf32>
    %369 = arith.negf %368 : vector<8x128xf32>
    %370 = math.exp %369 : vector<8x128xf32>
    %cst_119 = arith.constant 1.000000e+00 : f32
    %371 = vector.broadcast %cst_119 : f32 to vector<8x128xf32>
    %372 = arith.addf %371, %370 : vector<8x128xf32>
    %373 = arith.divf %371, %372 : vector<8x128xf32>
    %374 = arith.mulf %365, %347 : vector<8x128xf32>
    %375 = arith.mulf %359, %367 : vector<8x128xf32>
    %376 = arith.addf %374, %375 : vector<8x128xf32>
    %377 = math.tanh %376 : vector<8x128xf32>
    %378 = arith.mulf %373, %377 : vector<8x128xf32>
    %c0_120 = arith.constant 0 : index
    %c384 = arith.constant 384 : index
    %379 = vector.load %arg4[%c0_120, %c384] : memref<8x1024xf32, #tpu.memory_space<vmem>>, vector<8x128xf32>
    tpu.vector_store %arg4[%c0_120, %c384], %378 {strides = array<i32>} : memref<8x1024xf32, #tpu.memory_space<vmem>>, vector<8x128xf32>,
    %c32_121 = arith.constant 32 : index
    %c0_122 = arith.constant 0 : index
    %380 = vector.load %arg8[%c32_121, %c0_122] : memref<64x512xf32, #tpu.memory_space<vmem>>, vector<8x512xf32>
    %cst_123 = arith.constant dense<0.000000e+00> : vector<8x512xf32>
    %381 = tpu.matmul %378, %254, %cst_123 {dimension_numbers = #tpu.dot_dimension_numbers<[1], [0], [0], [1], [0, 0, 1, 1], [], []>} : vector<8x128xf32>, vector<128x512xf32>, vector<8x512xf32> -> vector<8x512xf32>
    %382 = arith.addf %380, %381 : vector<8x512xf32>
    %383 = vector.extract_strided_slice %382 {offsets = [0, 0], sizes = [8, 128], strides = [1, 1]} : vector<8x512xf32> to vector<8x128xf32>
    %384 = arith.negf %383 : vector<8x128xf32>
    %385 = math.exp %384 : vector<8x128xf32>
    %cst_124 = arith.constant 1.000000e+00 : f32
    %386 = vector.broadcast %cst_124 : f32 to vector<8x128xf32>
    %387 = arith.addf %386, %385 : vector<8x128xf32>
    %388 = arith.divf %386, %387 : vector<8x128xf32>
    %389 = vector.extract_strided_slice %382 {offsets = [0, 128], sizes = [8, 128], strides = [1, 1]} : vector<8x512xf32> to vector<8x128xf32>
    %390 = arith.negf %389 : vector<8x128xf32>
    %391 = math.exp %390 : vector<8x128xf32>
    %cst_125 = arith.constant 1.000000e+00 : f32
    %392 = vector.broadcast %cst_125 : f32 to vector<8x128xf32>
    %393 = arith.addf %392, %391 : vector<8x128xf32>
    %394 = arith.divf %392, %393 : vector<8x128xf32>
    %395 = vector.extract_strided_slice %382 {offsets = [0, 256], sizes = [8, 128], strides = [1, 1]} : vector<8x512xf32> to vector<8x128xf32>
    %396 = math.tanh %395 : vector<8x128xf32>
    %397 = vector.extract_strided_slice %382 {offsets = [0, 384], sizes = [8, 128], strides = [1, 1]} : vector<8x512xf32> to vector<8x128xf32>
    %398 = arith.negf %397 : vector<8x128xf32>
    %399 = math.exp %398 : vector<8x128xf32>
    %cst_126 = arith.constant 1.000000e+00 : f32
    %400 = vector.broadcast %cst_126 : f32 to vector<8x128xf32>
    %401 = arith.addf %400, %399 : vector<8x128xf32>
    %402 = arith.divf %400, %401 : vector<8x128xf32>
    %403 = arith.mulf %394, %376 : vector<8x128xf32>
    %404 = arith.mulf %388, %396 : vector<8x128xf32>
    %405 = arith.addf %403, %404 : vector<8x128xf32>
    %406 = math.tanh %405 : vector<8x128xf32>
    %407 = arith.mulf %402, %406 : vector<8x128xf32>
    %c0_127 = arith.constant 0 : index
    %c512 = arith.constant 512 : index
    %408 = vector.load %arg4[%c0_127, %c512] : memref<8x1024xf32, #tpu.memory_space<vmem>>, vector<8x128xf32>
    tpu.vector_store %arg4[%c0_127, %c512], %407 {strides = array<i32>} : memref<8x1024xf32, #tpu.memory_space<vmem>>, vector<8x128xf32>,
    %c40_128 = arith.constant 40 : index
    %c0_129 = arith.constant 0 : index
    %409 = vector.load %arg8[%c40_128, %c0_129] : memref<64x512xf32, #tpu.memory_space<vmem>>, vector<8x512xf32>
    %cst_130 = arith.constant dense<0.000000e+00> : vector<8x512xf32>
    %410 = tpu.matmul %407, %254, %cst_130 {dimension_numbers = #tpu.dot_dimension_numbers<[1], [0], [0], [1], [0, 0, 1, 1], [], []>} : vector<8x128xf32>, vector<128x512xf32>, vector<8x512xf32> -> vector<8x512xf32>
    %411 = arith.addf %409, %410 : vector<8x512xf32>
    %412 = vector.extract_strided_slice %411 {offsets = [0, 0], sizes = [8, 128], strides = [1, 1]} : vector<8x512xf32> to vector<8x128xf32>
    %413 = arith.negf %412 : vector<8x128xf32>
    %414 = math.exp %413 : vector<8x128xf32>
    %cst_131 = arith.constant 1.000000e+00 : f32
    %415 = vector.broadcast %cst_131 : f32 to vector<8x128xf32>
    %416 = arith.addf %415, %414 : vector<8x128xf32>
    %417 = arith.divf %415, %416 : vector<8x128xf32>
    %418 = vector.extract_strided_slice %411 {offsets = [0, 128], sizes = [8, 128], strides = [1, 1]} : vector<8x512xf32> to vector<8x128xf32>
    %419 = arith.negf %418 : vector<8x128xf32>
    %420 = math.exp %419 : vector<8x128xf32>
    %cst_132 = arith.constant 1.000000e+00 : f32
    %421 = vector.broadcast %cst_132 : f32 to vector<8x128xf32>
    %422 = arith.addf %421, %420 : vector<8x128xf32>
    %423 = arith.divf %421, %422 : vector<8x128xf32>
    %424 = vector.extract_strided_slice %411 {offsets = [0, 256], sizes = [8, 128], strides = [1, 1]} : vector<8x512xf32> to vector<8x128xf32>
    %425 = math.tanh %424 : vector<8x128xf32>
    %426 = vector.extract_strided_slice %411 {offsets = [0, 384], sizes = [8, 128], strides = [1, 1]} : vector<8x512xf32> to vector<8x128xf32>
    %427 = arith.negf %426 : vector<8x128xf32>
    %428 = math.exp %427 : vector<8x128xf32>
    %cst_133 = arith.constant 1.000000e+00 : f32
    %429 = vector.broadcast %cst_133 : f32 to vector<8x128xf32>
    %430 = arith.addf %429, %428 : vector<8x128xf32>
    %431 = arith.divf %429, %430 : vector<8x128xf32>
    %432 = arith.mulf %423, %405 : vector<8x128xf32>
    %433 = arith.mulf %417, %425 : vector<8x128xf32>
    %434 = arith.addf %432, %433 : vector<8x128xf32>
    %435 = math.tanh %434 : vector<8x128xf32>
    %436 = arith.mulf %431, %435 : vector<8x128xf32>
    %c0_134 = arith.constant 0 : index
    %c640 = arith.constant 640 : index
    %437 = vector.load %arg4[%c0_134, %c640] : memref<8x1024xf32, #tpu.memory_space<vmem>>, vector<8x128xf32>
    tpu.vector_store %arg4[%c0_134, %c640], %436 {strides = array<i32>} : memref<8x1024xf32, #tpu.memory_space<vmem>>, vector<8x128xf32>,
    %c48_135 = arith.constant 48 : index
    %c0_136 = arith.constant 0 : index
    %438 = vector.load %arg8[%c48_135, %c0_136] : memref<64x512xf32, #tpu.memory_space<vmem>>, vector<8x512xf32>
    %cst_137 = arith.constant dense<0.000000e+00> : vector<8x512xf32>
    %439 = tpu.matmul %436, %254, %cst_137 {dimension_numbers = #tpu.dot_dimension_numbers<[1], [0], [0], [1], [0, 0, 1, 1], [], []>} : vector<8x128xf32>, vector<128x512xf32>, vector<8x512xf32> -> vector<8x512xf32>
    %440 = arith.addf %438, %439 : vector<8x512xf32>
    %441 = vector.extract_strided_slice %440 {offsets = [0, 0], sizes = [8, 128], strides = [1, 1]} : vector<8x512xf32> to vector<8x128xf32>
    %442 = arith.negf %441 : vector<8x128xf32>
    %443 = math.exp %442 : vector<8x128xf32>
    %cst_138 = arith.constant 1.000000e+00 : f32
    %444 = vector.broadcast %cst_138 : f32 to vector<8x128xf32>
    %445 = arith.addf %444, %443 : vector<8x128xf32>
    %446 = arith.divf %444, %445 : vector<8x128xf32>
    %447 = vector.extract_strided_slice %440 {offsets = [0, 128], sizes = [8, 128], strides = [1, 1]} : vector<8x512xf32> to vector<8x128xf32>
    %448 = arith.negf %447 : vector<8x128xf32>
    %449 = math.exp %448 : vector<8x128xf32>
    %cst_139 = arith.constant 1.000000e+00 : f32
    %450 = vector.broadcast %cst_139 : f32 to vector<8x128xf32>
    %451 = arith.addf %450, %449 : vector<8x128xf32>
    %452 = arith.divf %450, %451 : vector<8x128xf32>
    %453 = vector.extract_strided_slice %440 {offsets = [0, 256], sizes = [8, 128], strides = [1, 1]} : vector<8x512xf32> to vector<8x128xf32>
    %454 = math.tanh %453 : vector<8x128xf32>
    %455 = vector.extract_strided_slice %440 {offsets = [0, 384], sizes = [8, 128], strides = [1, 1]} : vector<8x512xf32> to vector<8x128xf32>
    %456 = arith.negf %455 : vector<8x128xf32>
    %457 = math.exp %456 : vector<8x128xf32>
    %cst_140 = arith.constant 1.000000e+00 : f32
    %458 = vector.broadcast %cst_140 : f32 to vector<8x128xf32>
    %459 = arith.addf %458, %457 : vector<8x128xf32>
    %460 = arith.divf %458, %459 : vector<8x128xf32>
    %461 = arith.mulf %452, %434 : vector<8x128xf32>
    %462 = arith.mulf %446, %454 : vector<8x128xf32>
    %463 = arith.addf %461, %462 : vector<8x128xf32>
    %464 = math.tanh %463 : vector<8x128xf32>
    %465 = arith.mulf %460, %464 : vector<8x128xf32>
    %c0_141 = arith.constant 0 : index
    %c768 = arith.constant 768 : index
    %466 = vector.load %arg4[%c0_141, %c768] : memref<8x1024xf32, #tpu.memory_space<vmem>>, vector<8x128xf32>
    tpu.vector_store %arg4[%c0_141, %c768], %465 {strides = array<i32>} : memref<8x1024xf32, #tpu.memory_space<vmem>>, vector<8x128xf32>,
    %c56_142 = arith.constant 56 : index
    %c0_143 = arith.constant 0 : index
    %467 = vector.load %arg8[%c56_142, %c0_143] : memref<64x512xf32, #tpu.memory_space<vmem>>, vector<8x512xf32>
    %cst_144 = arith.constant dense<0.000000e+00> : vector<8x512xf32>
    %468 = tpu.matmul %465, %254, %cst_144 {dimension_numbers = #tpu.dot_dimension_numbers<[1], [0], [0], [1], [0, 0, 1, 1], [], []>} : vector<8x128xf32>, vector<128x512xf32>, vector<8x512xf32> -> vector<8x512xf32>
    %469 = arith.addf %467, %468 : vector<8x512xf32>
    %470 = vector.extract_strided_slice %469 {offsets = [0, 0], sizes = [8, 128], strides = [1, 1]} : vector<8x512xf32> to vector<8x128xf32>
    %471 = arith.negf %470 : vector<8x128xf32>
    %472 = math.exp %471 : vector<8x128xf32>
    %cst_145 = arith.constant 1.000000e+00 : f32
    %473 = vector.broadcast %cst_145 : f32 to vector<8x128xf32>
    %474 = arith.addf %473, %472 : vector<8x128xf32>
    %475 = arith.divf %473, %474 : vector<8x128xf32>
    %476 = vector.extract_strided_slice %469 {offsets = [0, 128], sizes = [8, 128], strides = [1, 1]} : vector<8x512xf32> to vector<8x128xf32>
    %477 = arith.negf %476 : vector<8x128xf32>
    %478 = math.exp %477 : vector<8x128xf32>
    %cst_146 = arith.constant 1.000000e+00 : f32
    %479 = vector.broadcast %cst_146 : f32 to vector<8x128xf32>
    %480 = arith.addf %479, %478 : vector<8x128xf32>
    %481 = arith.divf %479, %480 : vector<8x128xf32>
    %482 = vector.extract_strided_slice %469 {offsets = [0, 256], sizes = [8, 128], strides = [1, 1]} : vector<8x512xf32> to vector<8x128xf32>
    %483 = math.tanh %482 : vector<8x128xf32>
    %484 = vector.extract_strided_slice %469 {offsets = [0, 384], sizes = [8, 128], strides = [1, 1]} : vector<8x512xf32> to vector<8x128xf32>
    %485 = arith.negf %484 : vector<8x128xf32>
    %486 = math.exp %485 : vector<8x128xf32>
    %cst_147 = arith.constant 1.000000e+00 : f32
    %487 = vector.broadcast %cst_147 : f32 to vector<8x128xf32>
    %488 = arith.addf %487, %486 : vector<8x128xf32>
    %489 = arith.divf %487, %488 : vector<8x128xf32>
    %490 = arith.mulf %481, %463 : vector<8x128xf32>
    %491 = arith.mulf %475, %483 : vector<8x128xf32>
    %492 = arith.addf %490, %491 : vector<8x128xf32>
    %493 = math.tanh %492 : vector<8x128xf32>
    %494 = arith.mulf %489, %493 : vector<8x128xf32>
    %c0_148 = arith.constant 0 : index
    %c896 = arith.constant 896 : index
    %495 = vector.load %arg4[%c0_148, %c896] : memref<8x1024xf32, #tpu.memory_space<vmem>>, vector<8x128xf32>
    tpu.vector_store %arg4[%c0_148, %c896], %494 {strides = array<i32>} : memref<8x1024xf32, #tpu.memory_space<vmem>>, vector<8x128xf32>,
    %c1_149 = arith.constant 1 : index
    %c0_150 = arith.constant 0 : index
    %c0_151 = arith.constant 0 : index
    %496 = vector.load %arg5[%c1_149, %c0_150, %c0_151] : memref<2x8x128xf32, #tpu.memory_space<vmem>>, vector<1x8x128xf32>
    %497 = vector.shape_cast %496 : vector<1x8x128xf32> to vector<8x128xf32>
    %498 = vector.shape_cast %494 : vector<8x128xf32> to vector<1x8x128xf32>
    tpu.vector_store %arg5[%c1_149, %c0_150, %c0_151], %498 {strides = array<i32>} : memref<2x8x128xf32, #tpu.memory_space<vmem>>, vector<1x8x128xf32>,
    %c1_152 = arith.constant 1 : index
    %c0_153 = arith.constant 0 : index
    %c0_154 = arith.constant 0 : index
    %499 = vector.load %arg6[%c1_152, %c0_153, %c0_154] : memref<2x8x128xf32, #tpu.memory_space<vmem>>, vector<1x8x128xf32>
    %500 = vector.shape_cast %499 : vector<1x8x128xf32> to vector<8x128xf32>
    %501 = vector.shape_cast %492 : vector<8x128xf32> to vector<1x8x128xf32>
    tpu.vector_store %arg6[%c1_152, %c0_153, %c0_154], %501 {strides = array<i32>} : memref<2x8x128xf32, #tpu.memory_space<vmem>>, vector<1x8x128xf32>,
    return
  }
}

</mosaic_0001>

<llo_original>
// kernel: encoder_lstm_forward.1
$region0: #{encoder_lstm_forward.1}
  #allocation0 [shape = 'u32[]', space=smem, size = 0x4, offset = 0x4, fixed_abs, tag = 'smem constant byte address 0x4 - core index']
  #allocation1 [shape = 'u32[72,128]{1,0:T(1,128)}', space=vmem, size = 0x9000, scoped, tag = 'internal scratch']
  #allocation2 [shape = 'f32[64,128]{1,0:T(8,128)}', space=vmem, size = 0x8000, scoped, tag = 'scratch operand']
  #allocation3 [shape = 'f32[64,512]{1,0:T(8,128)}', space=vmem, size = 0x20000, scoped, tag = 'scratch operand']
  %s0 = inlined_call_operand.vmem [shape: f32[64,128], index: 0, kind: input, shape index: {}]
  %s1 = inlined_call_operand.hbm [shape: f32[2,128,512], index: 1, kind: input, shape index: {}]
  %s2 = inlined_call_operand.hbm [shape: f32[2,128,512], index: 2, kind: input, shape index: {}]
  %s3 = inlined_call_operand.vmem [shape: f32[2,1,512], index: 3, kind: input, shape index: {}]
  %s4 = inlined_call_operand.vmem [shape: f32[8,1024], index: 4, kind: output, shape index: {0}]
  %s5 = inlined_call_operand.vmem [shape: f32[2,8,128], index: 5, kind: output, shape index: {1}]
  %s6 = inlined_call_operand.vmem [shape: f32[2,8,128], index: 6, kind: output, shape index: {2}]
  %7 = xla_tuple %s4, %s5, %s6
  %s8 = sld [smem:[#allocation0]]
  $region50: #{encoder_lstm_forward.1} parent=0
    _
  %s10 = ssub.s32 1, %s8
  %s11 = scalar_select 0, %s10, %s8
  $region1: #{encoder_lstm_forward.1} parent=0
    #allocation4 [shape = 'u8[524288]{0}', space=vmem, size = 0x80000, scoped, tag = 'input window, operand 1, single buffered']
    #allocation5 [shape = 's32[1]{0}', space=sflag, size = 0x4, scoped, tag = 'scoped memory for encoder_lstm_forward.1']
    #allocation6 [shape = 'u8[524288]{0}', space=vmem, size = 0x80000, scoped, tag = 'input window, operand 2, single buffered']
    #allocation7 [shape = 's32[1]{0}', space=sflag, size = 0x4, scoped, tag = 'scoped memory for encoder_lstm_forward.1']
    %12 = vsyncpa [#allocation5], 0
    %13 = vsyncpa [#allocation7], 0
    // Predicated region
    $region2: #{encoder_lstm_forward.1} parent=1 // pred_check
      _
    $region3: #{encoder_lstm_forward.1} parent=1 // pred_check_branch
      %15 = sbr.rel (0) target = $region5
    $region4: #{encoder_lstm_forward.1} parent=1 // pred_region
      _
    $region5: #{encoder_lstm_forward.1} parent=1 // pred_fallthru
      _
    // Predicated region
    $region6: #{encoder_lstm_forward.1} parent=1 // pred_check
      _
    $region7: #{encoder_lstm_forward.1} parent=1 // pred_check_branch
      %17 = sbr.rel (0) target = $region9
    $region8: #{encoder_lstm_forward.1} parent=1 // pred_region
      %19 = vsyncadd [#allocation5], 0
      %s20 = sshll.u32 %s1, 4
      %s21 = int_to_ptr.hbm [resolvable:$true] %s20
      %s22 = sshll.u32 [#allocation4], 4
      %s23 = int_to_ptr.vmem [resolvable:$true] %s22
      %28 = dma.hbm_to_vmem [thread:$0]  %s21, 16384, %s23, [#allocation5], 512, 512, 32
    $region9: #{encoder_lstm_forward.1} parent=1 // pred_fallthru
      _
    // Predicated region
    $region10: #{encoder_lstm_forward.1} parent=1 // pred_check
      _
    $region11: #{encoder_lstm_forward.1} parent=1 // pred_check_branch
      %30 = sbr.rel (0) target = $region13
    $region12: #{encoder_lstm_forward.1} parent=1 // pred_region
      %32 = vsyncadd [#allocation7], 0
      %s33 = sshll.u32 %s2, 4
      %s34 = int_to_ptr.hbm [resolvable:$true] %s33
      %s35 = sshll.u32 [#allocation6], 4
      %s36 = int_to_ptr.vmem [resolvable:$true] %s35
      %41 = dma.hbm_to_vmem [thread:$0]  %s34, 16384, %s36, [#allocation7], 512, 512, 32
    $region13: #{encoder_lstm_forward.1} parent=1 // pred_fallthru
      _
    // Predicated region
    $region14: #{encoder_lstm_forward.1} parent=1 // pred_check
      _
    $region15: #{encoder_lstm_forward.1} parent=1 // pred_check_branch
      %43 = sbr.rel (0) target = $region17
    $region16: #{encoder_lstm_forward.1} parent=1 // pred_region
      _
    $region17: #{encoder_lstm_forward.1} parent=1 // pred_fallthru
      _
    // Predicated region
    $region18: #{encoder_lstm_forward.1} parent=1 // pred_check
      _
    $region19: #{encoder_lstm_forward.1} parent=1 // pred_check_branch
      %45 = sbr.rel (0) target = $region21
    $region20: #{encoder_lstm_forward.1} parent=1 // pred_region
      %47 = dma.done [#allocation5], 16384
    $region21: #{encoder_lstm_forward.1} parent=1 // pred_fallthru
      _
    // Predicated region
    $region22: #{encoder_lstm_forward.1} parent=1 // pred_check
      _
    $region23: #{encoder_lstm_forward.1} parent=1 // pred_check_branch
      %49 = sbr.rel (0) target = $region25
    $region24: #{encoder_lstm_forward.1} parent=1 // pred_region
      %51 = dma.done [#allocation7], 16384
    $region25: #{encoder_lstm_forward.1} parent=1 // pred_fallthru
      _
    %v52 = vld [vmem:[#allocation4] sm:$0xff]
    %v53 = vld [vmem:[#allocation4 + $0x8] sm:$0xff]
    %v54 = vld [vmem:[#allocation4 + $0x10] sm:$0xff]
    %v55 = vld [vmem:[#allocation4 + $0x18] sm:$0xff]
    %v56 = vld [vmem:[#allocation4 + $0x20] sm:$0xff]
    %v57 = vld [vmem:[#allocation4 + $0x28] sm:$0xff]
    %v58 = vld [vmem:[#allocation4 + $0x30] sm:$0xff]
    %v59 = vld [vmem:[#allocation4 + $0x38] sm:$0xff]
    %v60 = vld [vmem:[#allocation4 + $0x40] sm:$0xff]
    %v61 = vld [vmem:[#allocation4 + $0x48] sm:$0xff]
    %v62 = vld [vmem:[#allocation4 + $0x50] sm:$0xff]
    %v63 = vld [vmem:[#allocation4 + $0x58] sm:$0xff]
    %v64 = vld [vmem:[#allocation4 + $0x60] sm:$0xff]
    %v65 = vld [vmem:[#allocation4 + $0x68] sm:$0xff]
    %v66 = vld [vmem:[#allocation4 + $0x70] sm:$0xff]
    %v67 = vld [vmem:[#allocation4 + $0x78] sm:$0xff]
    %v68 = vld [vmem:[#allocation4 + $0x80] sm:$0xff]
    %v69 = vld [vmem:[#allocation4 + $0x88] sm:$0xff]
    %v70 = vld [vmem:[#allocation4 + $0x90] sm:$0xff]
    %v71 = vld [vmem:[#allocation4 + $0x98] sm:$0xff]
    %v72 = vld [vmem:[#allocation4 + $0xa0] sm:$0xff]
    %v73 = vld [vmem:[#allocation4 + $0xa8] sm:$0xff]
    %v74 = vld [vmem:[#allocation4 + $0xb0] sm:$0xff]
    %v75 = vld [vmem:[#allocation4 + $0xb8] sm:$0xff]
    %v76 = vld [vmem:[#allocation4 + $0xc0] sm:$0xff]
    %v77 = vld [vmem:[#allocation4 + $0xc8] sm:$0xff]
    %v78 = vld [vmem:[#allocation4 + $0xd0] sm:$0xff]
    %v79 = vld [vmem:[#allocation4 + $0xd8] sm:$0xff]
    %v80 = vld [vmem:[#allocation4 + $0xe0] sm:$0xff]
    %v81 = vld [vmem:[#allocation4 + $0xe8] sm:$0xff]
    %v82 = vld [vmem:[#allocation4 + $0xf0] sm:$0xff]
    %v83 = vld [vmem:[#allocation4 + $0xf8] sm:$0xff]
    %v84 = vld [vmem:[#allocation4 + $0x100] sm:$0xff]
    %v85 = vld [vmem:[#allocation4 + $0x108] sm:$0xff]
    %v86 = vld [vmem:[#allocation4 + $0x110] sm:$0xff]
    %v87 = vld [vmem:[#allocation4 + $0x118] sm:$0xff]
    %v88 = vld [vmem:[#allocation4 + $0x120] sm:$0xff]
    %v89 = vld [vmem:[#allocation4 + $0x128] sm:$0xff]
    %v90 = vld [vmem:[#allocation4 + $0x130] sm:$0xff]
    %v91 = vld [vmem:[#allocation4 + $0x138] sm:$0xff]
    %v92 = vld [vmem:[#allocation4 + $0x140] sm:$0xff]
    %v93 = vld [vmem:[#allocation4 + $0x148] sm:$0xff]
    %v94 = vld [vmem:[#allocation4 + $0x150] sm:$0xff]
    %v95 = vld [vmem:[#allocation4 + $0x158] sm:$0xff]
    %v96 = vld [vmem:[#allocation4 + $0x160] sm:$0xff]
    %v97 = vld [vmem:[#allocation4 + $0x168] sm:$0xff]
    %v98 = vld [vmem:[#allocation4 + $0x170] sm:$0xff]
    %v99 = vld [vmem:[#allocation4 + $0x178] sm:$0xff]
    %v100 = vld [vmem:[#allocation4 + $0x180] sm:$0xff]
    %v101 = vld [vmem:[#allocation4 + $0x188] sm:$0xff]
    %v102 = vld [vmem:[#allocation4 + $0x190] sm:$0xff]
    %v103 = vld [vmem:[#allocation4 + $0x198] sm:$0xff]
    %v104 = vld [vmem:[#allocation4 + $0x1a0] sm:$0xff]
    %v105 = vld [vmem:[#allocation4 + $0x1a8] sm:$0xff]
    %v106 = vld [vmem:[#allocation4 + $0x1b0] sm:$0xff]
    %v107 = vld [vmem:[#allocation4 + $0x1b8] sm:$0xff]
    %v108 = vld [vmem:[#allocation4 + $0x1c0] sm:$0xff]
    %v109 = vld [vmem:[#allocation4 + $0x1c8] sm:$0xff]
    %v110 = vld [vmem:[#allocation4 + $0x1d0] sm:$0xff]
    %v111 = vld [vmem:[#allocation4 + $0x1d8] sm:$0xff]
    %v112 = vld [vmem:[#allocation4 + $0x1e0] sm:$0xff]
    %v113 = vld [vmem:[#allocation4 + $0x1e8] sm:$0xff]
    %v114 = vld [vmem:[#allocation4 + $0x1f0] sm:$0xff]
    %v115 = vld [vmem:[#allocation4 + $0x1f8] sm:$0xff]
    %v116 = vld [vmem:[#allocation6] sm:$0xff]
    %v117 = vld [vmem:[#allocation6 + $0x8] sm:$0xff]
    %v118 = vld [vmem:[#allocation6 + $0x10] sm:$0xff]
    %v119 = vld [vmem:[#allocation6 + $0x18] sm:$0xff]
    %v120 = vld [vmem:[#allocation6 + $0x20] sm:$0xff]
    %v121 = vld [vmem:[#allocation6 + $0x28] sm:$0xff]
    %v122 = vld [vmem:[#allocation6 + $0x30] sm:$0xff]
    %v123 = vld [vmem:[#allocation6 + $0x38] sm:$0xff]
    %v124 = vld [vmem:[#allocation6 + $0x40] sm:$0xff]
    %v125 = vld [vmem:[#allocation6 + $0x48] sm:$0xff]
    %v126 = vld [vmem:[#allocation6 + $0x50] sm:$0xff]
    %v127 = vld [vmem:[#allocation6 + $0x58] sm:$0xff]
    %v128 = vld [vmem:[#allocation6 + $0x60] sm:$0xff]
    %v129 = vld [vmem:[#allocation6 + $0x68] sm:$0xff]
    %v130 = vld [vmem:[#allocation6 + $0x70] sm:$0xff]
    %v131 = vld [vmem:[#allocation6 + $0x78] sm:$0xff]
    %v132 = vld [vmem:[#allocation6 + $0x80] sm:$0xff]
    %v133 = vld [vmem:[#allocation6 + $0x88] sm:$0xff]
    %v134 = vld [vmem:[#allocation6 + $0x90] sm:$0xff]
    %v135 = vld [vmem:[#allocation6 + $0x98] sm:$0xff]
    %v136 = vld [vmem:[#allocation6 + $0xa0] sm:$0xff]
    %v137 = vld [vmem:[#allocation6 + $0xa8] sm:$0xff]
    %v138 = vld [vmem:[#allocation6 + $0xb0] sm:$0xff]
    %v139 = vld [vmem:[#allocation6 + $0xb8] sm:$0xff]
    %v140 = vld [vmem:[#allocation6 + $0xc0] sm:$0xff]
    %v141 = vld [vmem:[#allocation6 + $0xc8] sm:$0xff]
    %v142 = vld [vmem:[#allocation6 + $0xd0] sm:$0xff]
    %v143 = vld [vmem:[#allocation6 + $0xd8] sm:$0xff]
    %v144 = vld [vmem:[#allocation6 + $0xe0] sm:$0xff]
    %v145 = vld [vmem:[#allocation6 + $0xe8] sm:$0xff]
    %v146 = vld [vmem:[#allocation6 + $0xf0] sm:$0xff]
    %v147 = vld [vmem:[#allocation6 + $0xf8] sm:$0xff]
    %v148 = vld [vmem:[#allocation6 + $0x100] sm:$0xff]
    %v149 = vld [vmem:[#allocation6 + $0x108] sm:$0xff]
    %v150 = vld [vmem:[#allocation6 + $0x110] sm:$0xff]
    %v151 = vld [vmem:[#allocation6 + $0x118] sm:$0xff]
    %v152 = vld [vmem:[#allocation6 + $0x120] sm:$0xff]
    %v153 = vld [vmem:[#allocation6 + $0x128] sm:$0xff]
    %v154 = vld [vmem:[#allocation6 + $0x130] sm:$0xff]
    %v155 = vld [vmem:[#allocation6 + $0x138] sm:$0xff]
    %v156 = vld [vmem:[#allocation6 + $0x140] sm:$0xff]
    %v157 = vld [vmem:[#allocation6 + $0x148] sm:$0xff]
    %v158 = vld [vmem:[#allocation6 + $0x150] sm:$0xff]
    %v159 = vld [vmem:[#allocation6 + $0x158] sm:$0xff]
    %v160 = vld [vmem:[#allocation6 + $0x160] sm:$0xff]
    %v161 = vld [vmem:[#allocation6 + $0x168] sm:$0xff]
    %v162 = vld [vmem:[#allocation6 + $0x170] sm:$0xff]
    %v163 = vld [vmem:[#allocation6 + $0x178] sm:$0xff]
    %v164 = vld [vmem:[#allocation6 + $0x180] sm:$0xff]
    %v165 = vld [vmem:[#allocation6 + $0x188] sm:$0xff]
    %v166 = vld [vmem:[#allocation6 + $0x190] sm:$0xff]
    %v167 = vld [vmem:[#allocation6 + $0x198] sm:$0xff]
    %v168 = vld [vmem:[#allocation6 + $0x1a0] sm:$0xff]
    %v169 = vld [vmem:[#allocation6 + $0x1a8] sm:$0xff]
    %v170 = vld [vmem:[#allocation6 + $0x1b0] sm:$0xff]
    %v171 = vld [vmem:[#allocation6 + $0x1b8] sm:$0xff]
    %v172 = vld [vmem:[#allocation6 + $0x1c0] sm:$0xff]
    %v173 = vld [vmem:[#allocation6 + $0x1c8] sm:$0xff]
    %v174 = vld [vmem:[#allocation6 + $0x1d0] sm:$0xff]
    %v175 = vld [vmem:[#allocation6 + $0x1d8] sm:$0xff]
    %v176 = vld [vmem:[#allocation6 + $0x1e0] sm:$0xff]
    %v177 = vld [vmem:[#allocation6 + $0x1e8] sm:$0xff]
    %v178 = vld [vmem:[#allocation6 + $0x1f0] sm:$0xff]
    %v179 = vld [vmem:[#allocation6 + $0x1f8] sm:$0xff]
    %v180 = vld [vmem:[%s3] sm:$0xf]
    %v181 = vld [vmem:[%s0] sm:$0xff]
    %v182 = vld [vmem:[%s0 + $0x8] sm:$0xff]
    %v183 = vld [vmem:[%s0 + $0x10] sm:$0xff]
    %v184 = vld [vmem:[%s0 + $0x18] sm:$0xff]
    %v185 = vld [vmem:[%s0 + $0x20] sm:$0xff]
    %v186 = vld [vmem:[%s0 + $0x28] sm:$0xff]
    %v187 = vld [vmem:[%s0 + $0x30] sm:$0xff]
    %v188 = vld [vmem:[%s0 + $0x38] sm:$0xff]
    %v190 = vperm.slane %v180, 0
    %v191 = vperm.slane %v180, 1
    %v192 = vperm.slane %v180, 2
    %v193 = vperm.slane %v180, 3
    %198 = vmatpush.msra.mxu0 %v112
    %199 = vmatpush.msra.mxu0 %v108
    %200 = vmatpush.msra.mxu0 %v104
    %201 = vmatpush.msra.mxu0 %v100
    %202 = vmatpush.msra.mxu0 %v96
    %203 = vmatpush.msra.mxu0 %v92
    %204 = vmatpush.msra.mxu0 %v88
    %205 = vmatpush.msra.mxu0 %v84
    %206 = vmatpush.msra.mxu0 %v80
    %207 = vmatpush.msra.mxu0 %v76
    %208 = vmatpush.msra.mxu0 %v72
    %209 = vmatpush.msra.mxu0 %v68
    %210 = vmatpush.msra.mxu0 %v64
    %211 = vmatpush.msra.mxu0 %v60
    %212 = vmatpush.msra.mxu0 %v56
    %213 = vmatpush.msra.mxu0 %v52
    %214 = vmatmul.f32.gmra.mxu0 %v181
    %v215 = vpop.f32.mrf.mxu0
    %v216 = vadd.f32 %v190, %v215
    %217 = vmatmul.f32.gmra.mxu0 %v182
    %v218 = vpop.f32.mrf.mxu0
    %v219 = vadd.f32 %v190, %v218
    %220 = vmatmul.f32.gmra.mxu0 %v183
    %v221 = vpop.f32.mrf.mxu0
    %v222 = vadd.f32 %v190, %v221
    %223 = vmatmul.f32.gmra.mxu0 %v184
    %v224 = vpop.f32.mrf.mxu0
    %v225 = vadd.f32 %v190, %v224
    %226 = vmatmul.f32.gmra.mxu0 %v185
    %v227 = vpop.f32.mrf.mxu0
    %v228 = vadd.f32 %v190, %v227
    %229 = vmatmul.f32.gmra.mxu0 %v186
    %v230 = vpop.f32.mrf.mxu0
    %v231 = vadd.f32 %v190, %v230
    %232 = vmatmul.f32.gmra.mxu0 %v187
    %v233 = vpop.f32.mrf.mxu0
    %v234 = vadd.f32 %v190, %v233
    %235 = vmatmul.f32.gmra.mxu0 %v188
    %v236 = vpop.f32.mrf.mxu0
    %v237 = vadd.f32 %v190, %v236
    %238 = vdwg.mxu0
    %239 = vmatpush.msra.mxu0 %v113
    %240 = vmatpush.msra.mxu0 %v109
    %241 = vmatpush.msra.mxu0 %v105
    %242 = vmatpush.msra.mxu0 %v101
    %243 = vmatpush.msra.mxu0 %v97
    %244 = vmatpush.msra.mxu0 %v93
    %245 = vmatpush.msra.mxu0 %v89
    %246 = vmatpush.msra.mxu0 %v85
    %247 = vmatpush.msra.mxu0 %v81
    %248 = vmatpush.msra.mxu0 %v77
    %249 = vmatpush.msra.mxu0 %v73
    %250 = vmatpush.msra.mxu0 %v69
    %251 = vmatpush.msra.mxu0 %v65
    %252 = vmatpush.msra.mxu0 %v61
    %253 = vmatpush.msra.mxu0 %v57
    %254 = vmatpush.msra.mxu0 %v53
    %255 = vmatmul.f32.gmra.mxu0 %v181
    %v256 = vpop.f32.mrf.mxu0
    %v257 = vadd.f32 %v191, %v256
    %258 = vmatmul.f32.gmra.mxu0 %v182
    %v259 = vpop.f32.mrf.mxu0
    %v260 = vadd.f32 %v191, %v259
    %261 = vmatmul.f32.gmra.mxu0 %v183
    %v262 = vpop.f32.mrf.mxu0
    %v263 = vadd.f32 %v191, %v262
    %264 = vmatmul.f32.gmra.mxu0 %v184
    %v265 = vpop.f32.mrf.mxu0
    %v266 = vadd.f32 %v191, %v265
    %267 = vmatmul.f32.gmra.mxu0 %v185
    %v268 = vpop.f32.mrf.mxu0
    %v269 = vadd.f32 %v191, %v268
    %270 = vmatmul.f32.gmra.mxu0 %v186
    %v271 = vpop.f32.mrf.mxu0
    %v272 = vadd.f32 %v191, %v271
    %273 = vmatmul.f32.gmra.mxu0 %v187
    %v274 = vpop.f32.mrf.mxu0
    %v275 = vadd.f32 %v191, %v274
    %276 = vmatmul.f32.gmra.mxu0 %v188
    %v277 = vpop.f32.mrf.mxu0
    %v278 = vadd.f32 %v191, %v277
    %279 = vdwg.mxu0
    %280 = vmatpush.msra.mxu0 %v114
    %281 = vmatpush.msra.mxu0 %v110
    %282 = vmatpush.msra.mxu0 %v106
    %283 = vmatpush.msra.mxu0 %v102
    %284 = vmatpush.msra.mxu0 %v98
    %285 = vmatpush.msra.mxu0 %v94
    %286 = vmatpush.msra.mxu0 %v90
    %287 = vmatpush.msra.mxu0 %v86
    %288 = vmatpush.msra.mxu0 %v82
    %289 = vmatpush.msra.mxu0 %v78
    %290 = vmatpush.msra.mxu0 %v74
    %291 = vmatpush.msra.mxu0 %v70
    %292 = vmatpush.msra.mxu0 %v66
    %293 = vmatpush.msra.mxu0 %v62
    %294 = vmatpush.msra.mxu0 %v58
    %295 = vmatpush.msra.mxu0 %v54
    %296 = vmatmul.f32.gmra.mxu0 %v181
    %v297 = vpop.f32.mrf.mxu0
    %v298 = vadd.f32 %v192, %v297
    %299 = vmatmul.f32.gmra.mxu0 %v182
    %v300 = vpop.f32.mrf.mxu0
    %v301 = vadd.f32 %v192, %v300
    %302 = vmatmul.f32.gmra.mxu0 %v183
    %v303 = vpop.f32.mrf.mxu0
    %v304 = vadd.f32 %v192, %v303
    %305 = vmatmul.f32.gmra.mxu0 %v184
    %v306 = vpop.f32.mrf.mxu0
    %v307 = vadd.f32 %v192, %v306
    %308 = vmatmul.f32.gmra.mxu0 %v185
    %v309 = vpop.f32.mrf.mxu0
    %v310 = vadd.f32 %v192, %v309
    %311 = vmatmul.f32.gmra.mxu0 %v186
    %v312 = vpop.f32.mrf.mxu0
    %v313 = vadd.f32 %v192, %v312
    %314 = vmatmul.f32.gmra.mxu0 %v187
    %v315 = vpop.f32.mrf.mxu0
    %v316 = vadd.f32 %v192, %v315
    %317 = vmatmul.f32.gmra.mxu0 %v188
    %v318 = vpop.f32.mrf.mxu0
    %v319 = vadd.f32 %v192, %v318
    %320 = vdwg.mxu0
    %321 = vmatpush.msra.mxu0 %v115
    %322 = vmatpush.msra.mxu0 %v111
    %323 = vmatpush.msra.mxu0 %v107
    %324 = vmatpush.msra.mxu0 %v103
    %325 = vmatpush.msra.mxu0 %v99
    %326 = vmatpush.msra.mxu0 %v95
    %327 = vmatpush.msra.mxu0 %v91
    %328 = vmatpush.msra.mxu0 %v87
    %329 = vmatpush.msra.mxu0 %v83
    %330 = vmatpush.msra.mxu0 %v79
    %331 = vmatpush.msra.mxu0 %v75
    %332 = vmatpush.msra.mxu0 %v71
    %333 = vmatpush.msra.mxu0 %v67
    %334 = vmatpush.msra.mxu0 %v63
    %335 = vmatpush.msra.mxu0 %v59
    %336 = vmatpush.msra.mxu0 %v55
    %337 = vmatmul.f32.gmra.mxu0 %v181
    %v338 = vpop.f32.mrf.mxu0
    %v339 = vadd.f32 %v193, %v338
    %340 = vmatmul.f32.gmra.mxu0 %v182
    %v341 = vpop.f32.mrf.mxu0
    %v342 = vadd.f32 %v193, %v341
    %343 = vmatmul.f32.gmra.mxu0 %v183
    %v344 = vpop.f32.mrf.mxu0
    %v345 = vadd.f32 %v193, %v344
    %346 = vmatmul.f32.gmra.mxu0 %v184
    %v347 = vpop.f32.mrf.mxu0
    %v348 = vadd.f32 %v193, %v347
    %349 = vmatmul.f32.gmra.mxu0 %v185
    %v350 = vpop.f32.mrf.mxu0
    %v351 = vadd.f32 %v193, %v350
    %352 = vmatmul.f32.gmra.mxu0 %v186
    %v353 = vpop.f32.mrf.mxu0
    %v354 = vadd.f32 %v193, %v353
    %355 = vmatmul.f32.gmra.mxu0 %v187
    %v356 = vpop.f32.mrf.mxu0
    %v357 = vadd.f32 %v193, %v356
    %358 = vmatmul.f32.gmra.mxu0 %v188
    %v359 = vpop.f32.mrf.mxu0
    %v360 = vadd.f32 %v193, %v359
    %361 = vdwg.mxu0
    %362 = vst [vmem:[#allocation3] sm:$0xff] %v216
    %363 = vst [vmem:[#allocation3 + $0x8] sm:$0xff] %v257
    %364 = vst [vmem:[#allocation3 + $0x10] sm:$0xff] %v298
    %365 = vst [vmem:[#allocation3 + $0x18] sm:$0xff] %v339
    %366 = vst [vmem:[#allocation3 + $0x20] sm:$0xff] %v219
    %367 = vst [vmem:[#allocation3 + $0x28] sm:$0xff] %v260
    %368 = vst [vmem:[#allocation3 + $0x30] sm:$0xff] %v301
    %369 = vst [vmem:[#allocation3 + $0x38] sm:$0xff] %v342
    %370 = vst [vmem:[#allocation3 + $0x40] sm:$0xff] %v222
    %371 = vst [vmem:[#allocation3 + $0x48] sm:$0xff] %v263
    %372 = vst [vmem:[#allocation3 + $0x50] sm:$0xff] %v304
    %373 = vst [vmem:[#allocation3 + $0x58] sm:$0xff] %v345
    %374 = vst [vmem:[#allocation3 + $0x60] sm:$0xff] %v225
    %375 = vst [vmem:[#allocation3 + $0x68] sm:$0xff] %v266
    %376 = vst [vmem:[#allocation3 + $0x70] sm:$0xff] %v307
    %377 = vst [vmem:[#allocation3 + $0x78] sm:$0xff] %v348
    %378 = vst [vmem:[#allocation3 + $0x80] sm:$0xff] %v228
    %379 = vst [vmem:[#allocation3 + $0x88] sm:$0xff] %v269
    %380 = vst [vmem:[#allocation3 + $0x90] sm:$0xff] %v310
    %381 = vst [vmem:[#allocation3 + $0x98] sm:$0xff] %v351
    %382 = vst [vmem:[#allocation3 + $0xa0] sm:$0xff] %v231
    %383 = vst [vmem:[#allocation3 + $0xa8] sm:$0xff] %v272
    %384 = vst [vmem:[#allocation3 + $0xb0] sm:$0xff] %v313
    %385 = vst [vmem:[#allocation3 + $0xb8] sm:$0xff] %v354
    %386 = vst [vmem:[#allocation3 + $0xc0] sm:$0xff] %v234
    %387 = vst [vmem:[#allocation3 + $0xc8] sm:$0xff] %v275
    %388 = vst [vmem:[#allocation3 + $0xd0] sm:$0xff] %v316
    %389 = vst [vmem:[#allocation3 + $0xd8] sm:$0xff] %v357
    %390 = vst [vmem:[#allocation3 + $0xe0] sm:$0xff] %v237
    %391 = vst [vmem:[#allocation3 + $0xe8] sm:$0xff] %v278
    %392 = vst [vmem:[#allocation3 + $0xf0] sm:$0xff] %v319
    %393 = vst [vmem:[#allocation3 + $0xf8] sm:$0xff] %v360
    %v394 = vld [vmem:[#allocation3] sm:$0xff]
    %v395 = vld [vmem:[#allocation3 + $0x8] sm:$0xff]
    %v396 = vld [vmem:[#allocation3 + $0x10] sm:$0xff]
    %v397 = vld [vmem:[#allocation3 + $0x18] sm:$0xff]
    %398 = vmatpush.msra.mxu0 %v176
    %399 = vmatpush.msra.mxu0 %v172
    %400 = vmatpush.msra.mxu0 %v168
    %401 = vmatpush.msra.mxu0 %v164
    %402 = vmatpush.msra.mxu0 %v160
    %403 = vmatpush.msra.mxu0 %v156
    %404 = vmatpush.msra.mxu0 %v152
    %405 = vmatpush.msra.mxu0 %v148
    %406 = vmatpush.msra.mxu0 %v144
    %407 = vmatpush.msra.mxu0 %v140
    %408 = vmatpush.msra.mxu0 %v136
    %409 = vmatpush.msra.mxu0 %v132
    %410 = vmatpush.msra.mxu0 %v128
    %411 = vmatpush.msra.mxu0 %v124
    %412 = vmatpush.msra.mxu0 %v120
    %413 = vmatpush.msra.mxu0 %v116
    %414 = vmatmul.f32.gmra.mxu0 0.0
    %v415 = vpop.f32.mrf.mxu0
    %v416 = vadd.f32 0.0, %v415
    %417 = vdwg.mxu0
    %418 = vmatpush.msra.mxu0 %v177
    %419 = vmatpush.msra.mxu0 %v173
    %420 = vmatpush.msra.mxu0 %v169
    %421 = vmatpush.msra.mxu0 %v165
    %422 = vmatpush.msra.mxu0 %v161
    %423 = vmatpush.msra.mxu0 %v157
    %424 = vmatpush.msra.mxu0 %v153
    %425 = vmatpush.msra.mxu0 %v149
    %426 = vmatpush.msra.mxu0 %v145
    %427 = vmatpush.msra.mxu0 %v141
    %428 = vmatpush.msra.mxu0 %v137
    %429 = vmatpush.msra.mxu0 %v133
    %430 = vmatpush.msra.mxu0 %v129
    %431 = vmatpush.msra.mxu0 %v125
    %432 = vmatpush.msra.mxu0 %v121
    %433 = vmatpush.msra.mxu0 %v117
    %434 = vmatmul.f32.gmra.mxu0 0.0
    %v435 = vpop.f32.mrf.mxu0
    %v436 = vadd.f32 0.0, %v435
    %437 = vdwg.mxu0
    %438 = vmatpush.msra.mxu0 %v178
    %439 = vmatpush.msra.mxu0 %v174
    %440 = vmatpush.msra.mxu0 %v170
    %441 = vmatpush.msra.mxu0 %v166
    %442 = vmatpush.msra.mxu0 %v162
    %443 = vmatpush.msra.mxu0 %v158
    %444 = vmatpush.msra.mxu0 %v154
    %445 = vmatpush.msra.mxu0 %v150
    %446 = vmatpush.msra.mxu0 %v146
    %447 = vmatpush.msra.mxu0 %v142
    %448 = vmatpush.msra.mxu0 %v138
    %449 = vmatpush.msra.mxu0 %v134
    %450 = vmatpush.msra.mxu0 %v130
    %451 = vmatpush.msra.mxu0 %v126
    %452 = vmatpush.msra.mxu0 %v122
    %453 = vmatpush.msra.mxu0 %v118
    %454 = vmatmul.f32.gmra.mxu0 0.0
    %v455 = vpop.f32.mrf.mxu0
    %v456 = vadd.f32 0.0, %v455
    %457 = vdwg.mxu0
    %458 = vmatpush.msra.mxu0 %v179
    %459 = vmatpush.msra.mxu0 %v175
    %460 = vmatpush.msra.mxu0 %v171
    %461 = vmatpush.msra.mxu0 %v167
    %462 = vmatpush.msra.mxu0 %v163
    %463 = vmatpush.msra.mxu0 %v159
    %464 = vmatpush.msra.mxu0 %v155
    %465 = vmatpush.msra.mxu0 %v151
    %466 = vmatpush.msra.mxu0 %v147
    %467 = vmatpush.msra.mxu0 %v143
    %468 = vmatpush.msra.mxu0 %v139
    %469 = vmatpush.msra.mxu0 %v135
    %470 = vmatpush.msra.mxu0 %v131
    %471 = vmatpush.msra.mxu0 %v127
    %472 = vmatpush.msra.mxu0 %v123
    %473 = vmatpush.msra.mxu0 %v119
    %474 = vmatmul.f32.gmra.mxu0 0.0
    %v475 = vpop.f32.mrf.mxu0
    %v476 = vadd.f32 0.0, %v475
    %477 = vdwg.mxu0
    %v478 = vadd.f32 %v394, %v416
    %v479 = vadd.f32 %v395, %v436
    %v480 = vadd.f32 %v396, %v456
    %v481 = vadd.f32 %v397, %v476
    %v482 = vxor.u32 %v478, 2147483648
    %v483 = vmul.f32 %v482, 1.442695
    %v484 = vpow.pop %v483
    %v485 = vadd.f32 %v484, 1.0
    %v486 = vrcp.pop %v485
    %v487 = vmul.f32 %v485, %v486
    %v488 = vsub.f32 1.0, %v487
    %v489 = vmul.f32 %v486, %v488
    %v490 = vadd.f32 %v486, %v489
    %vm491 = vweird.f32 %v485
    %vm492 = vweird.f32 %v486
    %vm493 = vmor %vm491, %vm492
    %v494 = vsel %vm493, %v486, %v490
    %v495 = vand.u32 2147483647, %v485
    %vm496 = vcmp.eq.f32.partialorder %v495, 8.507059e+37
    %v497 = vand.u32 %v485, 2147483648
    %v498 = vor.u32 1.1754944e-38, %v497
    %v499 = vsel %vm496, %v498, %v494
    %v500 = vmul.f32 1.0, %v499
    %v501 = vxor.u32 %v479, 2147483648
    %v502 = vmul.f32 %v501, 1.442695
    %v503 = vpow.pop %v502
    %v504 = vadd.f32 %v503, 1.0
    %v505 = vrcp.pop %v504
    %v506 = vmul.f32 %v504, %v505
    %v507 = vsub.f32 1.0, %v506
    %v508 = vmul.f32 %v505, %v507
    %v509 = vadd.f32 %v505, %v508
    %vm510 = vweird.f32 %v504
    %vm511 = vweird.f32 %v505
    %vm512 = vmor %vm510, %vm511
    %v513 = vsel %vm512, %v505, %v509
    %v514 = vand.u32 2147483647, %v504
    %vm515 = vcmp.eq.f32.partialorder %v514, 8.507059e+37
    %v516 = vand.u32 %v504, 2147483648
    %v517 = vor.u32 1.1754944e-38, %v516
    %v518 = vsel %vm515, %v517, %v513
    %v519 = vmul.f32 1.0, %v518
    %v520 = vtanh.pop %v480
    %v521 = vxor.u32 %v481, 2147483648
    %v522 = vmul.f32 %v521, 1.442695
    %v523 = vpow.pop %v522
    %v524 = vadd.f32 %v523, 1.0
    %v525 = vrcp.pop %v524
    %v526 = vmul.f32 %v524, %v525
    %v527 = vsub.f32 1.0, %v526
    %v528 = vmul.f32 %v525, %v527
    %v529 = vadd.f32 %v525, %v528
    %vm530 = vweird.f32 %v524
    %vm531 = vweird.f32 %v525
    %vm532 = vmor %vm530, %vm531
    %v533 = vsel %vm532, %v525, %v529
    %v534 = vand.u32 2147483647, %v524
    %vm535 = vcmp.eq.f32.partialorder %v534, 8.507059e+37
    %v536 = vand.u32 %v524, 2147483648
    %v537 = vor.u32 1.1754944e-38, %v536
    %v538 = vsel %vm535, %v537, %v533
    %v539 = vmul.f32 1.0, %v538
    %v540 = vmul.f32 %v519, 0.0
    %v541 = vmul.f32 %v500, %v520
    %v542 = vadd.f32 %v540, %v541
    %v543 = vtanh.pop %v542
    %v544 = vmul.f32 %v539, %v543
    %545 = vst [vmem:[#allocation2] sm:$0xff] %v544
    %v546 = vld [vmem:[#allocation3 + $0x20] sm:$0xff]
    %v547 = vld [vmem:[#allocation3 + $0x28] sm:$0xff]
    %v548 = vld [vmem:[#allocation3 + $0x30] sm:$0xff]
    %v549 = vld [vmem:[#allocation3 + $0x38] sm:$0xff]
    %550 = vmatpush.msra.mxu0 %v176
    %551 = vmatpush.msra.mxu0 %v172
    %552 = vmatpush.msra.mxu0 %v168
    %553 = vmatpush.msra.mxu0 %v164
    %554 = vmatpush.msra.mxu0 %v160
    %555 = vmatpush.msra.mxu0 %v156
    %556 = vmatpush.msra.mxu0 %v152
    %557 = vmatpush.msra.mxu0 %v148
    %558 = vmatpush.msra.mxu0 %v144
    %559 = vmatpush.msra.mxu0 %v140
    %560 = vmatpush.msra.mxu0 %v136
    %561 = vmatpush.msra.mxu0 %v132
    %562 = vmatpush.msra.mxu0 %v128
    %563 = vmatpush.msra.mxu0 %v124
    %564 = vmatpush.msra.mxu0 %v120
    %565 = vmatpush.msra.mxu0 %v116
    %566 = vmatmul.f32.gmra.mxu0 %v544
    %v567 = vpop.f32.mrf.mxu0
    %v568 = vadd.f32 0.0, %v567
    %569 = vdwg.mxu0
    %570 = vmatpush.msra.mxu0 %v177
    %571 = vmatpush.msra.mxu0 %v173
    %572 = vmatpush.msra.mxu0 %v169
    %573 = vmatpush.msra.mxu0 %v165
    %574 = vmatpush.msra.mxu0 %v161
    %575 = vmatpush.msra.mxu0 %v157
    %576 = vmatpush.msra.mxu0 %v153
    %577 = vmatpush.msra.mxu0 %v149
    %578 = vmatpush.msra.mxu0 %v145
    %579 = vmatpush.msra.mxu0 %v141
    %580 = vmatpush.msra.mxu0 %v137
    %581 = vmatpush.msra.mxu0 %v133
    %582 = vmatpush.msra.mxu0 %v129
    %583 = vmatpush.msra.mxu0 %v125
    %584 = vmatpush.msra.mxu0 %v121
    %585 = vmatpush.msra.mxu0 %v117
    %586 = vmatmul.f32.gmra.mxu0 %v544
    %v587 = vpop.f32.mrf.mxu0
    %v588 = vadd.f32 0.0, %v587
    %589 = vdwg.mxu0
    %590 = vmatpush.msra.mxu0 %v178
    %591 = vmatpush.msra.mxu0 %v174
    %592 = vmatpush.msra.mxu0 %v170
    %593 = vmatpush.msra.mxu0 %v166
    %594 = vmatpush.msra.mxu0 %v162
    %595 = vmatpush.msra.mxu0 %v158
    %596 = vmatpush.msra.mxu0 %v154
    %597 = vmatpush.msra.mxu0 %v150
    %598 = vmatpush.msra.mxu0 %v146
    %599 = vmatpush.msra.mxu0 %v142
    %600 = vmatpush.msra.mxu0 %v138
    %601 = vmatpush.msra.mxu0 %v134
    %602 = vmatpush.msra.mxu0 %v130
    %603 = vmatpush.msra.mxu0 %v126
    %604 = vmatpush.msra.mxu0 %v122
    %605 = vmatpush.msra.mxu0 %v118
    %606 = vmatmul.f32.gmra.mxu0 %v544
    %v607 = vpop.f32.mrf.mxu0
    %v608 = vadd.f32 0.0, %v607
    %609 = vdwg.mxu0
    %610 = vmatpush.msra.mxu0 %v179
    %611 = vmatpush.msra.mxu0 %v175
    %612 = vmatpush.msra.mxu0 %v171
    %613 = vmatpush.msra.mxu0 %v167
    %614 = vmatpush.msra.mxu0 %v163
    %615 = vmatpush.msra.mxu0 %v159
    %616 = vmatpush.msra.mxu0 %v155
    %617 = vmatpush.msra.mxu0 %v151
    %618 = vmatpush.msra.mxu0 %v147
    %619 = vmatpush.msra.mxu0 %v143
    %620 = vmatpush.msra.mxu0 %v139
    %621 = vmatpush.msra.mxu0 %v135
    %622 = vmatpush.msra.mxu0 %v131
    %623 = vmatpush.msra.mxu0 %v127
    %624 = vmatpush.msra.mxu0 %v123
    %625 = vmatpush.msra.mxu0 %v119
    %626 = vmatmul.f32.gmra.mxu0 %v544
    %v627 = vpop.f32.mrf.mxu0
    %v628 = vadd.f32 0.0, %v627
    %629 = vdwg.mxu0
    %v630 = vadd.f32 %v546, %v568
    %v631 = vadd.f32 %v547, %v588
    %v632 = vadd.f32 %v548, %v608
    %v633 = vadd.f32 %v549, %v628
    %v634 = vxor.u32 %v630, 2147483648
    %v635 = vmul.f32 %v634, 1.442695
    %v636 = vpow.pop %v635
    %v637 = vadd.f32 %v636, 1.0
    %v638 = vrcp.pop %v637
    %v639 = vmul.f32 %v637, %v638
    %v640 = vsub.f32 1.0, %v639
    %v641 = vmul.f32 %v638, %v640
    %v642 = vadd.f32 %v638, %v641
    %vm643 = vweird.f32 %v637
    %vm644 = vweird.f32 %v638
    %vm645 = vmor %vm643, %vm644
    %v646 = vsel %vm645, %v638, %v642
    %v647 = vand.u32 2147483647, %v637
    %vm648 = vcmp.eq.f32.partialorder %v647, 8.507059e+37
    %v649 = vand.u32 %v637, 2147483648
    %v650 = vor.u32 1.1754944e-38, %v649
    %v651 = vsel %vm648, %v650, %v646
    %v652 = vmul.f32 1.0, %v651
    %v653 = vxor.u32 %v631, 2147483648
    %v654 = vmul.f32 %v653, 1.442695
    %v655 = vpow.pop %v654
    %v656 = vadd.f32 %v655, 1.0
    %v657 = vrcp.pop %v656
    %v658 = vmul.f32 %v656, %v657
    %v659 = vsub.f32 1.0, %v658
    %v660 = vmul.f32 %v657, %v659
    %v661 = vadd.f32 %v657, %v660
    %vm662 = vweird.f32 %v656
    %vm663 = vweird.f32 %v657
    %vm664 = vmor %vm662, %vm663
    %v665 = vsel %vm664, %v657, %v661
    %v666 = vand.u32 2147483647, %v656
    %vm667 = vcmp.eq.f32.partialorder %v666, 8.507059e+37
    %v668 = vand.u32 %v656, 2147483648
    %v669 = vor.u32 1.1754944e-38, %v668
    %v670 = vsel %vm667, %v669, %v665
    %v671 = vmul.f32 1.0, %v670
    %v672 = vtanh.pop %v632
    %v673 = vxor.u32 %v633, 2147483648
    %v674 = vmul.f32 %v673, 1.442695
    %v675 = vpow.pop %v674
    %v676 = vadd.f32 %v675, 1.0
    %v677 = vrcp.pop %v676
    %v678 = vmul.f32 %v676, %v677
    %v679 = vsub.f32 1.0, %v678
    %v680 = vmul.f32 %v677, %v679
    %v681 = vadd.f32 %v677, %v680
    %vm682 = vweird.f32 %v676
    %vm683 = vweird.f32 %v677
    %vm684 = vmor %vm682, %vm683
    %v685 = vsel %vm684, %v677, %v681
    %v686 = vand.u32 2147483647, %v676
    %vm687 = vcmp.eq.f32.partialorder %v686, 8.507059e+37
    %v688 = vand.u32 %v676, 2147483648
    %v689 = vor.u32 1.1754944e-38, %v688
    %v690 = vsel %vm687, %v689, %v685
    %v691 = vmul.f32 1.0, %v690
    %v692 = vmul.f32 %v671, %v542
    %v693 = vmul.f32 %v652, %v672
    %v694 = vadd.f32 %v692, %v693
    %v695 = vtanh.pop %v694
    %v696 = vmul.f32 %v691, %v695
    %697 = vst [vmem:[#allocation2 + $0x8] sm:$0xff] %v696
    %v698 = vld [vmem:[#allocation3 + $0x40] sm:$0xff]
    %v699 = vld [vmem:[#allocation3 + $0x48] sm:$0xff]
    %v700 = vld [vmem:[#allocation3 + $0x50] sm:$0xff]
    %v701 = vld [vmem:[#allocation3 + $0x58] sm:$0xff]
    %702 = vmatpush.msra.mxu0 %v176
    %703 = vmatpush.msra.mxu0 %v172
    %704 = vmatpush.msra.mxu0 %v168
    %705 = vmatpush.msra.mxu0 %v164
    %706 = vmatpush.msra.mxu0 %v160
    %707 = vmatpush.msra.mxu0 %v156
    %708 = vmatpush.msra.mxu0 %v152
    %709 = vmatpush.msra.mxu0 %v148
    %710 = vmatpush.msra.mxu0 %v144
    %711 = vmatpush.msra.mxu0 %v140
    %712 = vmatpush.msra.mxu0 %v136
    %713 = vmatpush.msra.mxu0 %v132
    %714 = vmatpush.msra.mxu0 %v128
    %715 = vmatpush.msra.mxu0 %v124
    %716 = vmatpush.msra.mxu0 %v120
    %717 = vmatpush.msra.mxu0 %v116
    %718 = vmatmul.f32.gmra.mxu0 %v696
    %v719 = vpop.f32.mrf.mxu0
    %v720 = vadd.f32 0.0, %v719
    %721 = vdwg.mxu0
    %722 = vmatpush.msra.mxu0 %v177
    %723 = vmatpush.msra.mxu0 %v173
    %724 = vmatpush.msra.mxu0 %v169
    %725 = vmatpush.msra.mxu0 %v165
    %726 = vmatpush.msra.mxu0 %v161
    %727 = vmatpush.msra.mxu0 %v157
    %728 = vmatpush.msra.mxu0 %v153
    %729 = vmatpush.msra.mxu0 %v149
    %730 = vmatpush.msra.mxu0 %v145
    %731 = vmatpush.msra.mxu0 %v141
    %732 = vmatpush.msra.mxu0 %v137
    %733 = vmatpush.msra.mxu0 %v133
    %734 = vmatpush.msra.mxu0 %v129
    %735 = vmatpush.msra.mxu0 %v125
    %736 = vmatpush.msra.mxu0 %v121
    %737 = vmatpush.msra.mxu0 %v117
    %738 = vmatmul.f32.gmra.mxu0 %v696
    %v739 = vpop.f32.mrf.mxu0
    %v740 = vadd.f32 0.0, %v739
    %741 = vdwg.mxu0
    %742 = vmatpush.msra.mxu0 %v178
    %743 = vmatpush.msra.mxu0 %v174
    %744 = vmatpush.msra.mxu0 %v170
    %745 = vmatpush.msra.mxu0 %v166
    %746 = vmatpush.msra.mxu0 %v162
    %747 = vmatpush.msra.mxu0 %v158
    %748 = vmatpush.msra.mxu0 %v154
    %749 = vmatpush.msra.mxu0 %v150
    %750 = vmatpush.msra.mxu0 %v146
    %751 = vmatpush.msra.mxu0 %v142
    %752 = vmatpush.msra.mxu0 %v138
    %753 = vmatpush.msra.mxu0 %v134
    %754 = vmatpush.msra.mxu0 %v130
    %755 = vmatpush.msra.mxu0 %v126
    %756 = vmatpush.msra.mxu0 %v122
    %757 = vmatpush.msra.mxu0 %v118
    %758 = vmatmul.f32.gmra.mxu0 %v696
    %v759 = vpop.f32.mrf.mxu0
    %v760 = vadd.f32 0.0, %v759
    %761 = vdwg.mxu0
    %762 = vmatpush.msra.mxu0 %v179
    %763 = vmatpush.msra.mxu0 %v175
    %764 = vmatpush.msra.mxu0 %v171
    %765 = vmatpush.msra.mxu0 %v167
    %766 = vmatpush.msra.mxu0 %v163
    %767 = vmatpush.msra.mxu0 %v159
    %768 = vmatpush.msra.mxu0 %v155
    %769 = vmatpush.msra.mxu0 %v151
    %770 = vmatpush.msra.mxu0 %v147
    %771 = vmatpush.msra.mxu0 %v143
    %772 = vmatpush.msra.mxu0 %v139
    %773 = vmatpush.msra.mxu0 %v135
    %774 = vmatpush.msra.mxu0 %v131
    %775 = vmatpush.msra.mxu0 %v127
    %776 = vmatpush.msra.mxu0 %v123
    %777 = vmatpush.msra.mxu0 %v119
    %778 = vmatmul.f32.gmra.mxu0 %v696
    %v779 = vpop.f32.mrf.mxu0
    %v780 = vadd.f32 0.0, %v779
    %781 = vdwg.mxu0
    %v782 = vadd.f32 %v698, %v720
    %v783 = vadd.f32 %v699, %v740
    %v784 = vadd.f32 %v700, %v760
    %v785 = vadd.f32 %v701, %v780
    %v786 = vxor.u32 %v782, 2147483648
    %v787 = vmul.f32 %v786, 1.442695
    %v788 = vpow.pop %v787
    %v789 = vadd.f32 %v788, 1.0
    %v790 = vrcp.pop %v789
    %v791 = vmul.f32 %v789, %v790
    %v792 = vsub.f32 1.0, %v791
    %v793 = vmul.f32 %v790, %v792
    %v794 = vadd.f32 %v790, %v793
    %vm795 = vweird.f32 %v789
    %vm796 = vweird.f32 %v790
    %vm797 = vmor %vm795, %vm796
    %v798 = vsel %vm797, %v790, %v794
    %v799 = vand.u32 2147483647, %v789
    %vm800 = vcmp.eq.f32.partialorder %v799, 8.507059e+37
    %v801 = vand.u32 %v789, 2147483648
    %v802 = vor.u32 1.1754944e-38, %v801
    %v803 = vsel %vm800, %v802, %v798
    %v804 = vmul.f32 1.0, %v803
    %v805 = vxor.u32 %v783, 2147483648
    %v806 = vmul.f32 %v805, 1.442695
    %v807 = vpow.pop %v806
    %v808 = vadd.f32 %v807, 1.0
    %v809 = vrcp.pop %v808
    %v810 = vmul.f32 %v808, %v809
    %v811 = vsub.f32 1.0, %v810
    %v812 = vmul.f32 %v809, %v811
    %v813 = vadd.f32 %v809, %v812
    %vm814 = vweird.f32 %v808
    %vm815 = vweird.f32 %v809
    %vm816 = vmor %vm814, %vm815
    %v817 = vsel %vm816, %v809, %v813
    %v818 = vand.u32 2147483647, %v808
    %vm819 = vcmp.eq.f32.partialorder %v818, 8.507059e+37
    %v820 = vand.u32 %v808, 2147483648
    %v821 = vor.u32 1.1754944e-38, %v820
    %v822 = vsel %vm819, %v821, %v817
    %v823 = vmul.f32 1.0, %v822
    %v824 = vtanh.pop %v784
    %v825 = vxor.u32 %v785, 2147483648
    %v826 = vmul.f32 %v825, 1.442695
    %v827 = vpow.pop %v826
    %v828 = vadd.f32 %v827, 1.0
    %v829 = vrcp.pop %v828
    %v830 = vmul.f32 %v828, %v829
    %v831 = vsub.f32 1.0, %v830
    %v832 = vmul.f32 %v829, %v831
    %v833 = vadd.f32 %v829, %v832
    %vm834 = vweird.f32 %v828
    %vm835 = vweird.f32 %v829
    %vm836 = vmor %vm834, %vm835
    %v837 = vsel %vm836, %v829, %v833
    %v838 = vand.u32 2147483647, %v828
    %vm839 = vcmp.eq.f32.partialorder %v838, 8.507059e+37
    %v840 = vand.u32 %v828, 2147483648
    %v841 = vor.u32 1.1754944e-38, %v840
    %v842 = vsel %vm839, %v841, %v837
    %v843 = vmul.f32 1.0, %v842
    %v844 = vmul.f32 %v823, %v694
    %v845 = vmul.f32 %v804, %v824
    %v846 = vadd.f32 %v844, %v845
    %v847 = vtanh.pop %v846
    %v848 = vmul.f32 %v843, %v847
    %849 = vst [vmem:[#allocation2 + $0x10] sm:$0xff] %v848
    %v850 = vld [vmem:[#allocation3 + $0x60] sm:$0xff]
    %v851 = vld [vmem:[#allocation3 + $0x68] sm:$0xff]
    %v852 = vld [vmem:[#allocation3 + $0x70] sm:$0xff]
    %v853 = vld [vmem:[#allocation3 + $0x78] sm:$0xff]
    %854 = vmatpush.msra.mxu0 %v176
    %855 = vmatpush.msra.mxu0 %v172
    %856 = vmatpush.msra.mxu0 %v168
    %857 = vmatpush.msra.mxu0 %v164
    %858 = vmatpush.msra.mxu0 %v160
    %859 = vmatpush.msra.mxu0 %v156
    %860 = vmatpush.msra.mxu0 %v152
    %861 = vmatpush.msra.mxu0 %v148
    %862 = vmatpush.msra.mxu0 %v144
    %863 = vmatpush.msra.mxu0 %v140
    %864 = vmatpush.msra.mxu0 %v136
    %865 = vmatpush.msra.mxu0 %v132
    %866 = vmatpush.msra.mxu0 %v128
    %867 = vmatpush.msra.mxu0 %v124
    %868 = vmatpush.msra.mxu0 %v120
    %869 = vmatpush.msra.mxu0 %v116
    %870 = vmatmul.f32.gmra.mxu0 %v848
    %v871 = vpop.f32.mrf.mxu0
    %v872 = vadd.f32 0.0, %v871
    %873 = vdwg.mxu0
    %874 = vmatpush.msra.mxu0 %v177
    %875 = vmatpush.msra.mxu0 %v173
    %876 = vmatpush.msra.mxu0 %v169
    %877 = vmatpush.msra.mxu0 %v165
    %878 = vmatpush.msra.mxu0 %v161
    %879 = vmatpush.msra.mxu0 %v157
    %880 = vmatpush.msra.mxu0 %v153
    %881 = vmatpush.msra.mxu0 %v149
    %882 = vmatpush.msra.mxu0 %v145
    %883 = vmatpush.msra.mxu0 %v141
    %884 = vmatpush.msra.mxu0 %v137
    %885 = vmatpush.msra.mxu0 %v133
    %886 = vmatpush.msra.mxu0 %v129
    %887 = vmatpush.msra.mxu0 %v125
    %888 = vmatpush.msra.mxu0 %v121
    %889 = vmatpush.msra.mxu0 %v117
    %890 = vmatmul.f32.gmra.mxu0 %v848
    %v891 = vpop.f32.mrf.mxu0
    %v892 = vadd.f32 0.0, %v891
    %893 = vdwg.mxu0
    %894 = vmatpush.msra.mxu0 %v178
    %895 = vmatpush.msra.mxu0 %v174
    %896 = vmatpush.msra.mxu0 %v170
    %897 = vmatpush.msra.mxu0 %v166
    %898 = vmatpush.msra.mxu0 %v162
    %899 = vmatpush.msra.mxu0 %v158
    %900 = vmatpush.msra.mxu0 %v154
    %901 = vmatpush.msra.mxu0 %v150
    %902 = vmatpush.msra.mxu0 %v146
    %903 = vmatpush.msra.mxu0 %v142
    %904 = vmatpush.msra.mxu0 %v138
    %905 = vmatpush.msra.mxu0 %v134
    %906 = vmatpush.msra.mxu0 %v130
    %907 = vmatpush.msra.mxu0 %v126
    %908 = vmatpush.msra.mxu0 %v122
    %909 = vmatpush.msra.mxu0 %v118
    %910 = vmatmul.f32.gmra.mxu0 %v848
    %v911 = vpop.f32.mrf.mxu0
    %v912 = vadd.f32 0.0, %v911
    %913 = vdwg.mxu0
    %914 = vmatpush.msra.mxu0 %v179
    %915 = vmatpush.msra.mxu0 %v175
    %916 = vmatpush.msra.mxu0 %v171
    %917 = vmatpush.msra.mxu0 %v167
    %918 = vmatpush.msra.mxu0 %v163
    %919 = vmatpush.msra.mxu0 %v159
    %920 = vmatpush.msra.mxu0 %v155
    %921 = vmatpush.msra.mxu0 %v151
    %922 = vmatpush.msra.mxu0 %v147
    %923 = vmatpush.msra.mxu0 %v143
    %924 = vmatpush.msra.mxu0 %v139
    %925 = vmatpush.msra.mxu0 %v135
    %926 = vmatpush.msra.mxu0 %v131
    %927 = vmatpush.msra.mxu0 %v127
    %928 = vmatpush.msra.mxu0 %v123
    %929 = vmatpush.msra.mxu0 %v119
    %930 = vmatmul.f32.gmra.mxu0 %v848
    %v931 = vpop.f32.mrf.mxu0
    %v932 = vadd.f32 0.0, %v931
    %933 = vdwg.mxu0
    %v934 = vadd.f32 %v850, %v872
    %v935 = vadd.f32 %v851, %v892
    %v936 = vadd.f32 %v852, %v912
    %v937 = vadd.f32 %v853, %v932
    %v938 = vxor.u32 %v934, 2147483648
    %v939 = vmul.f32 %v938, 1.442695
    %v940 = vpow.pop %v939
    %v941 = vadd.f32 %v940, 1.0
    %v942 = vrcp.pop %v941
    %v943 = vmul.f32 %v941, %v942
    %v944 = vsub.f32 1.0, %v943
    %v945 = vmul.f32 %v942, %v944
    %v946 = vadd.f32 %v942, %v945
    %vm947 = vweird.f32 %v941
    %vm948 = vweird.f32 %v942
    %vm949 = vmor %vm947, %vm948
    %v950 = vsel %vm949, %v942, %v946
    %v951 = vand.u32 2147483647, %v941
    %vm952 = vcmp.eq.f32.partialorder %v951, 8.507059e+37
    %v953 = vand.u32 %v941, 2147483648
    %v954 = vor.u32 1.1754944e-38, %v953
    %v955 = vsel %vm952, %v954, %v950
    %v956 = vmul.f32 1.0, %v955
    %v957 = vxor.u32 %v935, 2147483648
    %v958 = vmul.f32 %v957, 1.442695
    %v959 = vpow.pop %v958
    %v960 = vadd.f32 %v959, 1.0
    %v961 = vrcp.pop %v960
    %v962 = vmul.f32 %v960, %v961
    %v963 = vsub.f32 1.0, %v962
    %v964 = vmul.f32 %v961, %v963
    %v965 = vadd.f32 %v961, %v964
    %vm966 = vweird.f32 %v960
    %vm967 = vweird.f32 %v961
    %vm968 = vmor %vm966, %vm967
    %v969 = vsel %vm968, %v961, %v965
    %v970 = vand.u32 2147483647, %v960
    %vm971 = vcmp.eq.f32.partialorder %v970, 8.507059e+37
    %v972 = vand.u32 %v960, 2147483648
    %v973 = vor.u32 1.1754944e-38, %v972
    %v974 = vsel %vm971, %v973, %v969
    %v975 = vmul.f32 1.0, %v974
    %v976 = vtanh.pop %v936
    %v977 = vxor.u32 %v937, 2147483648
    %v978 = vmul.f32 %v977, 1.442695
    %v979 = vpow.pop %v978
    %v980 = vadd.f32 %v979, 1.0
    %v981 = vrcp.pop %v980
    %v982 = vmul.f32 %v980, %v981
    %v983 = vsub.f32 1.0, %v982
    %v984 = vmul.f32 %v981, %v983
    %v985 = vadd.f32 %v981, %v984
    %vm986 = vweird.f32 %v980
    %vm987 = vweird.f32 %v981
    %vm988 = vmor %vm986, %vm987
    %v989 = vsel %vm988, %v981, %v985
    %v990 = vand.u32 2147483647, %v980
    %vm991 = vcmp.eq.f32.partialorder %v990, 8.507059e+37
    %v992 = vand.u32 %v980, 2147483648
    %v993 = vor.u32 1.1754944e-38, %v992
    %v994 = vsel %vm991, %v993, %v989
    %v995 = vmul.f32 1.0, %v994
    %v996 = vmul.f32 %v975, %v846
    %v997 = vmul.f32 %v956, %v976
    %v998 = vadd.f32 %v996, %v997
    %v999 = vtanh.pop %v998
    %v1000 = vmul.f32 %v995, %v999
    %1001 = vst [vmem:[#allocation2 + $0x18] sm:$0xff] %v1000
    %v1002 = vld [vmem:[#allocation3 + $0x80] sm:$0xff]
    %v1003 = vld [vmem:[#allocation3 + $0x88] sm:$0xff]
    %v1004 = vld [vmem:[#allocation3 + $0x90] sm:$0xff]
    %v1005 = vld [vmem:[#allocation3 + $0x98] sm:$0xff]
    %1006 = vmatpush.msra.mxu0 %v176
    %1007 = vmatpush.msra.mxu0 %v172
    %1008 = vmatpush.msra.mxu0 %v168
    %1009 = vmatpush.msra.mxu0 %v164
    %1010 = vmatpush.msra.mxu0 %v160
    %1011 = vmatpush.msra.mxu0 %v156
    %1012 = vmatpush.msra.mxu0 %v152
    %1013 = vmatpush.msra.mxu0 %v148
    %1014 = vmatpush.msra.mxu0 %v144
    %1015 = vmatpush.msra.mxu0 %v140
    %1016 = vmatpush.msra.mxu0 %v136
    %1017 = vmatpush.msra.mxu0 %v132
    %1018 = vmatpush.msra.mxu0 %v128
    %1019 = vmatpush.msra.mxu0 %v124
    %1020 = vmatpush.msra.mxu0 %v120
    %1021 = vmatpush.msra.mxu0 %v116
    %1022 = vmatmul.f32.gmra.mxu0 %v1000
    %v1023 = vpop.f32.mrf.mxu0
    %v1024 = vadd.f32 0.0, %v1023
    %1025 = vdwg.mxu0
    %1026 = vmatpush.msra.mxu0 %v177
    %1027 = vmatpush.msra.mxu0 %v173
    %1028 = vmatpush.msra.mxu0 %v169
    %1029 = vmatpush.msra.mxu0 %v165
    %1030 = vmatpush.msra.mxu0 %v161
    %1031 = vmatpush.msra.mxu0 %v157
    %1032 = vmatpush.msra.mxu0 %v153
    %1033 = vmatpush.msra.mxu0 %v149
    %1034 = vmatpush.msra.mxu0 %v145
    %1035 = vmatpush.msra.mxu0 %v141
    %1036 = vmatpush.msra.mxu0 %v137
    %1037 = vmatpush.msra.mxu0 %v133
    %1038 = vmatpush.msra.mxu0 %v129
    %1039 = vmatpush.msra.mxu0 %v125
    %1040 = vmatpush.msra.mxu0 %v121
    %1041 = vmatpush.msra.mxu0 %v117
    %1042 = vmatmul.f32.gmra.mxu0 %v1000
    %v1043 = vpop.f32.mrf.mxu0
    %v1044 = vadd.f32 0.0, %v1043
    %1045 = vdwg.mxu0
    %1046 = vmatpush.msra.mxu0 %v178
    %1047 = vmatpush.msra.mxu0 %v174
    %1048 = vmatpush.msra.mxu0 %v170
    %1049 = vmatpush.msra.mxu0 %v166
    %1050 = vmatpush.msra.mxu0 %v162
    %1051 = vmatpush.msra.mxu0 %v158
    %1052 = vmatpush.msra.mxu0 %v154
    %1053 = vmatpush.msra.mxu0 %v150
    %1054 = vmatpush.msra.mxu0 %v146
    %1055 = vmatpush.msra.mxu0 %v142
    %1056 = vmatpush.msra.mxu0 %v138
    %1057 = vmatpush.msra.mxu0 %v134
    %1058 = vmatpush.msra.mxu0 %v130
    %1059 = vmatpush.msra.mxu0 %v126
    %1060 = vmatpush.msra.mxu0 %v122
    %1061 = vmatpush.msra.mxu0 %v118
    %1062 = vmatmul.f32.gmra.mxu0 %v1000
    %v1063 = vpop.f32.mrf.mxu0
    %v1064 = vadd.f32 0.0, %v1063
    %1065 = vdwg.mxu0
    %1066 = vmatpush.msra.mxu0 %v179
    %1067 = vmatpush.msra.mxu0 %v175
    %1068 = vmatpush.msra.mxu0 %v171
    %1069 = vmatpush.msra.mxu0 %v167
    %1070 = vmatpush.msra.mxu0 %v163
    %1071 = vmatpush.msra.mxu0 %v159
    %1072 = vmatpush.msra.mxu0 %v155
    %1073 = vmatpush.msra.mxu0 %v151
    %1074 = vmatpush.msra.mxu0 %v147
    %1075 = vmatpush.msra.mxu0 %v143
    %1076 = vmatpush.msra.mxu0 %v139
    %1077 = vmatpush.msra.mxu0 %v135
    %1078 = vmatpush.msra.mxu0 %v131
    %1079 = vmatpush.msra.mxu0 %v127
    %1080 = vmatpush.msra.mxu0 %v123
    %1081 = vmatpush.msra.mxu0 %v119
    %1082 = vmatmul.f32.gmra.mxu0 %v1000
    %v1083 = vpop.f32.mrf.mxu0
    %v1084 = vadd.f32 0.0, %v1083
    %1085 = vdwg.mxu0
    %v1086 = vadd.f32 %v1002, %v1024
    %v1087 = vadd.f32 %v1003, %v1044
    %v1088 = vadd.f32 %v1004, %v1064
    %v1089 = vadd.f32 %v1005, %v1084
    %v1090 = vxor.u32 %v1086, 2147483648
    %v1091 = vmul.f32 %v1090, 1.442695
    %v1092 = vpow.pop %v1091
    %v1093 = vadd.f32 %v1092, 1.0
    %v1094 = vrcp.pop %v1093
    %v1095 = vmul.f32 %v1093, %v1094
    %v1096 = vsub.f32 1.0, %v1095
    %v1097 = vmul.f32 %v1094, %v1096
    %v1098 = vadd.f32 %v1094, %v1097
    %vm1099 = vweird.f32 %v1093
    %vm1100 = vweird.f32 %v1094
    %vm1101 = vmor %vm1099, %vm1100
    %v1102 = vsel %vm1101, %v1094, %v1098
    %v1103 = vand.u32 2147483647, %v1093
    %vm1104 = vcmp.eq.f32.partialorder %v1103, 8.507059e+37
    %v1105 = vand.u32 %v1093, 2147483648
    %v1106 = vor.u32 1.1754944e-38, %v1105
    %v1107 = vsel %vm1104, %v1106, %v1102
    %v1108 = vmul.f32 1.0, %v1107
    %v1109 = vxor.u32 %v1087, 2147483648
    %v1110 = vmul.f32 %v1109, 1.442695
    %v1111 = vpow.pop %v1110
    %v1112 = vadd.f32 %v1111, 1.0
    %v1113 = vrcp.pop %v1112
    %v1114 = vmul.f32 %v1112, %v1113
    %v1115 = vsub.f32 1.0, %v1114
    %v1116 = vmul.f32 %v1113, %v1115
    %v1117 = vadd.f32 %v1113, %v1116
    %vm1118 = vweird.f32 %v1112
    %vm1119 = vweird.f32 %v1113
    %vm1120 = vmor %vm1118, %vm1119
    %v1121 = vsel %vm1120, %v1113, %v1117
    %v1122 = vand.u32 2147483647, %v1112
    %vm1123 = vcmp.eq.f32.partialorder %v1122, 8.507059e+37
    %v1124 = vand.u32 %v1112, 2147483648
    %v1125 = vor.u32 1.1754944e-38, %v1124
    %v1126 = vsel %vm1123, %v1125, %v1121
    %v1127 = vmul.f32 1.0, %v1126
    %v1128 = vtanh.pop %v1088
    %v1129 = vxor.u32 %v1089, 2147483648
    %v1130 = vmul.f32 %v1129, 1.442695
    %v1131 = vpow.pop %v1130
    %v1132 = vadd.f32 %v1131, 1.0
    %v1133 = vrcp.pop %v1132
    %v1134 = vmul.f32 %v1132, %v1133
    %v1135 = vsub.f32 1.0, %v1134
    %v1136 = vmul.f32 %v1133, %v1135
    %v1137 = vadd.f32 %v1133, %v1136
    %vm1138 = vweird.f32 %v1132
    %vm1139 = vweird.f32 %v1133
    %vm1140 = vmor %vm1138, %vm1139
    %v1141 = vsel %vm1140, %v1133, %v1137
    %v1142 = vand.u32 2147483647, %v1132
    %vm1143 = vcmp.eq.f32.partialorder %v1142, 8.507059e+37
    %v1144 = vand.u32 %v1132, 2147483648
    %v1145 = vor.u32 1.1754944e-38, %v1144
    %v1146 = vsel %vm1143, %v1145, %v1141
    %v1147 = vmul.f32 1.0, %v1146
    %v1148 = vmul.f32 %v1127, %v998
    %v1149 = vmul.f32 %v1108, %v1128
    %v1150 = vadd.f32 %v1148, %v1149
    %v1151 = vtanh.pop %v1150
    %v1152 = vmul.f32 %v1147, %v1151
    %1153 = vst [vmem:[#allocation2 + $0x20] sm:$0xff] %v1152
    %v1154 = vld [vmem:[#allocation3 + $0xa0] sm:$0xff]
    %v1155 = vld [vmem:[#allocation3 + $0xa8] sm:$0xff]
    %v1156 = vld [vmem:[#allocation3 + $0xb0] sm:$0xff]
    %v1157 = vld [vmem:[#allocation3 + $0xb8] sm:$0xff]
    %1158 = vmatpush.msra.mxu0 %v176
    %1159 = vmatpush.msra.mxu0 %v172
    %1160 = vmatpush.msra.mxu0 %v168
    %1161 = vmatpush.msra.mxu0 %v164
    %1162 = vmatpush.msra.mxu0 %v160
    %1163 = vmatpush.msra.mxu0 %v156
    %1164 = vmatpush.msra.mxu0 %v152
    %1165 = vmatpush.msra.mxu0 %v148
    %1166 = vmatpush.msra.mxu0 %v144
    %1167 = vmatpush.msra.mxu0 %v140
    %1168 = vmatpush.msra.mxu0 %v136
    %1169 = vmatpush.msra.mxu0 %v132
    %1170 = vmatpush.msra.mxu0 %v128
    %1171 = vmatpush.msra.mxu0 %v124
    %1172 = vmatpush.msra.mxu0 %v120
    %1173 = vmatpush.msra.mxu0 %v116
    %1174 = vmatmul.f32.gmra.mxu0 %v1152
    %v1175 = vpop.f32.mrf.mxu0
    %v1176 = vadd.f32 0.0, %v1175
    %1177 = vdwg.mxu0
    %1178 = vmatpush.msra.mxu0 %v177
    %1179 = vmatpush.msra.mxu0 %v173
    %1180 = vmatpush.msra.mxu0 %v169
    %1181 = vmatpush.msra.mxu0 %v165
    %1182 = vmatpush.msra.mxu0 %v161
    %1183 = vmatpush.msra.mxu0 %v157
    %1184 = vmatpush.msra.mxu0 %v153
    %1185 = vmatpush.msra.mxu0 %v149
    %1186 = vmatpush.msra.mxu0 %v145
    %1187 = vmatpush.msra.mxu0 %v141
    %1188 = vmatpush.msra.mxu0 %v137
    %1189 = vmatpush.msra.mxu0 %v133
    %1190 = vmatpush.msra.mxu0 %v129
    %1191 = vmatpush.msra.mxu0 %v125
    %1192 = vmatpush.msra.mxu0 %v121
    %1193 = vmatpush.msra.mxu0 %v117
    %1194 = vmatmul.f32.gmra.mxu0 %v1152
    %v1195 = vpop.f32.mrf.mxu0
    %v1196 = vadd.f32 0.0, %v1195
    %1197 = vdwg.mxu0
    %1198 = vmatpush.msra.mxu0 %v178
    %1199 = vmatpush.msra.mxu0 %v174
    %1200 = vmatpush.msra.mxu0 %v170
    %1201 = vmatpush.msra.mxu0 %v166
    %1202 = vmatpush.msra.mxu0 %v162
    %1203 = vmatpush.msra.mxu0 %v158
    %1204 = vmatpush.msra.mxu0 %v154
    %1205 = vmatpush.msra.mxu0 %v150
    %1206 = vmatpush.msra.mxu0 %v146
    %1207 = vmatpush.msra.mxu0 %v142
    %1208 = vmatpush.msra.mxu0 %v138
    %1209 = vmatpush.msra.mxu0 %v134
    %1210 = vmatpush.msra.mxu0 %v130
    %1211 = vmatpush.msra.mxu0 %v126
    %1212 = vmatpush.msra.mxu0 %v122
    %1213 = vmatpush.msra.mxu0 %v118
    %1214 = vmatmul.f32.gmra.mxu0 %v1152
    %v1215 = vpop.f32.mrf.mxu0
    %v1216 = vadd.f32 0.0, %v1215
    %1217 = vdwg.mxu0
    %1218 = vmatpush.msra.mxu0 %v179
    %1219 = vmatpush.msra.mxu0 %v175
    %1220 = vmatpush.msra.mxu0 %v171
    %1221 = vmatpush.msra.mxu0 %v167
    %1222 = vmatpush.msra.mxu0 %v163
    %1223 = vmatpush.msra.mxu0 %v159
    %1224 = vmatpush.msra.mxu0 %v155
    %1225 = vmatpush.msra.mxu0 %v151
    %1226 = vmatpush.msra.mxu0 %v147
    %1227 = vmatpush.msra.mxu0 %v143
    %1228 = vmatpush.msra.mxu0 %v139
    %1229 = vmatpush.msra.mxu0 %v135
    %1230 = vmatpush.msra.mxu0 %v131
    %1231 = vmatpush.msra.mxu0 %v127
    %1232 = vmatpush.msra.mxu0 %v123
    %1233 = vmatpush.msra.mxu0 %v119
    %1234 = vmatmul.f32.gmra.mxu0 %v1152
    %v1235 = vpop.f32.mrf.mxu0
    %v1236 = vadd.f32 0.0, %v1235
    %1237 = vdwg.mxu0
    %v1238 = vadd.f32 %v1154, %v1176
    %v1239 = vadd.f32 %v1155, %v1196
    %v1240 = vadd.f32 %v1156, %v1216
    %v1241 = vadd.f32 %v1157, %v1236
    %v1242 = vxor.u32 %v1238, 2147483648
    %v1243 = vmul.f32 %v1242, 1.442695
    %v1244 = vpow.pop %v1243
    %v1245 = vadd.f32 %v1244, 1.0
    %v1246 = vrcp.pop %v1245
    %v1247 = vmul.f32 %v1245, %v1246
    %v1248 = vsub.f32 1.0, %v1247
    %v1249 = vmul.f32 %v1246, %v1248
    %v1250 = vadd.f32 %v1246, %v1249
    %vm1251 = vweird.f32 %v1245
    %vm1252 = vweird.f32 %v1246
    %vm1253 = vmor %vm1251, %vm1252
    %v1254 = vsel %vm1253, %v1246, %v1250
    %v1255 = vand.u32 2147483647, %v1245
    %vm1256 = vcmp.eq.f32.partialorder %v1255, 8.507059e+37
    %v1257 = vand.u32 %v1245, 2147483648
    %v1258 = vor.u32 1.1754944e-38, %v1257
    %v1259 = vsel %vm1256, %v1258, %v1254
    %v1260 = vmul.f32 1.0, %v1259
    %v1261 = vxor.u32 %v1239, 2147483648
    %v1262 = vmul.f32 %v1261, 1.442695
    %v1263 = vpow.pop %v1262
    %v1264 = vadd.f32 %v1263, 1.0
    %v1265 = vrcp.pop %v1264
    %v1266 = vmul.f32 %v1264, %v1265
    %v1267 = vsub.f32 1.0, %v1266
    %v1268 = vmul.f32 %v1265, %v1267
    %v1269 = vadd.f32 %v1265, %v1268
    %vm1270 = vweird.f32 %v1264
    %vm1271 = vweird.f32 %v1265
    %vm1272 = vmor %vm1270, %vm1271
    %v1273 = vsel %vm1272, %v1265, %v1269
    %v1274 = vand.u32 2147483647, %v1264
    %vm1275 = vcmp.eq.f32.partialorder %v1274, 8.507059e+37
    %v1276 = vand.u32 %v1264, 2147483648
    %v1277 = vor.u32 1.1754944e-38, %v1276
    %v1278 = vsel %vm1275, %v1277, %v1273
    %v1279 = vmul.f32 1.0, %v1278
    %v1280 = vtanh.pop %v1240
    %v1281 = vxor.u32 %v1241, 2147483648
    %v1282 = vmul.f32 %v1281, 1.442695
    %v1283 = vpow.pop %v1282
    %v1284 = vadd.f32 %v1283, 1.0
    %v1285 = vrcp.pop %v1284
    %v1286 = vmul.f32 %v1284, %v1285
    %v1287 = vsub.f32 1.0, %v1286
    %v1288 = vmul.f32 %v1285, %v1287
    %v1289 = vadd.f32 %v1285, %v1288
    %vm1290 = vweird.f32 %v1284
    %vm1291 = vweird.f32 %v1285
    %vm1292 = vmor %vm1290, %vm1291
    %v1293 = vsel %vm1292, %v1285, %v1289
    %v1294 = vand.u32 2147483647, %v1284
    %vm1295 = vcmp.eq.f32.partialorder %v1294, 8.507059e+37
    %v1296 = vand.u32 %v1284, 2147483648
    %v1297 = vor.u32 1.1754944e-38, %v1296
    %v1298 = vsel %vm1295, %v1297, %v1293
    %v1299 = vmul.f32 1.0, %v1298
    %v1300 = vmul.f32 %v1279, %v1150
    %v1301 = vmul.f32 %v1260, %v1280
    %v1302 = vadd.f32 %v1300, %v1301
    %v1303 = vtanh.pop %v1302
    %v1304 = vmul.f32 %v1299, %v1303
    %1305 = vst [vmem:[#allocation2 + $0x28] sm:$0xff] %v1304
    %v1306 = vld [vmem:[#allocation3 + $0xc0] sm:$0xff]
    %v1307 = vld [vmem:[#allocation3 + $0xc8] sm:$0xff]
    %v1308 = vld [vmem:[#allocation3 + $0xd0] sm:$0xff]
    %v1309 = vld [vmem:[#allocation3 + $0xd8] sm:$0xff]
    %1310 = vmatpush.msra.mxu0 %v176
    %1311 = vmatpush.msra.mxu0 %v172
    %1312 = vmatpush.msra.mxu0 %v168
    %1313 = vmatpush.msra.mxu0 %v164
    %1314 = vmatpush.msra.mxu0 %v160
    %1315 = vmatpush.msra.mxu0 %v156
    %1316 = vmatpush.msra.mxu0 %v152
    %1317 = vmatpush.msra.mxu0 %v148
    %1318 = vmatpush.msra.mxu0 %v144
    %1319 = vmatpush.msra.mxu0 %v140
    %1320 = vmatpush.msra.mxu0 %v136
    %1321 = vmatpush.msra.mxu0 %v132
    %1322 = vmatpush.msra.mxu0 %v128
    %1323 = vmatpush.msra.mxu0 %v124
    %1324 = vmatpush.msra.mxu0 %v120
    %1325 = vmatpush.msra.mxu0 %v116
    %1326 = vmatmul.f32.gmra.mxu0 %v1304
    %v1327 = vpop.f32.mrf.mxu0
    %v1328 = vadd.f32 0.0, %v1327
    %1329 = vdwg.mxu0
    %1330 = vmatpush.msra.mxu0 %v177
    %1331 = vmatpush.msra.mxu0 %v173
    %1332 = vmatpush.msra.mxu0 %v169
    %1333 = vmatpush.msra.mxu0 %v165
    %1334 = vmatpush.msra.mxu0 %v161
    %1335 = vmatpush.msra.mxu0 %v157
    %1336 = vmatpush.msra.mxu0 %v153
    %1337 = vmatpush.msra.mxu0 %v149
    %1338 = vmatpush.msra.mxu0 %v145
    %1339 = vmatpush.msra.mxu0 %v141
    %1340 = vmatpush.msra.mxu0 %v137
    %1341 = vmatpush.msra.mxu0 %v133
    %1342 = vmatpush.msra.mxu0 %v129
    %1343 = vmatpush.msra.mxu0 %v125
    %1344 = vmatpush.msra.mxu0 %v121
    %1345 = vmatpush.msra.mxu0 %v117
    %1346 = vmatmul.f32.gmra.mxu0 %v1304
    %v1347 = vpop.f32.mrf.mxu0
    %v1348 = vadd.f32 0.0, %v1347
    %1349 = vdwg.mxu0
    %1350 = vmatpush.msra.mxu0 %v178
    %1351 = vmatpush.msra.mxu0 %v174
    %1352 = vmatpush.msra.mxu0 %v170
    %1353 = vmatpush.msra.mxu0 %v166
    %1354 = vmatpush.msra.mxu0 %v162
    %1355 = vmatpush.msra.mxu0 %v158
    %1356 = vmatpush.msra.mxu0 %v154
    %1357 = vmatpush.msra.mxu0 %v150
    %1358 = vmatpush.msra.mxu0 %v146
    %1359 = vmatpush.msra.mxu0 %v142
    %1360 = vmatpush.msra.mxu0 %v138
    %1361 = vmatpush.msra.mxu0 %v134
    %1362 = vmatpush.msra.mxu0 %v130
    %1363 = vmatpush.msra.mxu0 %v126
    %1364 = vmatpush.msra.mxu0 %v122
    %1365 = vmatpush.msra.mxu0 %v118
    %1366 = vmatmul.f32.gmra.mxu0 %v1304
    %v1367 = vpop.f32.mrf.mxu0
    %v1368 = vadd.f32 0.0, %v1367
    %1369 = vdwg.mxu0
    %1370 = vmatpush.msra.mxu0 %v179
    %1371 = vmatpush.msra.mxu0 %v175
    %1372 = vmatpush.msra.mxu0 %v171
    %1373 = vmatpush.msra.mxu0 %v167
    %1374 = vmatpush.msra.mxu0 %v163
    %1375 = vmatpush.msra.mxu0 %v159
    %1376 = vmatpush.msra.mxu0 %v155
    %1377 = vmatpush.msra.mxu0 %v151
    %1378 = vmatpush.msra.mxu0 %v147
    %1379 = vmatpush.msra.mxu0 %v143
    %1380 = vmatpush.msra.mxu0 %v139
    %1381 = vmatpush.msra.mxu0 %v135
    %1382 = vmatpush.msra.mxu0 %v131
    %1383 = vmatpush.msra.mxu0 %v127
    %1384 = vmatpush.msra.mxu0 %v123
    %1385 = vmatpush.msra.mxu0 %v119
    %1386 = vmatmul.f32.gmra.mxu0 %v1304
    %v1387 = vpop.f32.mrf.mxu0
    %v1388 = vadd.f32 0.0, %v1387
    %1389 = vdwg.mxu0
    %v1390 = vadd.f32 %v1306, %v1328
    %v1391 = vadd.f32 %v1307, %v1348
    %v1392 = vadd.f32 %v1308, %v1368
    %v1393 = vadd.f32 %v1309, %v1388
    %v1394 = vxor.u32 %v1390, 2147483648
    %v1395 = vmul.f32 %v1394, 1.442695
    %v1396 = vpow.pop %v1395
    %v1397 = vadd.f32 %v1396, 1.0
    %v1398 = vrcp.pop %v1397
    %v1399 = vmul.f32 %v1397, %v1398
    %v1400 = vsub.f32 1.0, %v1399
    %v1401 = vmul.f32 %v1398, %v1400
    %v1402 = vadd.f32 %v1398, %v1401
    %vm1403 = vweird.f32 %v1397
    %vm1404 = vweird.f32 %v1398
    %vm1405 = vmor %vm1403, %vm1404
    %v1406 = vsel %vm1405, %v1398, %v1402
    %v1407 = vand.u32 2147483647, %v1397
    %vm1408 = vcmp.eq.f32.partialorder %v1407, 8.507059e+37
    %v1409 = vand.u32 %v1397, 2147483648
    %v1410 = vor.u32 1.1754944e-38, %v1409
    %v1411 = vsel %vm1408, %v1410, %v1406
    %v1412 = vmul.f32 1.0, %v1411
    %v1413 = vxor.u32 %v1391, 2147483648
    %v1414 = vmul.f32 %v1413, 1.442695
    %v1415 = vpow.pop %v1414
    %v1416 = vadd.f32 %v1415, 1.0
    %v1417 = vrcp.pop %v1416
    %v1418 = vmul.f32 %v1416, %v1417
    %v1419 = vsub.f32 1.0, %v1418
    %v1420 = vmul.f32 %v1417, %v1419
    %v1421 = vadd.f32 %v1417, %v1420
    %vm1422 = vweird.f32 %v1416
    %vm1423 = vweird.f32 %v1417
    %vm1424 = vmor %vm1422, %vm1423
    %v1425 = vsel %vm1424, %v1417, %v1421
    %v1426 = vand.u32 2147483647, %v1416
    %vm1427 = vcmp.eq.f32.partialorder %v1426, 8.507059e+37
    %v1428 = vand.u32 %v1416, 2147483648
    %v1429 = vor.u32 1.1754944e-38, %v1428
    %v1430 = vsel %vm1427, %v1429, %v1425
    %v1431 = vmul.f32 1.0, %v1430
    %v1432 = vtanh.pop %v1392
    %v1433 = vxor.u32 %v1393, 2147483648
    %v1434 = vmul.f32 %v1433, 1.442695
    %v1435 = vpow.pop %v1434
    %v1436 = vadd.f32 %v1435, 1.0
    %v1437 = vrcp.pop %v1436
    %v1438 = vmul.f32 %v1436, %v1437
    %v1439 = vsub.f32 1.0, %v1438
    %v1440 = vmul.f32 %v1437, %v1439
    %v1441 = vadd.f32 %v1437, %v1440
    %vm1442 = vweird.f32 %v1436
    %vm1443 = vweird.f32 %v1437
    %vm1444 = vmor %vm1442, %vm1443
    %v1445 = vsel %vm1444, %v1437, %v1441
    %v1446 = vand.u32 2147483647, %v1436
    %vm1447 = vcmp.eq.f32.partialorder %v1446, 8.507059e+37
    %v1448 = vand.u32 %v1436, 2147483648
    %v1449 = vor.u32 1.1754944e-38, %v1448
    %v1450 = vsel %vm1447, %v1449, %v1445
    %v1451 = vmul.f32 1.0, %v1450
    %v1452 = vmul.f32 %v1431, %v1302
    %v1453 = vmul.f32 %v1412, %v1432
    %v1454 = vadd.f32 %v1452, %v1453
    %v1455 = vtanh.pop %v1454
    %v1456 = vmul.f32 %v1451, %v1455
    %1457 = vst [vmem:[#allocation2 + $0x30] sm:$0xff] %v1456
    %v1458 = vld [vmem:[#allocation3 + $0xe0] sm:$0xff]
    %v1459 = vld [vmem:[#allocation3 + $0xe8] sm:$0xff]
    %v1460 = vld [vmem:[#allocation3 + $0xf0] sm:$0xff]
    %v1461 = vld [vmem:[#allocation3 + $0xf8] sm:$0xff]
    %1462 = vmatpush.msra.mxu0 %v176
    %1463 = vmatpush.msra.mxu0 %v172
    %1464 = vmatpush.msra.mxu0 %v168
    %1465 = vmatpush.msra.mxu0 %v164
    %1466 = vmatpush.msra.mxu0 %v160
    %1467 = vmatpush.msra.mxu0 %v156
    %1468 = vmatpush.msra.mxu0 %v152
    %1469 = vmatpush.msra.mxu0 %v148
    %1470 = vmatpush.msra.mxu0 %v144
    %1471 = vmatpush.msra.mxu0 %v140
    %1472 = vmatpush.msra.mxu0 %v136
    %1473 = vmatpush.msra.mxu0 %v132
    %1474 = vmatpush.msra.mxu0 %v128
    %1475 = vmatpush.msra.mxu0 %v124
    %1476 = vmatpush.msra.mxu0 %v120
    %1477 = vmatpush.msra.mxu0 %v116
    %1478 = vmatmul.f32.gmra.mxu0 %v1456
    %v1479 = vpop.f32.mrf.mxu0
    %v1480 = vadd.f32 0.0, %v1479
    %1481 = vdwg.mxu0
    %1482 = vmatpush.msra.mxu0 %v177
    %1483 = vmatpush.msra.mxu0 %v173
    %1484 = vmatpush.msra.mxu0 %v169
    %1485 = vmatpush.msra.mxu0 %v165
    %1486 = vmatpush.msra.mxu0 %v161
    %1487 = vmatpush.msra.mxu0 %v157
    %1488 = vmatpush.msra.mxu0 %v153
    %1489 = vmatpush.msra.mxu0 %v149
    %1490 = vmatpush.msra.mxu0 %v145
    %1491 = vmatpush.msra.mxu0 %v141
    %1492 = vmatpush.msra.mxu0 %v137
    %1493 = vmatpush.msra.mxu0 %v133
    %1494 = vmatpush.msra.mxu0 %v129
    %1495 = vmatpush.msra.mxu0 %v125
    %1496 = vmatpush.msra.mxu0 %v121
    %1497 = vmatpush.msra.mxu0 %v117
    %1498 = vmatmul.f32.gmra.mxu0 %v1456
    %v1499 = vpop.f32.mrf.mxu0
    %v1500 = vadd.f32 0.0, %v1499
    %1501 = vdwg.mxu0
    %1502 = vmatpush.msra.mxu0 %v178
    %1503 = vmatpush.msra.mxu0 %v174
    %1504 = vmatpush.msra.mxu0 %v170
    %1505 = vmatpush.msra.mxu0 %v166
    %1506 = vmatpush.msra.mxu0 %v162
    %1507 = vmatpush.msra.mxu0 %v158
    %1508 = vmatpush.msra.mxu0 %v154
    %1509 = vmatpush.msra.mxu0 %v150
    %1510 = vmatpush.msra.mxu0 %v146
    %1511 = vmatpush.msra.mxu0 %v142
    %1512 = vmatpush.msra.mxu0 %v138
    %1513 = vmatpush.msra.mxu0 %v134
    %1514 = vmatpush.msra.mxu0 %v130
    %1515 = vmatpush.msra.mxu0 %v126
    %1516 = vmatpush.msra.mxu0 %v122
    %1517 = vmatpush.msra.mxu0 %v118
    %1518 = vmatmul.f32.gmra.mxu0 %v1456
    %v1519 = vpop.f32.mrf.mxu0
    %v1520 = vadd.f32 0.0, %v1519
    %1521 = vdwg.mxu0
    %1522 = vmatpush.msra.mxu0 %v179
    %1523 = vmatpush.msra.mxu0 %v175
    %1524 = vmatpush.msra.mxu0 %v171
    %1525 = vmatpush.msra.mxu0 %v167
    %1526 = vmatpush.msra.mxu0 %v163
    %1527 = vmatpush.msra.mxu0 %v159
    %1528 = vmatpush.msra.mxu0 %v155
    %1529 = vmatpush.msra.mxu0 %v151
    %1530 = vmatpush.msra.mxu0 %v147
    %1531 = vmatpush.msra.mxu0 %v143
    %1532 = vmatpush.msra.mxu0 %v139
    %1533 = vmatpush.msra.mxu0 %v135
    %1534 = vmatpush.msra.mxu0 %v131
    %1535 = vmatpush.msra.mxu0 %v127
    %1536 = vmatpush.msra.mxu0 %v123
    %1537 = vmatpush.msra.mxu0 %v119
    %1538 = vmatmul.f32.gmra.mxu0 %v1456
    %v1539 = vpop.f32.mrf.mxu0
    %v1540 = vadd.f32 0.0, %v1539
    %1541 = vdwg.mxu0
    %v1542 = vadd.f32 %v1458, %v1480
    %v1543 = vadd.f32 %v1459, %v1500
    %v1544 = vadd.f32 %v1460, %v1520
    %v1545 = vadd.f32 %v1461, %v1540
    %v1546 = vxor.u32 %v1542, 2147483648
    %v1547 = vmul.f32 %v1546, 1.442695
    %v1548 = vpow.pop %v1547
    %v1549 = vadd.f32 %v1548, 1.0
    %v1550 = vrcp.pop %v1549
    %v1551 = vmul.f32 %v1549, %v1550
    %v1552 = vsub.f32 1.0, %v1551
    %v1553 = vmul.f32 %v1550, %v1552
    %v1554 = vadd.f32 %v1550, %v1553
    %vm1555 = vweird.f32 %v1549
    %vm1556 = vweird.f32 %v1550
    %vm1557 = vmor %vm1555, %vm1556
    %v1558 = vsel %vm1557, %v1550, %v1554
    %v1559 = vand.u32 2147483647, %v1549
    %vm1560 = vcmp.eq.f32.partialorder %v1559, 8.507059e+37
    %v1561 = vand.u32 %v1549, 2147483648
    %v1562 = vor.u32 1.1754944e-38, %v1561
    %v1563 = vsel %vm1560, %v1562, %v1558
    %v1564 = vmul.f32 1.0, %v1563
    %v1565 = vxor.u32 %v1543, 2147483648
    %v1566 = vmul.f32 %v1565, 1.442695
    %v1567 = vpow.pop %v1566
    %v1568 = vadd.f32 %v1567, 1.0
    %v1569 = vrcp.pop %v1568
    %v1570 = vmul.f32 %v1568, %v1569
    %v1571 = vsub.f32 1.0, %v1570
    %v1572 = vmul.f32 %v1569, %v1571
    %v1573 = vadd.f32 %v1569, %v1572
    %vm1574 = vweird.f32 %v1568
    %vm1575 = vweird.f32 %v1569
    %vm1576 = vmor %vm1574, %vm1575
    %v1577 = vsel %vm1576, %v1569, %v1573
    %v1578 = vand.u32 2147483647, %v1568
    %vm1579 = vcmp.eq.f32.partialorder %v1578, 8.507059e+37
    %v1580 = vand.u32 %v1568, 2147483648
    %v1581 = vor.u32 1.1754944e-38, %v1580
    %v1582 = vsel %vm1579, %v1581, %v1577
    %v1583 = vmul.f32 1.0, %v1582
    %v1584 = vtanh.pop %v1544
    %v1585 = vxor.u32 %v1545, 2147483648
    %v1586 = vmul.f32 %v1585, 1.442695
    %v1587 = vpow.pop %v1586
    %v1588 = vadd.f32 %v1587, 1.0
    %v1589 = vrcp.pop %v1588
    %v1590 = vmul.f32 %v1588, %v1589
    %v1591 = vsub.f32 1.0, %v1590
    %v1592 = vmul.f32 %v1589, %v1591
    %v1593 = vadd.f32 %v1589, %v1592
    %vm1594 = vweird.f32 %v1588
    %vm1595 = vweird.f32 %v1589
    %vm1596 = vmor %vm1594, %vm1595
    %v1597 = vsel %vm1596, %v1589, %v1593
    %v1598 = vand.u32 2147483647, %v1588
    %vm1599 = vcmp.eq.f32.partialorder %v1598, 8.507059e+37
    %v1600 = vand.u32 %v1588, 2147483648
    %v1601 = vor.u32 1.1754944e-38, %v1600
    %v1602 = vsel %vm1599, %v1601, %v1597
    %v1603 = vmul.f32 1.0, %v1602
    %v1604 = vmul.f32 %v1583, %v1454
    %v1605 = vmul.f32 %v1564, %v1584
    %v1606 = vadd.f32 %v1604, %v1605
    %v1607 = vtanh.pop %v1606
    %v1608 = vmul.f32 %v1603, %v1607
    %1609 = vst [vmem:[#allocation2 + $0x38] sm:$0xff] %v1608
    %1610 = vst [vmem:[%s5] sm:$0xff] %v1608
    %1611 = vst [vmem:[%s6] sm:$0xff] %v1606
    %s1612 = scalar_lea.vmem [#allocation4], 512
    %v1613 = vld [vmem:[%s1612] sm:$0xff]
    %v1614 = vld [vmem:[%s1612 + $0x8] sm:$0xff]
    %v1615 = vld [vmem:[%s1612 + $0x10] sm:$0xff]
    %v1616 = vld [vmem:[%s1612 + $0x18] sm:$0xff]
    %v1617 = vld [vmem:[%s1612 + $0x20] sm:$0xff]
    %v1618 = vld [vmem:[%s1612 + $0x28] sm:$0xff]
    %v1619 = vld [vmem:[%s1612 + $0x30] sm:$0xff]
    %v1620 = vld [vmem:[%s1612 + $0x38] sm:$0xff]
    %v1621 = vld [vmem:[%s1612 + $0x40] sm:$0xff]
    %v1622 = vld [vmem:[%s1612 + $0x48] sm:$0xff]
    %v1623 = vld [vmem:[%s1612 + $0x50] sm:$0xff]
    %v1624 = vld [vmem:[%s1612 + $0x58] sm:$0xff]
    %v1625 = vld [vmem:[%s1612 + $0x60] sm:$0xff]
    %v1626 = vld [vmem:[%s1612 + $0x68] sm:$0xff]
    %v1627 = vld [vmem:[%s1612 + $0x70] sm:$0xff]
    %v1628 = vld [vmem:[%s1612 + $0x78] sm:$0xff]
    %v1629 = vld [vmem:[%s1612 + $0x80] sm:$0xff]
    %v1630 = vld [vmem:[%s1612 + $0x88] sm:$0xff]
    %v1631 = vld [vmem:[%s1612 + $0x90] sm:$0xff]
    %v1632 = vld [vmem:[%s1612 + $0x98] sm:$0xff]
    %v1633 = vld [vmem:[%s1612 + $0xa0] sm:$0xff]
    %v1634 = vld [vmem:[%s1612 + $0xa8] sm:$0xff]
    %v1635 = vld [vmem:[%s1612 + $0xb0] sm:$0xff]
    %v1636 = vld [vmem:[%s1612 + $0xb8] sm:$0xff]
    %v1637 = vld [vmem:[%s1612 + $0xc0] sm:$0xff]
    %v1638 = vld [vmem:[%s1612 + $0xc8] sm:$0xff]
    %v1639 = vld [vmem:[%s1612 + $0xd0] sm:$0xff]
    %v1640 = vld [vmem:[%s1612 + $0xd8] sm:$0xff]
    %v1641 = vld [vmem:[%s1612 + $0xe0] sm:$0xff]
    %v1642 = vld [vmem:[%s1612 + $0xe8] sm:$0xff]
    %v1643 = vld [vmem:[%s1612 + $0xf0] sm:$0xff]
    %v1644 = vld [vmem:[%s1612 + $0xf8] sm:$0xff]
    %v1645 = vld [vmem:[%s1612 + $0x100] sm:$0xff]
    %v1646 = vld [vmem:[%s1612 + $0x108] sm:$0xff]
    %v1647 = vld [vmem:[%s1612 + $0x110] sm:$0xff]
    %v1648 = vld [vmem:[%s1612 + $0x118] sm:$0xff]
    %v1649 = vld [vmem:[%s1612 + $0x120] sm:$0xff]
    %v1650 = vld [vmem:[%s1612 + $0x128] sm:$0xff]
    %v1651 = vld [vmem:[%s1612 + $0x130] sm:$0xff]
    %v1652 = vld [vmem:[%s1612 + $0x138] sm:$0xff]
    %v1653 = vld [vmem:[%s1612 + $0x140] sm:$0xff]
    %v1654 = vld [vmem:[%s1612 + $0x148] sm:$0xff]
    %v1655 = vld [vmem:[%s1612 + $0x150] sm:$0xff]
    %v1656 = vld [vmem:[%s1612 + $0x158] sm:$0xff]
    %v1657 = vld [vmem:[%s1612 + $0x160] sm:$0xff]
    %v1658 = vld [vmem:[%s1612 + $0x168] sm:$0xff]
    %v1659 = vld [vmem:[%s1612 + $0x170] sm:$0xff]
    %v1660 = vld [vmem:[%s1612 + $0x178] sm:$0xff]
    %v1661 = vld [vmem:[%s1612 + $0x180] sm:$0xff]
    %v1662 = vld [vmem:[%s1612 + $0x188] sm:$0xff]
    %v1663 = vld [vmem:[%s1612 + $0x190] sm:$0xff]
    %v1664 = vld [vmem:[%s1612 + $0x198] sm:$0xff]
    %v1665 = vld [vmem:[%s1612 + $0x1a0] sm:$0xff]
    %v1666 = vld [vmem:[%s1612 + $0x1a8] sm:$0xff]
    %v1667 = vld [vmem:[%s1612 + $0x1b0] sm:$0xff]
    %v1668 = vld [vmem:[%s1612 + $0x1b8] sm:$0xff]
    %v1669 = vld [vmem:[%s1612 + $0x1c0] sm:$0xff]
    %v1670 = vld [vmem:[%s1612 + $0x1c8] sm:$0xff]
    %v1671 = vld [vmem:[%s1612 + $0x1d0] sm:$0xff]
    %v1672 = vld [vmem:[%s1612 + $0x1d8] sm:$0xff]
    %v1673 = vld [vmem:[%s1612 + $0x1e0] sm:$0xff]
    %v1674 = vld [vmem:[%s1612 + $0x1e8] sm:$0xff]
    %v1675 = vld [vmem:[%s1612 + $0x1f0] sm:$0xff]
    %v1676 = vld [vmem:[%s1612 + $0x1f8] sm:$0xff]
    %s1677 = scalar_lea.vmem [#allocation6], 512
    %v1678 = vld [vmem:[%s1677] sm:$0xff]
    %v1679 = vld [vmem:[%s1677 + $0x8] sm:$0xff]
    %v1680 = vld [vmem:[%s1677 + $0x10] sm:$0xff]
    %v1681 = vld [vmem:[%s1677 + $0x18] sm:$0xff]
    %v1682 = vld [vmem:[%s1677 + $0x20] sm:$0xff]
    %v1683 = vld [vmem:[%s1677 + $0x28] sm:$0xff]
    %v1684 = vld [vmem:[%s1677 + $0x30] sm:$0xff]
    %v1685 = vld [vmem:[%s1677 + $0x38] sm:$0xff]
    %v1686 = vld [vmem:[%s1677 + $0x40] sm:$0xff]
    %v1687 = vld [vmem:[%s1677 + $0x48] sm:$0xff]
    %v1688 = vld [vmem:[%s1677 + $0x50] sm:$0xff]
    %v1689 = vld [vmem:[%s1677 + $0x58] sm:$0xff]
    %v1690 = vld [vmem:[%s1677 + $0x60] sm:$0xff]
    %v1691 = vld [vmem:[%s1677 + $0x68] sm:$0xff]
    %v1692 = vld [vmem:[%s1677 + $0x70] sm:$0xff]
    %v1693 = vld [vmem:[%s1677 + $0x78] sm:$0xff]
    %v1694 = vld [vmem:[%s1677 + $0x80] sm:$0xff]
    %v1695 = vld [vmem:[%s1677 + $0x88] sm:$0xff]
    %v1696 = vld [vmem:[%s1677 + $0x90] sm:$0xff]
    %v1697 = vld [vmem:[%s1677 + $0x98] sm:$0xff]
    %v1698 = vld [vmem:[%s1677 + $0xa0] sm:$0xff]
    %v1699 = vld [vmem:[%s1677 + $0xa8] sm:$0xff]
    %v1700 = vld [vmem:[%s1677 + $0xb0] sm:$0xff]
    %v1701 = vld [vmem:[%s1677 + $0xb8] sm:$0xff]
    %v1702 = vld [vmem:[%s1677 + $0xc0] sm:$0xff]
    %v1703 = vld [vmem:[%s1677 + $0xc8] sm:$0xff]
    %v1704 = vld [vmem:[%s1677 + $0xd0] sm:$0xff]
    %v1705 = vld [vmem:[%s1677 + $0xd8] sm:$0xff]
    %v1706 = vld [vmem:[%s1677 + $0xe0] sm:$0xff]
    %v1707 = vld [vmem:[%s1677 + $0xe8] sm:$0xff]
    %v1708 = vld [vmem:[%s1677 + $0xf0] sm:$0xff]
    %v1709 = vld [vmem:[%s1677 + $0xf8] sm:$0xff]
    %v1710 = vld [vmem:[%s1677 + $0x100] sm:$0xff]
    %v1711 = vld [vmem:[%s1677 + $0x108] sm:$0xff]
    %v1712 = vld [vmem:[%s1677 + $0x110] sm:$0xff]
    %v1713 = vld [vmem:[%s1677 + $0x118] sm:$0xff]
    %v1714 = vld [vmem:[%s1677 + $0x120] sm:$0xff]
    %v1715 = vld [vmem:[%s1677 + $0x128] sm:$0xff]
    %v1716 = vld [vmem:[%s1677 + $0x130] sm:$0xff]
    %v1717 = vld [vmem:[%s1677 + $0x138] sm:$0xff]
    %v1718 = vld [vmem:[%s1677 + $0x140] sm:$0xff]
    %v1719 = vld [vmem:[%s1677 + $0x148] sm:$0xff]
    %v1720 = vld [vmem:[%s1677 + $0x150] sm:$0xff]
    %v1721 = vld [vmem:[%s1677 + $0x158] sm:$0xff]
    %v1722 = vld [vmem:[%s1677 + $0x160] sm:$0xff]
    %v1723 = vld [vmem:[%s1677 + $0x168] sm:$0xff]
    %v1724 = vld [vmem:[%s1677 + $0x170] sm:$0xff]
    %v1725 = vld [vmem:[%s1677 + $0x178] sm:$0xff]
    %v1726 = vld [vmem:[%s1677 + $0x180] sm:$0xff]
    %v1727 = vld [vmem:[%s1677 + $0x188] sm:$0xff]
    %v1728 = vld [vmem:[%s1677 + $0x190] sm:$0xff]
    %v1729 = vld [vmem:[%s1677 + $0x198] sm:$0xff]
    %v1730 = vld [vmem:[%s1677 + $0x1a0] sm:$0xff]
    %v1731 = vld [vmem:[%s1677 + $0x1a8] sm:$0xff]
    %v1732 = vld [vmem:[%s1677 + $0x1b0] sm:$0xff]
    %v1733 = vld [vmem:[%s1677 + $0x1b8] sm:$0xff]
    %v1734 = vld [vmem:[%s1677 + $0x1c0] sm:$0xff]
    %v1735 = vld [vmem:[%s1677 + $0x1c8] sm:$0xff]
    %v1736 = vld [vmem:[%s1677 + $0x1d0] sm:$0xff]
    %v1737 = vld [vmem:[%s1677 + $0x1d8] sm:$0xff]
    %v1738 = vld [vmem:[%s1677 + $0x1e0] sm:$0xff]
    %v1739 = vld [vmem:[%s1677 + $0x1e8] sm:$0xff]
    %v1740 = vld [vmem:[%s1677 + $0x1f0] sm:$0xff]
    %v1741 = vld [vmem:[%s1677 + $0x1f8] sm:$0xff]
    %s1742 = scalar_lea.vmem %s3, 4
    %v1743 = vld [vmem:[%s1742] sm:$0xf]
    %v1744 = vld [vmem:[#allocation2] sm:$0xff]
    %v1745 = vld [vmem:[#allocation2 + $0x8] sm:$0xff]
    %v1746 = vld [vmem:[#allocation2 + $0x10] sm:$0xff]
    %v1747 = vld [vmem:[#allocation2 + $0x18] sm:$0xff]
    %v1748 = vld [vmem:[#allocation2 + $0x20] sm:$0xff]
    %v1749 = vld [vmem:[#allocation2 + $0x28] sm:$0xff]
    %v1750 = vld [vmem:[#allocation2 + $0x30] sm:$0xff]
    %v1751 = vld [vmem:[#allocation2 + $0x38] sm:$0xff]
    %v1753 = vperm.slane %v1743, 0
    %v1754 = vperm.slane %v1743, 1
    %v1755 = vperm.slane %v1743, 2
    %v1756 = vperm.slane %v1743, 3
    %1761 = vmatpush.msra.mxu0 %v1673
    %1762 = vmatpush.msra.mxu0 %v1669
    %1763 = vmatpush.msra.mxu0 %v1665
    %1764 = vmatpush.msra.mxu0 %v1661
    %1765 = vmatpush.msra.mxu0 %v1657
    %1766 = vmatpush.msra.mxu0 %v1653
    %1767 = vmatpush.msra.mxu0 %v1649
    %1768 = vmatpush.msra.mxu0 %v1645
    %1769 = vmatpush.msra.mxu0 %v1641
    %1770 = vmatpush.msra.mxu0 %v1637
    %1771 = vmatpush.msra.mxu0 %v1633
    %1772 = vmatpush.msra.mxu0 %v1629
    %1773 = vmatpush.msra.mxu0 %v1625
    %1774 = vmatpush.msra.mxu0 %v1621
    %1775 = vmatpush.msra.mxu0 %v1617
    %1776 = vmatpush.msra.mxu0 %v1613
    %1777 = vmatmul.f32.gmra.mxu0 %v1744
    %v1778 = vpop.f32.mrf.mxu0
    %v1779 = vadd.f32 %v1753, %v1778
    %1780 = vmatmul.f32.gmra.mxu0 %v1745
    %v1781 = vpop.f32.mrf.mxu0
    %v1782 = vadd.f32 %v1753, %v1781
    %1783 = vmatmul.f32.gmra.mxu0 %v1746
    %v1784 = vpop.f32.mrf.mxu0
    %v1785 = vadd.f32 %v1753, %v1784
    %1786 = vmatmul.f32.gmra.mxu0 %v1747
    %v1787 = vpop.f32.mrf.mxu0
    %v1788 = vadd.f32 %v1753, %v1787
    %1789 = vmatmul.f32.gmra.mxu0 %v1748
    %v1790 = vpop.f32.mrf.mxu0
    %v1791 = vadd.f32 %v1753, %v1790
    %1792 = vmatmul.f32.gmra.mxu0 %v1749
    %v1793 = vpop.f32.mrf.mxu0
    %v1794 = vadd.f32 %v1753, %v1793
    %1795 = vmatmul.f32.gmra.mxu0 %v1750
    %v1796 = vpop.f32.mrf.mxu0
    %v1797 = vadd.f32 %v1753, %v1796
    %1798 = vmatmul.f32.gmra.mxu0 %v1751
    %v1799 = vpop.f32.mrf.mxu0
    %v1800 = vadd.f32 %v1753, %v1799
    %1801 = vdwg.mxu0
    %1802 = vmatpush.msra.mxu0 %v1674
    %1803 = vmatpush.msra.mxu0 %v1670
    %1804 = vmatpush.msra.mxu0 %v1666
    %1805 = vmatpush.msra.mxu0 %v1662
    %1806 = vmatpush.msra.mxu0 %v1658
    %1807 = vmatpush.msra.mxu0 %v1654
    %1808 = vmatpush.msra.mxu0 %v1650
    %1809 = vmatpush.msra.mxu0 %v1646
    %1810 = vmatpush.msra.mxu0 %v1642
    %1811 = vmatpush.msra.mxu0 %v1638
    %1812 = vmatpush.msra.mxu0 %v1634
    %1813 = vmatpush.msra.mxu0 %v1630
    %1814 = vmatpush.msra.mxu0 %v1626
    %1815 = vmatpush.msra.mxu0 %v1622
    %1816 = vmatpush.msra.mxu0 %v1618
    %1817 = vmatpush.msra.mxu0 %v1614
    %1818 = vmatmul.f32.gmra.mxu0 %v1744
    %v1819 = vpop.f32.mrf.mxu0
    %v1820 = vadd.f32 %v1754, %v1819
    %1821 = vmatmul.f32.gmra.mxu0 %v1745
    %v1822 = vpop.f32.mrf.mxu0
    %v1823 = vadd.f32 %v1754, %v1822
    %1824 = vmatmul.f32.gmra.mxu0 %v1746
    %v1825 = vpop.f32.mrf.mxu0
    %v1826 = vadd.f32 %v1754, %v1825
    %1827 = vmatmul.f32.gmra.mxu0 %v1747
    %v1828 = vpop.f32.mrf.mxu0
    %v1829 = vadd.f32 %v1754, %v1828
    %1830 = vmatmul.f32.gmra.mxu0 %v1748
    %v1831 = vpop.f32.mrf.mxu0
    %v1832 = vadd.f32 %v1754, %v1831
    %1833 = vmatmul.f32.gmra.mxu0 %v1749
    %v1834 = vpop.f32.mrf.mxu0
    %v1835 = vadd.f32 %v1754, %v1834
    %1836 = vmatmul.f32.gmra.mxu0 %v1750
    %v1837 = vpop.f32.mrf.mxu0
    %v1838 = vadd.f32 %v1754, %v1837
    %1839 = vmatmul.f32.gmra.mxu0 %v1751
    %v1840 = vpop.f32.mrf.mxu0
    %v1841 = vadd.f32 %v1754, %v1840
    %1842 = vdwg.mxu0
    %1843 = vmatpush.msra.mxu0 %v1675
    %1844 = vmatpush.msra.mxu0 %v1671
    %1845 = vmatpush.msra.mxu0 %v1667
    %1846 = vmatpush.msra.mxu0 %v1663
    %1847 = vmatpush.msra.mxu0 %v1659
    %1848 = vmatpush.msra.mxu0 %v1655
    %1849 = vmatpush.msra.mxu0 %v1651
    %1850 = vmatpush.msra.mxu0 %v1647
    %1851 = vmatpush.msra.mxu0 %v1643
    %1852 = vmatpush.msra.mxu0 %v1639
    %1853 = vmatpush.msra.mxu0 %v1635
    %1854 = vmatpush.msra.mxu0 %v1631
    %1855 = vmatpush.msra.mxu0 %v1627
    %1856 = vmatpush.msra.mxu0 %v1623
    %1857 = vmatpush.msra.mxu0 %v1619
    %1858 = vmatpush.msra.mxu0 %v1615
    %1859 = vmatmul.f32.gmra.mxu0 %v1744
    %v1860 = vpop.f32.mrf.mxu0
    %v1861 = vadd.f32 %v1755, %v1860
    %1862 = vmatmul.f32.gmra.mxu0 %v1745
    %v1863 = vpop.f32.mrf.mxu0
    %v1864 = vadd.f32 %v1755, %v1863
    %1865 = vmatmul.f32.gmra.mxu0 %v1746
    %v1866 = vpop.f32.mrf.mxu0
    %v1867 = vadd.f32 %v1755, %v1866
    %1868 = vmatmul.f32.gmra.mxu0 %v1747
    %v1869 = vpop.f32.mrf.mxu0
    %v1870 = vadd.f32 %v1755, %v1869
    %1871 = vmatmul.f32.gmra.mxu0 %v1748
    %v1872 = vpop.f32.mrf.mxu0
    %v1873 = vadd.f32 %v1755, %v1872
    %1874 = vmatmul.f32.gmra.mxu0 %v1749
    %v1875 = vpop.f32.mrf.mxu0
    %v1876 = vadd.f32 %v1755, %v1875
    %1877 = vmatmul.f32.gmra.mxu0 %v1750
    %v1878 = vpop.f32.mrf.mxu0
    %v1879 = vadd.f32 %v1755, %v1878
    %1880 = vmatmul.f32.gmra.mxu0 %v1751
    %v1881 = vpop.f32.mrf.mxu0
    %v1882 = vadd.f32 %v1755, %v1881
    %1883 = vdwg.mxu0
    %1884 = vmatpush.msra.mxu0 %v1676
    %1885 = vmatpush.msra.mxu0 %v1672
    %1886 = vmatpush.msra.mxu0 %v1668
    %1887 = vmatpush.msra.mxu0 %v1664
    %1888 = vmatpush.msra.mxu0 %v1660
    %1889 = vmatpush.msra.mxu0 %v1656
    %1890 = vmatpush.msra.mxu0 %v1652
    %1891 = vmatpush.msra.mxu0 %v1648
    %1892 = vmatpush.msra.mxu0 %v1644
    %1893 = vmatpush.msra.mxu0 %v1640
    %1894 = vmatpush.msra.mxu0 %v1636
    %1895 = vmatpush.msra.mxu0 %v1632
    %1896 = vmatpush.msra.mxu0 %v1628
    %1897 = vmatpush.msra.mxu0 %v1624
    %1898 = vmatpush.msra.mxu0 %v1620
    %1899 = vmatpush.msra.mxu0 %v1616
    %1900 = vmatmul.f32.gmra.mxu0 %v1744
    %v1901 = vpop.f32.mrf.mxu0
    %v1902 = vadd.f32 %v1756, %v1901
    %1903 = vmatmul.f32.gmra.mxu0 %v1745
    %v1904 = vpop.f32.mrf.mxu0
    %v1905 = vadd.f32 %v1756, %v1904
    %1906 = vmatmul.f32.gmra.mxu0 %v1746
    %v1907 = vpop.f32.mrf.mxu0
    %v1908 = vadd.f32 %v1756, %v1907
    %1909 = vmatmul.f32.gmra.mxu0 %v1747
    %v1910 = vpop.f32.mrf.mxu0
    %v1911 = vadd.f32 %v1756, %v1910
    %1912 = vmatmul.f32.gmra.mxu0 %v1748
    %v1913 = vpop.f32.mrf.mxu0
    %v1914 = vadd.f32 %v1756, %v1913
    %1915 = vmatmul.f32.gmra.mxu0 %v1749
    %v1916 = vpop.f32.mrf.mxu0
    %v1917 = vadd.f32 %v1756, %v1916
    %1918 = vmatmul.f32.gmra.mxu0 %v1750
    %v1919 = vpop.f32.mrf.mxu0
    %v1920 = vadd.f32 %v1756, %v1919
    %1921 = vmatmul.f32.gmra.mxu0 %v1751
    %v1922 = vpop.f32.mrf.mxu0
    %v1923 = vadd.f32 %v1756, %v1922
    %1924 = vdwg.mxu0
    %1925 = vst [vmem:[#allocation3] sm:$0xff] %v1779
    %1926 = vst [vmem:[#allocation3 + $0x8] sm:$0xff] %v1820
    %1927 = vst [vmem:[#allocation3 + $0x10] sm:$0xff] %v1861
    %1928 = vst [vmem:[#allocation3 + $0x18] sm:$0xff] %v1902
    %1929 = vst [vmem:[#allocation3 + $0x20] sm:$0xff] %v1782
    %1930 = vst [vmem:[#allocation3 + $0x28] sm:$0xff] %v1823
    %1931 = vst [vmem:[#allocation3 + $0x30] sm:$0xff] %v1864
    %1932 = vst [vmem:[#allocation3 + $0x38] sm:$0xff] %v1905
    %1933 = vst [vmem:[#allocation3 + $0x40] sm:$0xff] %v1785
    %1934 = vst [vmem:[#allocation3 + $0x48] sm:$0xff] %v1826
    %1935 = vst [vmem:[#allocation3 + $0x50] sm:$0xff] %v1867
    %1936 = vst [vmem:[#allocation3 + $0x58] sm:$0xff] %v1908
    %1937 = vst [vmem:[#allocation3 + $0x60] sm:$0xff] %v1788
    %1938 = vst [vmem:[#allocation3 + $0x68] sm:$0xff] %v1829
    %1939 = vst [vmem:[#allocation3 + $0x70] sm:$0xff] %v1870
    %1940 = vst [vmem:[#allocation3 + $0x78] sm:$0xff] %v1911
    %1941 = vst [vmem:[#allocation3 + $0x80] sm:$0xff] %v1791
    %1942 = vst [vmem:[#allocation3 + $0x88] sm:$0xff] %v1832
    %1943 = vst [vmem:[#allocation3 + $0x90] sm:$0xff] %v1873
    %1944 = vst [vmem:[#allocation3 + $0x98] sm:$0xff] %v1914
    %1945 = vst [vmem:[#allocation3 + $0xa0] sm:$0xff] %v1794
    %1946 = vst [vmem:[#allocation3 + $0xa8] sm:$0xff] %v1835
    %1947 = vst [vmem:[#allocation3 + $0xb0] sm:$0xff] %v1876
    %1948 = vst [vmem:[#allocation3 + $0xb8] sm:$0xff] %v1917
    %1949 = vst [vmem:[#allocation3 + $0xc0] sm:$0xff] %v1797
    %1950 = vst [vmem:[#allocation3 + $0xc8] sm:$0xff] %v1838
    %1951 = vst [vmem:[#allocation3 + $0xd0] sm:$0xff] %v1879
    %1952 = vst [vmem:[#allocation3 + $0xd8] sm:$0xff] %v1920
    %1953 = vst [vmem:[#allocation3 + $0xe0] sm:$0xff] %v1800
    %1954 = vst [vmem:[#allocation3 + $0xe8] sm:$0xff] %v1841
    %1955 = vst [vmem:[#allocation3 + $0xf0] sm:$0xff] %v1882
    %1956 = vst [vmem:[#allocation3 + $0xf8] sm:$0xff] %v1923
    %v1957 = vld [vmem:[#allocation3] sm:$0xff]
    %v1958 = vld [vmem:[#allocation3 + $0x8] sm:$0xff]
    %v1959 = vld [vmem:[#allocation3 + $0x10] sm:$0xff]
    %v1960 = vld [vmem:[#allocation3 + $0x18] sm:$0xff]
    %1961 = vmatpush.msra.mxu0 %v1738
    %1962 = vmatpush.msra.mxu0 %v1734
    %1963 = vmatpush.msra.mxu0 %v1730
    %1964 = vmatpush.msra.mxu0 %v1726
    %1965 = vmatpush.msra.mxu0 %v1722
    %1966 = vmatpush.msra.mxu0 %v1718
    %1967 = vmatpush.msra.mxu0 %v1714
    %1968 = vmatpush.msra.mxu0 %v1710
    %1969 = vmatpush.msra.mxu0 %v1706
    %1970 = vmatpush.msra.mxu0 %v1702
    %1971 = vmatpush.msra.mxu0 %v1698
    %1972 = vmatpush.msra.mxu0 %v1694
    %1973 = vmatpush.msra.mxu0 %v1690
    %1974 = vmatpush.msra.mxu0 %v1686
    %1975 = vmatpush.msra.mxu0 %v1682
    %1976 = vmatpush.msra.mxu0 %v1678
    %1977 = vmatmul.f32.gmra.mxu0 0.0
    %v1978 = vpop.f32.mrf.mxu0
    %v1979 = vadd.f32 0.0, %v1978
    %1980 = vdwg.mxu0
    %1981 = vmatpush.msra.mxu0 %v1739
    %1982 = vmatpush.msra.mxu0 %v1735
    %1983 = vmatpush.msra.mxu0 %v1731
    %1984 = vmatpush.msra.mxu0 %v1727
    %1985 = vmatpush.msra.mxu0 %v1723
    %1986 = vmatpush.msra.mxu0 %v1719
    %1987 = vmatpush.msra.mxu0 %v1715
    %1988 = vmatpush.msra.mxu0 %v1711
    %1989 = vmatpush.msra.mxu0 %v1707
    %1990 = vmatpush.msra.mxu0 %v1703
    %1991 = vmatpush.msra.mxu0 %v1699
    %1992 = vmatpush.msra.mxu0 %v1695
    %1993 = vmatpush.msra.mxu0 %v1691
    %1994 = vmatpush.msra.mxu0 %v1687
    %1995 = vmatpush.msra.mxu0 %v1683
    %1996 = vmatpush.msra.mxu0 %v1679
    %1997 = vmatmul.f32.gmra.mxu0 0.0
    %v1998 = vpop.f32.mrf.mxu0
    %v1999 = vadd.f32 0.0, %v1998
    %2000 = vdwg.mxu0
    %2001 = vmatpush.msra.mxu0 %v1740
    %2002 = vmatpush.msra.mxu0 %v1736
    %2003 = vmatpush.msra.mxu0 %v1732
    %2004 = vmatpush.msra.mxu0 %v1728
    %2005 = vmatpush.msra.mxu0 %v1724
    %2006 = vmatpush.msra.mxu0 %v1720
    %2007 = vmatpush.msra.mxu0 %v1716
    %2008 = vmatpush.msra.mxu0 %v1712
    %2009 = vmatpush.msra.mxu0 %v1708
    %2010 = vmatpush.msra.mxu0 %v1704
    %2011 = vmatpush.msra.mxu0 %v1700
    %2012 = vmatpush.msra.mxu0 %v1696
    %2013 = vmatpush.msra.mxu0 %v1692
    %2014 = vmatpush.msra.mxu0 %v1688
    %2015 = vmatpush.msra.mxu0 %v1684
    %2016 = vmatpush.msra.mxu0 %v1680
    %2017 = vmatmul.f32.gmra.mxu0 0.0
    %v2018 = vpop.f32.mrf.mxu0
    %v2019 = vadd.f32 0.0, %v2018
    %2020 = vdwg.mxu0
    %2021 = vmatpush.msra.mxu0 %v1741
    %2022 = vmatpush.msra.mxu0 %v1737
    %2023 = vmatpush.msra.mxu0 %v1733
    %2024 = vmatpush.msra.mxu0 %v1729
    %2025 = vmatpush.msra.mxu0 %v1725
    %2026 = vmatpush.msra.mxu0 %v1721
    %2027 = vmatpush.msra.mxu0 %v1717
    %2028 = vmatpush.msra.mxu0 %v1713
    %2029 = vmatpush.msra.mxu0 %v1709
    %2030 = vmatpush.msra.mxu0 %v1705
    %2031 = vmatpush.msra.mxu0 %v1701
    %2032 = vmatpush.msra.mxu0 %v1697
    %2033 = vmatpush.msra.mxu0 %v1693
    %2034 = vmatpush.msra.mxu0 %v1689
    %2035 = vmatpush.msra.mxu0 %v1685
    %2036 = vmatpush.msra.mxu0 %v1681
    %2037 = vmatmul.f32.gmra.mxu0 0.0
    %v2038 = vpop.f32.mrf.mxu0
    %v2039 = vadd.f32 0.0, %v2038
    %2040 = vdwg.mxu0
    %v2041 = vadd.f32 %v1957, %v1979
    %v2042 = vadd.f32 %v1958, %v1999
    %v2043 = vadd.f32 %v1959, %v2019
    %v2044 = vadd.f32 %v1960, %v2039
    %v2045 = vxor.u32 %v2041, 2147483648
    %v2046 = vmul.f32 %v2045, 1.442695
    %v2047 = vpow.pop %v2046
    %v2048 = vadd.f32 %v2047, 1.0
    %v2049 = vrcp.pop %v2048
    %v2050 = vmul.f32 %v2048, %v2049
    %v2051 = vsub.f32 1.0, %v2050
    %v2052 = vmul.f32 %v2049, %v2051
    %v2053 = vadd.f32 %v2049, %v2052
    %vm2054 = vweird.f32 %v2048
    %vm2055 = vweird.f32 %v2049
    %vm2056 = vmor %vm2054, %vm2055
    %v2057 = vsel %vm2056, %v2049, %v2053
    %v2058 = vand.u32 2147483647, %v2048
    %vm2059 = vcmp.eq.f32.partialorder %v2058, 8.507059e+37
    %v2060 = vand.u32 %v2048, 2147483648
    %v2061 = vor.u32 1.1754944e-38, %v2060
    %v2062 = vsel %vm2059, %v2061, %v2057
    %v2063 = vmul.f32 1.0, %v2062
    %v2064 = vxor.u32 %v2042, 2147483648
    %v2065 = vmul.f32 %v2064, 1.442695
    %v2066 = vpow.pop %v2065
    %v2067 = vadd.f32 %v2066, 1.0
    %v2068 = vrcp.pop %v2067
    %v2069 = vmul.f32 %v2067, %v2068
    %v2070 = vsub.f32 1.0, %v2069
    %v2071 = vmul.f32 %v2068, %v2070
    %v2072 = vadd.f32 %v2068, %v2071
    %vm2073 = vweird.f32 %v2067
    %vm2074 = vweird.f32 %v2068
    %vm2075 = vmor %vm2073, %vm2074
    %v2076 = vsel %vm2075, %v2068, %v2072
    %v2077 = vand.u32 2147483647, %v2067
    %vm2078 = vcmp.eq.f32.partialorder %v2077, 8.507059e+37
    %v2079 = vand.u32 %v2067, 2147483648
    %v2080 = vor.u32 1.1754944e-38, %v2079
    %v2081 = vsel %vm2078, %v2080, %v2076
    %v2082 = vmul.f32 1.0, %v2081
    %v2083 = vtanh.pop %v2043
    %v2084 = vxor.u32 %v2044, 2147483648
    %v2085 = vmul.f32 %v2084, 1.442695
    %v2086 = vpow.pop %v2085
    %v2087 = vadd.f32 %v2086, 1.0
    %v2088 = vrcp.pop %v2087
    %v2089 = vmul.f32 %v2087, %v2088
    %v2090 = vsub.f32 1.0, %v2089
    %v2091 = vmul.f32 %v2088, %v2090
    %v2092 = vadd.f32 %v2088, %v2091
    %vm2093 = vweird.f32 %v2087
    %vm2094 = vweird.f32 %v2088
    %vm2095 = vmor %vm2093, %vm2094
    %v2096 = vsel %vm2095, %v2088, %v2092
    %v2097 = vand.u32 2147483647, %v2087
    %vm2098 = vcmp.eq.f32.partialorder %v2097, 8.507059e+37
    %v2099 = vand.u32 %v2087, 2147483648
    %v2100 = vor.u32 1.1754944e-38, %v2099
    %v2101 = vsel %vm2098, %v2100, %v2096
    %v2102 = vmul.f32 1.0, %v2101
    %v2103 = vmul.f32 %v2082, 0.0
    %v2104 = vmul.f32 %v2063, %v2083
    %v2105 = vadd.f32 %v2103, %v2104
    %v2106 = vtanh.pop %v2105
    %v2107 = vmul.f32 %v2102, %v2106
    %2108 = vst [vmem:[%s4] sm:$0xff] %v2107
    %v2109 = vld [vmem:[#allocation3 + $0x20] sm:$0xff]
    %v2110 = vld [vmem:[#allocation3 + $0x28] sm:$0xff]
    %v2111 = vld [vmem:[#allocation3 + $0x30] sm:$0xff]
    %v2112 = vld [vmem:[#allocation3 + $0x38] sm:$0xff]
    %2113 = vmatpush.msra.mxu0 %v1738
    %2114 = vmatpush.msra.mxu0 %v1734
    %2115 = vmatpush.msra.mxu0 %v1730
    %2116 = vmatpush.msra.mxu0 %v1726
    %2117 = vmatpush.msra.mxu0 %v1722
    %2118 = vmatpush.msra.mxu0 %v1718
    %2119 = vmatpush.msra.mxu0 %v1714
    %2120 = vmatpush.msra.mxu0 %v1710
    %2121 = vmatpush.msra.mxu0 %v1706
    %2122 = vmatpush.msra.mxu0 %v1702
    %2123 = vmatpush.msra.mxu0 %v1698
    %2124 = vmatpush.msra.mxu0 %v1694
    %2125 = vmatpush.msra.mxu0 %v1690
    %2126 = vmatpush.msra.mxu0 %v1686
    %2127 = vmatpush.msra.mxu0 %v1682
    %2128 = vmatpush.msra.mxu0 %v1678
    %2129 = vmatmul.f32.gmra.mxu0 %v2107
    %v2130 = vpop.f32.mrf.mxu0
    %v2131 = vadd.f32 0.0, %v2130
    %2132 = vdwg.mxu0
    %2133 = vmatpush.msra.mxu0 %v1739
    %2134 = vmatpush.msra.mxu0 %v1735
    %2135 = vmatpush.msra.mxu0 %v1731
    %2136 = vmatpush.msra.mxu0 %v1727
    %2137 = vmatpush.msra.mxu0 %v1723
    %2138 = vmatpush.msra.mxu0 %v1719
    %2139 = vmatpush.msra.mxu0 %v1715
    %2140 = vmatpush.msra.mxu0 %v1711
    %2141 = vmatpush.msra.mxu0 %v1707
    %2142 = vmatpush.msra.mxu0 %v1703
    %2143 = vmatpush.msra.mxu0 %v1699
    %2144 = vmatpush.msra.mxu0 %v1695
    %2145 = vmatpush.msra.mxu0 %v1691
    %2146 = vmatpush.msra.mxu0 %v1687
    %2147 = vmatpush.msra.mxu0 %v1683
    %2148 = vmatpush.msra.mxu0 %v1679
    %2149 = vmatmul.f32.gmra.mxu0 %v2107
    %v2150 = vpop.f32.mrf.mxu0
    %v2151 = vadd.f32 0.0, %v2150
    %2152 = vdwg.mxu0
    %2153 = vmatpush.msra.mxu0 %v1740
    %2154 = vmatpush.msra.mxu0 %v1736
    %2155 = vmatpush.msra.mxu0 %v1732
    %2156 = vmatpush.msra.mxu0 %v1728
    %2157 = vmatpush.msra.mxu0 %v1724
    %2158 = vmatpush.msra.mxu0 %v1720
    %2159 = vmatpush.msra.mxu0 %v1716
    %2160 = vmatpush.msra.mxu0 %v1712
    %2161 = vmatpush.msra.mxu0 %v1708
    %2162 = vmatpush.msra.mxu0 %v1704
    %2163 = vmatpush.msra.mxu0 %v1700
    %2164 = vmatpush.msra.mxu0 %v1696
    %2165 = vmatpush.msra.mxu0 %v1692
    %2166 = vmatpush.msra.mxu0 %v1688
    %2167 = vmatpush.msra.mxu0 %v1684
    %2168 = vmatpush.msra.mxu0 %v1680
    %2169 = vmatmul.f32.gmra.mxu0 %v2107
    %v2170 = vpop.f32.mrf.mxu0
    %v2171 = vadd.f32 0.0, %v2170
    %2172 = vdwg.mxu0
    %2173 = vmatpush.msra.mxu0 %v1741
    %2174 = vmatpush.msra.mxu0 %v1737
    %2175 = vmatpush.msra.mxu0 %v1733
    %2176 = vmatpush.msra.mxu0 %v1729
    %2177 = vmatpush.msra.mxu0 %v1725
    %2178 = vmatpush.msra.mxu0 %v1721
    %2179 = vmatpush.msra.mxu0 %v1717
    %2180 = vmatpush.msra.mxu0 %v1713
    %2181 = vmatpush.msra.mxu0 %v1709
    %2182 = vmatpush.msra.mxu0 %v1705
    %2183 = vmatpush.msra.mxu0 %v1701
    %2184 = vmatpush.msra.mxu0 %v1697
    %2185 = vmatpush.msra.mxu0 %v1693
    %2186 = vmatpush.msra.mxu0 %v1689
    %2187 = vmatpush.msra.mxu0 %v1685
    %2188 = vmatpush.msra.mxu0 %v1681
    %2189 = vmatmul.f32.gmra.mxu0 %v2107
    %v2190 = vpop.f32.mrf.mxu0
    %v2191 = vadd.f32 0.0, %v2190
    %2192 = vdwg.mxu0
    %v2193 = vadd.f32 %v2109, %v2131
    %v2194 = vadd.f32 %v2110, %v2151
    %v2195 = vadd.f32 %v2111, %v2171
    %v2196 = vadd.f32 %v2112, %v2191
    %v2197 = vxor.u32 %v2193, 2147483648
    %v2198 = vmul.f32 %v2197, 1.442695
    %v2199 = vpow.pop %v2198
    %v2200 = vadd.f32 %v2199, 1.0
    %v2201 = vrcp.pop %v2200
    %v2202 = vmul.f32 %v2200, %v2201
    %v2203 = vsub.f32 1.0, %v2202
    %v2204 = vmul.f32 %v2201, %v2203
    %v2205 = vadd.f32 %v2201, %v2204
    %vm2206 = vweird.f32 %v2200
    %vm2207 = vweird.f32 %v2201
    %vm2208 = vmor %vm2206, %vm2207
    %v2209 = vsel %vm2208, %v2201, %v2205
    %v2210 = vand.u32 2147483647, %v2200
    %vm2211 = vcmp.eq.f32.partialorder %v2210, 8.507059e+37
    %v2212 = vand.u32 %v2200, 2147483648
    %v2213 = vor.u32 1.1754944e-38, %v2212
    %v2214 = vsel %vm2211, %v2213, %v2209
    %v2215 = vmul.f32 1.0, %v2214
    %v2216 = vxor.u32 %v2194, 2147483648
    %v2217 = vmul.f32 %v2216, 1.442695
    %v2218 = vpow.pop %v2217
    %v2219 = vadd.f32 %v2218, 1.0
    %v2220 = vrcp.pop %v2219
    %v2221 = vmul.f32 %v2219, %v2220
    %v2222 = vsub.f32 1.0, %v2221
    %v2223 = vmul.f32 %v2220, %v2222
    %v2224 = vadd.f32 %v2220, %v2223
    %vm2225 = vweird.f32 %v2219
    %vm2226 = vweird.f32 %v2220
    %vm2227 = vmor %vm2225, %vm2226
    %v2228 = vsel %vm2227, %v2220, %v2224
    %v2229 = vand.u32 2147483647, %v2219
    %vm2230 = vcmp.eq.f32.partialorder %v2229, 8.507059e+37
    %v2231 = vand.u32 %v2219, 2147483648
    %v2232 = vor.u32 1.1754944e-38, %v2231
    %v2233 = vsel %vm2230, %v2232, %v2228
    %v2234 = vmul.f32 1.0, %v2233
    %v2235 = vtanh.pop %v2195
    %v2236 = vxor.u32 %v2196, 2147483648
    %v2237 = vmul.f32 %v2236, 1.442695
    %v2238 = vpow.pop %v2237
    %v2239 = vadd.f32 %v2238, 1.0
    %v2240 = vrcp.pop %v2239
    %v2241 = vmul.f32 %v2239, %v2240
    %v2242 = vsub.f32 1.0, %v2241
    %v2243 = vmul.f32 %v2240, %v2242
    %v2244 = vadd.f32 %v2240, %v2243
    %vm2245 = vweird.f32 %v2239
    %vm2246 = vweird.f32 %v2240
    %vm2247 = vmor %vm2245, %vm2246
    %v2248 = vsel %vm2247, %v2240, %v2244
    %v2249 = vand.u32 2147483647, %v2239
    %vm2250 = vcmp.eq.f32.partialorder %v2249, 8.507059e+37
    %v2251 = vand.u32 %v2239, 2147483648
    %v2252 = vor.u32 1.1754944e-38, %v2251
    %v2253 = vsel %vm2250, %v2252, %v2248
    %v2254 = vmul.f32 1.0, %v2253
    %v2255 = vmul.f32 %v2234, %v2105
    %v2256 = vmul.f32 %v2215, %v2235
    %v2257 = vadd.f32 %v2255, %v2256
    %v2258 = vtanh.pop %v2257
    %v2259 = vmul.f32 %v2254, %v2258
    %2260 = vst [vmem:[%s4 + $0x8] sm:$0xff] %v2259
    %v2261 = vld [vmem:[#allocation3 + $0x40] sm:$0xff]
    %v2262 = vld [vmem:[#allocation3 + $0x48] sm:$0xff]
    %v2263 = vld [vmem:[#allocation3 + $0x50] sm:$0xff]
    %v2264 = vld [vmem:[#allocation3 + $0x58] sm:$0xff]
    %2265 = vmatpush.msra.mxu0 %v1738
    %2266 = vmatpush.msra.mxu0 %v1734
    %2267 = vmatpush.msra.mxu0 %v1730
    %2268 = vmatpush.msra.mxu0 %v1726
    %2269 = vmatpush.msra.mxu0 %v1722
    %2270 = vmatpush.msra.mxu0 %v1718
    %2271 = vmatpush.msra.mxu0 %v1714
    %2272 = vmatpush.msra.mxu0 %v1710
    %2273 = vmatpush.msra.mxu0 %v1706
    %2274 = vmatpush.msra.mxu0 %v1702
    %2275 = vmatpush.msra.mxu0 %v1698
    %2276 = vmatpush.msra.mxu0 %v1694
    %2277 = vmatpush.msra.mxu0 %v1690
    %2278 = vmatpush.msra.mxu0 %v1686
    %2279 = vmatpush.msra.mxu0 %v1682
    %2280 = vmatpush.msra.mxu0 %v1678
    %2281 = vmatmul.f32.gmra.mxu0 %v2259
    %v2282 = vpop.f32.mrf.mxu0
    %v2283 = vadd.f32 0.0, %v2282
    %2284 = vdwg.mxu0
    %2285 = vmatpush.msra.mxu0 %v1739
    %2286 = vmatpush.msra.mxu0 %v1735
    %2287 = vmatpush.msra.mxu0 %v1731
    %2288 = vmatpush.msra.mxu0 %v1727
    %2289 = vmatpush.msra.mxu0 %v1723
    %2290 = vmatpush.msra.mxu0 %v1719
    %2291 = vmatpush.msra.mxu0 %v1715
    %2292 = vmatpush.msra.mxu0 %v1711
    %2293 = vmatpush.msra.mxu0 %v1707
    %2294 = vmatpush.msra.mxu0 %v1703
    %2295 = vmatpush.msra.mxu0 %v1699
    %2296 = vmatpush.msra.mxu0 %v1695
    %2297 = vmatpush.msra.mxu0 %v1691
    %2298 = vmatpush.msra.mxu0 %v1687
    %2299 = vmatpush.msra.mxu0 %v1683
    %2300 = vmatpush.msra.mxu0 %v1679
    %2301 = vmatmul.f32.gmra.mxu0 %v2259
    %v2302 = vpop.f32.mrf.mxu0
    %v2303 = vadd.f32 0.0, %v2302
    %2304 = vdwg.mxu0
    %2305 = vmatpush.msra.mxu0 %v1740
    %2306 = vmatpush.msra.mxu0 %v1736
    %2307 = vmatpush.msra.mxu0 %v1732
    %2308 = vmatpush.msra.mxu0 %v1728
    %2309 = vmatpush.msra.mxu0 %v1724
    %2310 = vmatpush.msra.mxu0 %v1720
    %2311 = vmatpush.msra.mxu0 %v1716
    %2312 = vmatpush.msra.mxu0 %v1712
    %2313 = vmatpush.msra.mxu0 %v1708
    %2314 = vmatpush.msra.mxu0 %v1704
    %2315 = vmatpush.msra.mxu0 %v1700
    %2316 = vmatpush.msra.mxu0 %v1696
    %2317 = vmatpush.msra.mxu0 %v1692
    %2318 = vmatpush.msra.mxu0 %v1688
    %2319 = vmatpush.msra.mxu0 %v1684
    %2320 = vmatpush.msra.mxu0 %v1680
    %2321 = vmatmul.f32.gmra.mxu0 %v2259
    %v2322 = vpop.f32.mrf.mxu0
    %v2323 = vadd.f32 0.0, %v2322
    %2324 = vdwg.mxu0
    %2325 = vmatpush.msra.mxu0 %v1741
    %2326 = vmatpush.msra.mxu0 %v1737
    %2327 = vmatpush.msra.mxu0 %v1733
    %2328 = vmatpush.msra.mxu0 %v1729
    %2329 = vmatpush.msra.mxu0 %v1725
    %2330 = vmatpush.msra.mxu0 %v1721
    %2331 = vmatpush.msra.mxu0 %v1717
    %2332 = vmatpush.msra.mxu0 %v1713
    %2333 = vmatpush.msra.mxu0 %v1709
    %2334 = vmatpush.msra.mxu0 %v1705
    %2335 = vmatpush.msra.mxu0 %v1701
    %2336 = vmatpush.msra.mxu0 %v1697
    %2337 = vmatpush.msra.mxu0 %v1693
    %2338 = vmatpush.msra.mxu0 %v1689
    %2339 = vmatpush.msra.mxu0 %v1685
    %2340 = vmatpush.msra.mxu0 %v1681
    %2341 = vmatmul.f32.gmra.mxu0 %v2259
    %v2342 = vpop.f32.mrf.mxu0
    %v2343 = vadd.f32 0.0, %v2342
    %2344 = vdwg.mxu0
    %v2345 = vadd.f32 %v2261, %v2283
    %v2346 = vadd.f32 %v2262, %v2303
    %v2347 = vadd.f32 %v2263, %v2323
    %v2348 = vadd.f32 %v2264, %v2343
    %v2349 = vxor.u32 %v2345, 2147483648
    %v2350 = vmul.f32 %v2349, 1.442695
    %v2351 = vpow.pop %v2350
    %v2352 = vadd.f32 %v2351, 1.0
    %v2353 = vrcp.pop %v2352
    %v2354 = vmul.f32 %v2352, %v2353
    %v2355 = vsub.f32 1.0, %v2354
    %v2356 = vmul.f32 %v2353, %v2355
    %v2357 = vadd.f32 %v2353, %v2356
    %vm2358 = vweird.f32 %v2352
    %vm2359 = vweird.f32 %v2353
    %vm2360 = vmor %vm2358, %vm2359
    %v2361 = vsel %vm2360, %v2353, %v2357
    %v2362 = vand.u32 2147483647, %v2352
    %vm2363 = vcmp.eq.f32.partialorder %v2362, 8.507059e+37
    %v2364 = vand.u32 %v2352, 2147483648
    %v2365 = vor.u32 1.1754944e-38, %v2364
    %v2366 = vsel %vm2363, %v2365, %v2361
    %v2367 = vmul.f32 1.0, %v2366
    %v2368 = vxor.u32 %v2346, 2147483648
    %v2369 = vmul.f32 %v2368, 1.442695
    %v2370 = vpow.pop %v2369
    %v2371 = vadd.f32 %v2370, 1.0
    %v2372 = vrcp.pop %v2371
    %v2373 = vmul.f32 %v2371, %v2372
    %v2374 = vsub.f32 1.0, %v2373
    %v2375 = vmul.f32 %v2372, %v2374
    %v2376 = vadd.f32 %v2372, %v2375
    %vm2377 = vweird.f32 %v2371
    %vm2378 = vweird.f32 %v2372
    %vm2379 = vmor %vm2377, %vm2378
    %v2380 = vsel %vm2379, %v2372, %v2376
    %v2381 = vand.u32 2147483647, %v2371
    %vm2382 = vcmp.eq.f32.partialorder %v2381, 8.507059e+37
    %v2383 = vand.u32 %v2371, 2147483648
    %v2384 = vor.u32 1.1754944e-38, %v2383
    %v2385 = vsel %vm2382, %v2384, %v2380
    %v2386 = vmul.f32 1.0, %v2385
    %v2387 = vtanh.pop %v2347
    %v2388 = vxor.u32 %v2348, 2147483648
    %v2389 = vmul.f32 %v2388, 1.442695
    %v2390 = vpow.pop %v2389
    %v2391 = vadd.f32 %v2390, 1.0
    %v2392 = vrcp.pop %v2391
    %v2393 = vmul.f32 %v2391, %v2392
    %v2394 = vsub.f32 1.0, %v2393
    %v2395 = vmul.f32 %v2392, %v2394
    %v2396 = vadd.f32 %v2392, %v2395
    %vm2397 = vweird.f32 %v2391
    %vm2398 = vweird.f32 %v2392
    %vm2399 = vmor %vm2397, %vm2398
    %v2400 = vsel %vm2399, %v2392, %v2396
    %v2401 = vand.u32 2147483647, %v2391
    %vm2402 = vcmp.eq.f32.partialorder %v2401, 8.507059e+37
    %v2403 = vand.u32 %v2391, 2147483648
    %v2404 = vor.u32 1.1754944e-38, %v2403
    %v2405 = vsel %vm2402, %v2404, %v2400
    %v2406 = vmul.f32 1.0, %v2405
    %v2407 = vmul.f32 %v2386, %v2257
    %v2408 = vmul.f32 %v2367, %v2387
    %v2409 = vadd.f32 %v2407, %v2408
    %v2410 = vtanh.pop %v2409
    %v2411 = vmul.f32 %v2406, %v2410
    %2412 = vst [vmem:[%s4 + $0x10] sm:$0xff] %v2411
    %v2413 = vld [vmem:[#allocation3 + $0x60] sm:$0xff]
    %v2414 = vld [vmem:[#allocation3 + $0x68] sm:$0xff]
    %v2415 = vld [vmem:[#allocation3 + $0x70] sm:$0xff]
    %v2416 = vld [vmem:[#allocation3 + $0x78] sm:$0xff]
    %2417 = vmatpush.msra.mxu0 %v1738
    %2418 = vmatpush.msra.mxu0 %v1734
    %2419 = vmatpush.msra.mxu0 %v1730
    %2420 = vmatpush.msra.mxu0 %v1726
    %2421 = vmatpush.msra.mxu0 %v1722
    %2422 = vmatpush.msra.mxu0 %v1718
    %2423 = vmatpush.msra.mxu0 %v1714
    %2424 = vmatpush.msra.mxu0 %v1710
    %2425 = vmatpush.msra.mxu0 %v1706
    %2426 = vmatpush.msra.mxu0 %v1702
    %2427 = vmatpush.msra.mxu0 %v1698
    %2428 = vmatpush.msra.mxu0 %v1694
    %2429 = vmatpush.msra.mxu0 %v1690
    %2430 = vmatpush.msra.mxu0 %v1686
    %2431 = vmatpush.msra.mxu0 %v1682
    %2432 = vmatpush.msra.mxu0 %v1678
    %2433 = vmatmul.f32.gmra.mxu0 %v2411
    %v2434 = vpop.f32.mrf.mxu0
    %v2435 = vadd.f32 0.0, %v2434
    %2436 = vdwg.mxu0
    %2437 = vmatpush.msra.mxu0 %v1739
    %2438 = vmatpush.msra.mxu0 %v1735
    %2439 = vmatpush.msra.mxu0 %v1731
    %2440 = vmatpush.msra.mxu0 %v1727
    %2441 = vmatpush.msra.mxu0 %v1723
    %2442 = vmatpush.msra.mxu0 %v1719
    %2443 = vmatpush.msra.mxu0 %v1715
    %2444 = vmatpush.msra.mxu0 %v1711
    %2445 = vmatpush.msra.mxu0 %v1707
    %2446 = vmatpush.msra.mxu0 %v1703
    %2447 = vmatpush.msra.mxu0 %v1699
    %2448 = vmatpush.msra.mxu0 %v1695
    %2449 = vmatpush.msra.mxu0 %v1691
    %2450 = vmatpush.msra.mxu0 %v1687
    %2451 = vmatpush.msra.mxu0 %v1683
    %2452 = vmatpush.msra.mxu0 %v1679
    %2453 = vmatmul.f32.gmra.mxu0 %v2411
    %v2454 = vpop.f32.mrf.mxu0
    %v2455 = vadd.f32 0.0, %v2454
    %2456 = vdwg.mxu0
    %2457 = vmatpush.msra.mxu0 %v1740
    %2458 = vmatpush.msra.mxu0 %v1736
    %2459 = vmatpush.msra.mxu0 %v1732
    %2460 = vmatpush.msra.mxu0 %v1728
    %2461 = vmatpush.msra.mxu0 %v1724
    %2462 = vmatpush.msra.mxu0 %v1720
    %2463 = vmatpush.msra.mxu0 %v1716
    %2464 = vmatpush.msra.mxu0 %v1712
    %2465 = vmatpush.msra.mxu0 %v1708
    %2466 = vmatpush.msra.mxu0 %v1704
    %2467 = vmatpush.msra.mxu0 %v1700
    %2468 = vmatpush.msra.mxu0 %v1696
    %2469 = vmatpush.msra.mxu0 %v1692
    %2470 = vmatpush.msra.mxu0 %v1688
    %2471 = vmatpush.msra.mxu0 %v1684
    %2472 = vmatpush.msra.mxu0 %v1680
    %2473 = vmatmul.f32.gmra.mxu0 %v2411
    %v2474 = vpop.f32.mrf.mxu0
    %v2475 = vadd.f32 0.0, %v2474
    %2476 = vdwg.mxu0
    %2477 = vmatpush.msra.mxu0 %v1741
    %2478 = vmatpush.msra.mxu0 %v1737
    %2479 = vmatpush.msra.mxu0 %v1733
    %2480 = vmatpush.msra.mxu0 %v1729
    %2481 = vmatpush.msra.mxu0 %v1725
    %2482 = vmatpush.msra.mxu0 %v1721
    %2483 = vmatpush.msra.mxu0 %v1717
    %2484 = vmatpush.msra.mxu0 %v1713
    %2485 = vmatpush.msra.mxu0 %v1709
    %2486 = vmatpush.msra.mxu0 %v1705
    %2487 = vmatpush.msra.mxu0 %v1701
    %2488 = vmatpush.msra.mxu0 %v1697
    %2489 = vmatpush.msra.mxu0 %v1693
    %2490 = vmatpush.msra.mxu0 %v1689
    %2491 = vmatpush.msra.mxu0 %v1685
    %2492 = vmatpush.msra.mxu0 %v1681
    %2493 = vmatmul.f32.gmra.mxu0 %v2411
    %v2494 = vpop.f32.mrf.mxu0
    %v2495 = vadd.f32 0.0, %v2494
    %2496 = vdwg.mxu0
    %v2497 = vadd.f32 %v2413, %v2435
    %v2498 = vadd.f32 %v2414, %v2455
    %v2499 = vadd.f32 %v2415, %v2475
    %v2500 = vadd.f32 %v2416, %v2495
    %v2501 = vxor.u32 %v2497, 2147483648
    %v2502 = vmul.f32 %v2501, 1.442695
    %v2503 = vpow.pop %v2502
    %v2504 = vadd.f32 %v2503, 1.0
    %v2505 = vrcp.pop %v2504
    %v2506 = vmul.f32 %v2504, %v2505
    %v2507 = vsub.f32 1.0, %v2506
    %v2508 = vmul.f32 %v2505, %v2507
    %v2509 = vadd.f32 %v2505, %v2508
    %vm2510 = vweird.f32 %v2504
    %vm2511 = vweird.f32 %v2505
    %vm2512 = vmor %vm2510, %vm2511
    %v2513 = vsel %vm2512, %v2505, %v2509
    %v2514 = vand.u32 2147483647, %v2504
    %vm2515 = vcmp.eq.f32.partialorder %v2514, 8.507059e+37
    %v2516 = vand.u32 %v2504, 2147483648
    %v2517 = vor.u32 1.1754944e-38, %v2516
    %v2518 = vsel %vm2515, %v2517, %v2513
    %v2519 = vmul.f32 1.0, %v2518
    %v2520 = vxor.u32 %v2498, 2147483648
    %v2521 = vmul.f32 %v2520, 1.442695
    %v2522 = vpow.pop %v2521
    %v2523 = vadd.f32 %v2522, 1.0
    %v2524 = vrcp.pop %v2523
    %v2525 = vmul.f32 %v2523, %v2524
    %v2526 = vsub.f32 1.0, %v2525
    %v2527 = vmul.f32 %v2524, %v2526
    %v2528 = vadd.f32 %v2524, %v2527
    %vm2529 = vweird.f32 %v2523
    %vm2530 = vweird.f32 %v2524
    %vm2531 = vmor %vm2529, %vm2530
    %v2532 = vsel %vm2531, %v2524, %v2528
    %v2533 = vand.u32 2147483647, %v2523
    %vm2534 = vcmp.eq.f32.partialorder %v2533, 8.507059e+37
    %v2535 = vand.u32 %v2523, 2147483648
    %v2536 = vor.u32 1.1754944e-38, %v2535
    %v2537 = vsel %vm2534, %v2536, %v2532
    %v2538 = vmul.f32 1.0, %v2537
    %v2539 = vtanh.pop %v2499
    %v2540 = vxor.u32 %v2500, 2147483648
    %v2541 = vmul.f32 %v2540, 1.442695
    %v2542 = vpow.pop %v2541
    %v2543 = vadd.f32 %v2542, 1.0
    %v2544 = vrcp.pop %v2543
    %v2545 = vmul.f32 %v2543, %v2544
    %v2546 = vsub.f32 1.0, %v2545
    %v2547 = vmul.f32 %v2544, %v2546
    %v2548 = vadd.f32 %v2544, %v2547
    %vm2549 = vweird.f32 %v2543
    %vm2550 = vweird.f32 %v2544
    %vm2551 = vmor %vm2549, %vm2550
    %v2552 = vsel %vm2551, %v2544, %v2548
    %v2553 = vand.u32 2147483647, %v2543
    %vm2554 = vcmp.eq.f32.partialorder %v2553, 8.507059e+37
    %v2555 = vand.u32 %v2543, 2147483648
    %v2556 = vor.u32 1.1754944e-38, %v2555
    %v2557 = vsel %vm2554, %v2556, %v2552
    %v2558 = vmul.f32 1.0, %v2557
    %v2559 = vmul.f32 %v2538, %v2409
    %v2560 = vmul.f32 %v2519, %v2539
    %v2561 = vadd.f32 %v2559, %v2560
    %v2562 = vtanh.pop %v2561
    %v2563 = vmul.f32 %v2558, %v2562
    %2564 = vst [vmem:[%s4 + $0x18] sm:$0xff] %v2563
    %v2565 = vld [vmem:[#allocation3 + $0x80] sm:$0xff]
    %v2566 = vld [vmem:[#allocation3 + $0x88] sm:$0xff]
    %v2567 = vld [vmem:[#allocation3 + $0x90] sm:$0xff]
    %v2568 = vld [vmem:[#allocation3 + $0x98] sm:$0xff]
    %2569 = vmatpush.msra.mxu0 %v1738
    %2570 = vmatpush.msra.mxu0 %v1734
    %2571 = vmatpush.msra.mxu0 %v1730
    %2572 = vmatpush.msra.mxu0 %v1726
    %2573 = vmatpush.msra.mxu0 %v1722
    %2574 = vmatpush.msra.mxu0 %v1718
    %2575 = vmatpush.msra.mxu0 %v1714
    %2576 = vmatpush.msra.mxu0 %v1710
    %2577 = vmatpush.msra.mxu0 %v1706
    %2578 = vmatpush.msra.mxu0 %v1702
    %2579 = vmatpush.msra.mxu0 %v1698
    %2580 = vmatpush.msra.mxu0 %v1694
    %2581 = vmatpush.msra.mxu0 %v1690
    %2582 = vmatpush.msra.mxu0 %v1686
    %2583 = vmatpush.msra.mxu0 %v1682
    %2584 = vmatpush.msra.mxu0 %v1678
    %2585 = vmatmul.f32.gmra.mxu0 %v2563
    %v2586 = vpop.f32.mrf.mxu0
    %v2587 = vadd.f32 0.0, %v2586
    %2588 = vdwg.mxu0
    %2589 = vmatpush.msra.mxu0 %v1739
    %2590 = vmatpush.msra.mxu0 %v1735
    %2591 = vmatpush.msra.mxu0 %v1731
    %2592 = vmatpush.msra.mxu0 %v1727
    %2593 = vmatpush.msra.mxu0 %v1723
    %2594 = vmatpush.msra.mxu0 %v1719
    %2595 = vmatpush.msra.mxu0 %v1715
    %2596 = vmatpush.msra.mxu0 %v1711
    %2597 = vmatpush.msra.mxu0 %v1707
    %2598 = vmatpush.msra.mxu0 %v1703
    %2599 = vmatpush.msra.mxu0 %v1699
    %2600 = vmatpush.msra.mxu0 %v1695
    %2601 = vmatpush.msra.mxu0 %v1691
    %2602 = vmatpush.msra.mxu0 %v1687
    %2603 = vmatpush.msra.mxu0 %v1683
    %2604 = vmatpush.msra.mxu0 %v1679
    %2605 = vmatmul.f32.gmra.mxu0 %v2563
    %v2606 = vpop.f32.mrf.mxu0
    %v2607 = vadd.f32 0.0, %v2606
    %2608 = vdwg.mxu0
    %2609 = vmatpush.msra.mxu0 %v1740
    %2610 = vmatpush.msra.mxu0 %v1736
    %2611 = vmatpush.msra.mxu0 %v1732
    %2612 = vmatpush.msra.mxu0 %v1728
    %2613 = vmatpush.msra.mxu0 %v1724
    %2614 = vmatpush.msra.mxu0 %v1720
    %2615 = vmatpush.msra.mxu0 %v1716
    %2616 = vmatpush.msra.mxu0 %v1712
    %2617 = vmatpush.msra.mxu0 %v1708
    %2618 = vmatpush.msra.mxu0 %v1704
    %2619 = vmatpush.msra.mxu0 %v1700
    %2620 = vmatpush.msra.mxu0 %v1696
    %2621 = vmatpush.msra.mxu0 %v1692
    %2622 = vmatpush.msra.mxu0 %v1688
    %2623 = vmatpush.msra.mxu0 %v1684
    %2624 = vmatpush.msra.mxu0 %v1680
    %2625 = vmatmul.f32.gmra.mxu0 %v2563
    %v2626 = vpop.f32.mrf.mxu0
    %v2627 = vadd.f32 0.0, %v2626
    %2628 = vdwg.mxu0
    %2629 = vmatpush.msra.mxu0 %v1741
    %2630 = vmatpush.msra.mxu0 %v1737
    %2631 = vmatpush.msra.mxu0 %v1733
    %2632 = vmatpush.msra.mxu0 %v1729
    %2633 = vmatpush.msra.mxu0 %v1725
    %2634 = vmatpush.msra.mxu0 %v1721
    %2635 = vmatpush.msra.mxu0 %v1717
    %2636 = vmatpush.msra.mxu0 %v1713
    %2637 = vmatpush.msra.mxu0 %v1709
    %2638 = vmatpush.msra.mxu0 %v1705
    %2639 = vmatpush.msra.mxu0 %v1701
    %2640 = vmatpush.msra.mxu0 %v1697
    %2641 = vmatpush.msra.mxu0 %v1693
    %2642 = vmatpush.msra.mxu0 %v1689
    %2643 = vmatpush.msra.mxu0 %v1685
    %2644 = vmatpush.msra.mxu0 %v1681
    %2645 = vmatmul.f32.gmra.mxu0 %v2563
    %v2646 = vpop.f32.mrf.mxu0
    %v2647 = vadd.f32 0.0, %v2646
    %2648 = vdwg.mxu0
    %v2649 = vadd.f32 %v2565, %v2587
    %v2650 = vadd.f32 %v2566, %v2607
    %v2651 = vadd.f32 %v2567, %v2627
    %v2652 = vadd.f32 %v2568, %v2647
    %v2653 = vxor.u32 %v2649, 2147483648
    %v2654 = vmul.f32 %v2653, 1.442695
    %v2655 = vpow.pop %v2654
    %v2656 = vadd.f32 %v2655, 1.0
    %v2657 = vrcp.pop %v2656
    %v2658 = vmul.f32 %v2656, %v2657
    %v2659 = vsub.f32 1.0, %v2658
    %v2660 = vmul.f32 %v2657, %v2659
    %v2661 = vadd.f32 %v2657, %v2660
    %vm2662 = vweird.f32 %v2656
    %vm2663 = vweird.f32 %v2657
    %vm2664 = vmor %vm2662, %vm2663
    %v2665 = vsel %vm2664, %v2657, %v2661
    %v2666 = vand.u32 2147483647, %v2656
    %vm2667 = vcmp.eq.f32.partialorder %v2666, 8.507059e+37
    %v2668 = vand.u32 %v2656, 2147483648
    %v2669 = vor.u32 1.1754944e-38, %v2668
    %v2670 = vsel %vm2667, %v2669, %v2665
    %v2671 = vmul.f32 1.0, %v2670
    %v2672 = vxor.u32 %v2650, 2147483648
    %v2673 = vmul.f32 %v2672, 1.442695
    %v2674 = vpow.pop %v2673
    %v2675 = vadd.f32 %v2674, 1.0
    %v2676 = vrcp.pop %v2675
    %v2677 = vmul.f32 %v2675, %v2676
    %v2678 = vsub.f32 1.0, %v2677
    %v2679 = vmul.f32 %v2676, %v2678
    %v2680 = vadd.f32 %v2676, %v2679
    %vm2681 = vweird.f32 %v2675
    %vm2682 = vweird.f32 %v2676
    %vm2683 = vmor %vm2681, %vm2682
    %v2684 = vsel %vm2683, %v2676, %v2680
    %v2685 = vand.u32 2147483647, %v2675
    %vm2686 = vcmp.eq.f32.partialorder %v2685, 8.507059e+37
    %v2687 = vand.u32 %v2675, 2147483648
    %v2688 = vor.u32 1.1754944e-38, %v2687
    %v2689 = vsel %vm2686, %v2688, %v2684
    %v2690 = vmul.f32 1.0, %v2689
    %v2691 = vtanh.pop %v2651
    %v2692 = vxor.u32 %v2652, 2147483648
    %v2693 = vmul.f32 %v2692, 1.442695
    %v2694 = vpow.pop %v2693
    %v2695 = vadd.f32 %v2694, 1.0
    %v2696 = vrcp.pop %v2695
    %v2697 = vmul.f32 %v2695, %v2696
    %v2698 = vsub.f32 1.0, %v2697
    %v2699 = vmul.f32 %v2696, %v2698
    %v2700 = vadd.f32 %v2696, %v2699
    %vm2701 = vweird.f32 %v2695
    %vm2702 = vweird.f32 %v2696
    %vm2703 = vmor %vm2701, %vm2702
    %v2704 = vsel %vm2703, %v2696, %v2700
    %v2705 = vand.u32 2147483647, %v2695
    %vm2706 = vcmp.eq.f32.partialorder %v2705, 8.507059e+37
    %v2707 = vand.u32 %v2695, 2147483648
    %v2708 = vor.u32 1.1754944e-38, %v2707
    %v2709 = vsel %vm2706, %v2708, %v2704
    %v2710 = vmul.f32 1.0, %v2709
    %v2711 = vmul.f32 %v2690, %v2561
    %v2712 = vmul.f32 %v2671, %v2691
    %v2713 = vadd.f32 %v2711, %v2712
    %v2714 = vtanh.pop %v2713
    %v2715 = vmul.f32 %v2710, %v2714
    %2716 = vst [vmem:[%s4 + $0x20] sm:$0xff] %v2715
    %v2717 = vld [vmem:[#allocation3 + $0xa0] sm:$0xff]
    %v2718 = vld [vmem:[#allocation3 + $0xa8] sm:$0xff]
    %v2719 = vld [vmem:[#allocation3 + $0xb0] sm:$0xff]
    %v2720 = vld [vmem:[#allocation3 + $0xb8] sm:$0xff]
    %2721 = vmatpush.msra.mxu0 %v1738
    %2722 = vmatpush.msra.mxu0 %v1734
    %2723 = vmatpush.msra.mxu0 %v1730
    %2724 = vmatpush.msra.mxu0 %v1726
    %2725 = vmatpush.msra.mxu0 %v1722
    %2726 = vmatpush.msra.mxu0 %v1718
    %2727 = vmatpush.msra.mxu0 %v1714
    %2728 = vmatpush.msra.mxu0 %v1710
    %2729 = vmatpush.msra.mxu0 %v1706
    %2730 = vmatpush.msra.mxu0 %v1702
    %2731 = vmatpush.msra.mxu0 %v1698
    %2732 = vmatpush.msra.mxu0 %v1694
    %2733 = vmatpush.msra.mxu0 %v1690
    %2734 = vmatpush.msra.mxu0 %v1686
    %2735 = vmatpush.msra.mxu0 %v1682
    %2736 = vmatpush.msra.mxu0 %v1678
    %2737 = vmatmul.f32.gmra.mxu0 %v2715
    %v2738 = vpop.f32.mrf.mxu0
    %v2739 = vadd.f32 0.0, %v2738
    %2740 = vdwg.mxu0
    %2741 = vmatpush.msra.mxu0 %v1739
    %2742 = vmatpush.msra.mxu0 %v1735
    %2743 = vmatpush.msra.mxu0 %v1731
    %2744 = vmatpush.msra.mxu0 %v1727
    %2745 = vmatpush.msra.mxu0 %v1723
    %2746 = vmatpush.msra.mxu0 %v1719
    %2747 = vmatpush.msra.mxu0 %v1715
    %2748 = vmatpush.msra.mxu0 %v1711
    %2749 = vmatpush.msra.mxu0 %v1707
    %2750 = vmatpush.msra.mxu0 %v1703
    %2751 = vmatpush.msra.mxu0 %v1699
    %2752 = vmatpush.msra.mxu0 %v1695
    %2753 = vmatpush.msra.mxu0 %v1691
    %2754 = vmatpush.msra.mxu0 %v1687
    %2755 = vmatpush.msra.mxu0 %v1683
    %2756 = vmatpush.msra.mxu0 %v1679
    %2757 = vmatmul.f32.gmra.mxu0 %v2715
    %v2758 = vpop.f32.mrf.mxu0
    %v2759 = vadd.f32 0.0, %v2758
    %2760 = vdwg.mxu0
    %2761 = vmatpush.msra.mxu0 %v1740
    %2762 = vmatpush.msra.mxu0 %v1736
    %2763 = vmatpush.msra.mxu0 %v1732
    %2764 = vmatpush.msra.mxu0 %v1728
    %2765 = vmatpush.msra.mxu0 %v1724
    %2766 = vmatpush.msra.mxu0 %v1720
    %2767 = vmatpush.msra.mxu0 %v1716
    %2768 = vmatpush.msra.mxu0 %v1712
    %2769 = vmatpush.msra.mxu0 %v1708
    %2770 = vmatpush.msra.mxu0 %v1704
    %2771 = vmatpush.msra.mxu0 %v1700
    %2772 = vmatpush.msra.mxu0 %v1696
    %2773 = vmatpush.msra.mxu0 %v1692
    %2774 = vmatpush.msra.mxu0 %v1688
    %2775 = vmatpush.msra.mxu0 %v1684
    %2776 = vmatpush.msra.mxu0 %v1680
    %2777 = vmatmul.f32.gmra.mxu0 %v2715
    %v2778 = vpop.f32.mrf.mxu0
    %v2779 = vadd.f32 0.0, %v2778
    %2780 = vdwg.mxu0
    %2781 = vmatpush.msra.mxu0 %v1741
    %2782 = vmatpush.msra.mxu0 %v1737
    %2783 = vmatpush.msra.mxu0 %v1733
    %2784 = vmatpush.msra.mxu0 %v1729
    %2785 = vmatpush.msra.mxu0 %v1725
    %2786 = vmatpush.msra.mxu0 %v1721
    %2787 = vmatpush.msra.mxu0 %v1717
    %2788 = vmatpush.msra.mxu0 %v1713
    %2789 = vmatpush.msra.mxu0 %v1709
    %2790 = vmatpush.msra.mxu0 %v1705
    %2791 = vmatpush.msra.mxu0 %v1701
    %2792 = vmatpush.msra.mxu0 %v1697
    %2793 = vmatpush.msra.mxu0 %v1693
    %2794 = vmatpush.msra.mxu0 %v1689
    %2795 = vmatpush.msra.mxu0 %v1685
    %2796 = vmatpush.msra.mxu0 %v1681
    %2797 = vmatmul.f32.gmra.mxu0 %v2715
    %v2798 = vpop.f32.mrf.mxu0
    %v2799 = vadd.f32 0.0, %v2798
    %2800 = vdwg.mxu0
    %v2801 = vadd.f32 %v2717, %v2739
    %v2802 = vadd.f32 %v2718, %v2759
    %v2803 = vadd.f32 %v2719, %v2779
    %v2804 = vadd.f32 %v2720, %v2799
    %v2805 = vxor.u32 %v2801, 2147483648
    %v2806 = vmul.f32 %v2805, 1.442695
    %v2807 = vpow.pop %v2806
    %v2808 = vadd.f32 %v2807, 1.0
    %v2809 = vrcp.pop %v2808
    %v2810 = vmul.f32 %v2808, %v2809
    %v2811 = vsub.f32 1.0, %v2810
    %v2812 = vmul.f32 %v2809, %v2811
    %v2813 = vadd.f32 %v2809, %v2812
    %vm2814 = vweird.f32 %v2808
    %vm2815 = vweird.f32 %v2809
    %vm2816 = vmor %vm2814, %vm2815
    %v2817 = vsel %vm2816, %v2809, %v2813
    %v2818 = vand.u32 2147483647, %v2808
    %vm2819 = vcmp.eq.f32.partialorder %v2818, 8.507059e+37
    %v2820 = vand.u32 %v2808, 2147483648
    %v2821 = vor.u32 1.1754944e-38, %v2820
    %v2822 = vsel %vm2819, %v2821, %v2817
    %v2823 = vmul.f32 1.0, %v2822
    %v2824 = vxor.u32 %v2802, 2147483648
    %v2825 = vmul.f32 %v2824, 1.442695
    %v2826 = vpow.pop %v2825
    %v2827 = vadd.f32 %v2826, 1.0
    %v2828 = vrcp.pop %v2827
    %v2829 = vmul.f32 %v2827, %v2828
    %v2830 = vsub.f32 1.0, %v2829
    %v2831 = vmul.f32 %v2828, %v2830
    %v2832 = vadd.f32 %v2828, %v2831
    %vm2833 = vweird.f32 %v2827
    %vm2834 = vweird.f32 %v2828
    %vm2835 = vmor %vm2833, %vm2834
    %v2836 = vsel %vm2835, %v2828, %v2832
    %v2837 = vand.u32 2147483647, %v2827
    %vm2838 = vcmp.eq.f32.partialorder %v2837, 8.507059e+37
    %v2839 = vand.u32 %v2827, 2147483648
    %v2840 = vor.u32 1.1754944e-38, %v2839
    %v2841 = vsel %vm2838, %v2840, %v2836
    %v2842 = vmul.f32 1.0, %v2841
    %v2843 = vtanh.pop %v2803
    %v2844 = vxor.u32 %v2804, 2147483648
    %v2845 = vmul.f32 %v2844, 1.442695
    %v2846 = vpow.pop %v2845
    %v2847 = vadd.f32 %v2846, 1.0
    %v2848 = vrcp.pop %v2847
    %v2849 = vmul.f32 %v2847, %v2848
    %v2850 = vsub.f32 1.0, %v2849
    %v2851 = vmul.f32 %v2848, %v2850
    %v2852 = vadd.f32 %v2848, %v2851
    %vm2853 = vweird.f32 %v2847
    %vm2854 = vweird.f32 %v2848
    %vm2855 = vmor %vm2853, %vm2854
    %v2856 = vsel %vm2855, %v2848, %v2852
    %v2857 = vand.u32 2147483647, %v2847
    %vm2858 = vcmp.eq.f32.partialorder %v2857, 8.507059e+37
    %v2859 = vand.u32 %v2847, 2147483648
    %v2860 = vor.u32 1.1754944e-38, %v2859
    %v2861 = vsel %vm2858, %v2860, %v2856
    %v2862 = vmul.f32 1.0, %v2861
    %v2863 = vmul.f32 %v2842, %v2713
    %v2864 = vmul.f32 %v2823, %v2843
    %v2865 = vadd.f32 %v2863, %v2864
    %v2866 = vtanh.pop %v2865
    %v2867 = vmul.f32 %v2862, %v2866
    %2868 = vst [vmem:[%s4 + $0x28] sm:$0xff] %v2867
    %v2869 = vld [vmem:[#allocation3 + $0xc0] sm:$0xff]
    %v2870 = vld [vmem:[#allocation3 + $0xc8] sm:$0xff]
    %v2871 = vld [vmem:[#allocation3 + $0xd0] sm:$0xff]
    %v2872 = vld [vmem:[#allocation3 + $0xd8] sm:$0xff]
    %2873 = vmatpush.msra.mxu0 %v1738
    %2874 = vmatpush.msra.mxu0 %v1734
    %2875 = vmatpush.msra.mxu0 %v1730
    %2876 = vmatpush.msra.mxu0 %v1726
    %2877 = vmatpush.msra.mxu0 %v1722
    %2878 = vmatpush.msra.mxu0 %v1718
    %2879 = vmatpush.msra.mxu0 %v1714
    %2880 = vmatpush.msra.mxu0 %v1710
    %2881 = vmatpush.msra.mxu0 %v1706
    %2882 = vmatpush.msra.mxu0 %v1702
    %2883 = vmatpush.msra.mxu0 %v1698
    %2884 = vmatpush.msra.mxu0 %v1694
    %2885 = vmatpush.msra.mxu0 %v1690
    %2886 = vmatpush.msra.mxu0 %v1686
    %2887 = vmatpush.msra.mxu0 %v1682
    %2888 = vmatpush.msra.mxu0 %v1678
    %2889 = vmatmul.f32.gmra.mxu0 %v2867
    %v2890 = vpop.f32.mrf.mxu0
    %v2891 = vadd.f32 0.0, %v2890
    %2892 = vdwg.mxu0
    %2893 = vmatpush.msra.mxu0 %v1739
    %2894 = vmatpush.msra.mxu0 %v1735
    %2895 = vmatpush.msra.mxu0 %v1731
    %2896 = vmatpush.msra.mxu0 %v1727
    %2897 = vmatpush.msra.mxu0 %v1723
    %2898 = vmatpush.msra.mxu0 %v1719
    %2899 = vmatpush.msra.mxu0 %v1715
    %2900 = vmatpush.msra.mxu0 %v1711
    %2901 = vmatpush.msra.mxu0 %v1707
    %2902 = vmatpush.msra.mxu0 %v1703
    %2903 = vmatpush.msra.mxu0 %v1699
    %2904 = vmatpush.msra.mxu0 %v1695
    %2905 = vmatpush.msra.mxu0 %v1691
    %2906 = vmatpush.msra.mxu0 %v1687
    %2907 = vmatpush.msra.mxu0 %v1683
    %2908 = vmatpush.msra.mxu0 %v1679
    %2909 = vmatmul.f32.gmra.mxu0 %v2867
    %v2910 = vpop.f32.mrf.mxu0
    %v2911 = vadd.f32 0.0, %v2910
    %2912 = vdwg.mxu0
    %2913 = vmatpush.msra.mxu0 %v1740
    %2914 = vmatpush.msra.mxu0 %v1736
    %2915 = vmatpush.msra.mxu0 %v1732
    %2916 = vmatpush.msra.mxu0 %v1728
    %2917 = vmatpush.msra.mxu0 %v1724
    %2918 = vmatpush.msra.mxu0 %v1720
    %2919 = vmatpush.msra.mxu0 %v1716
    %2920 = vmatpush.msra.mxu0 %v1712
    %2921 = vmatpush.msra.mxu0 %v1708
    %2922 = vmatpush.msra.mxu0 %v1704
    %2923 = vmatpush.msra.mxu0 %v1700
    %2924 = vmatpush.msra.mxu0 %v1696
    %2925 = vmatpush.msra.mxu0 %v1692
    %2926 = vmatpush.msra.mxu0 %v1688
    %2927 = vmatpush.msra.mxu0 %v1684
    %2928 = vmatpush.msra.mxu0 %v1680
    %2929 = vmatmul.f32.gmra.mxu0 %v2867
    %v2930 = vpop.f32.mrf.mxu0
    %v2931 = vadd.f32 0.0, %v2930
    %2932 = vdwg.mxu0
    %2933 = vmatpush.msra.mxu0 %v1741
    %2934 = vmatpush.msra.mxu0 %v1737
    %2935 = vmatpush.msra.mxu0 %v1733
    %2936 = vmatpush.msra.mxu0 %v1729
    %2937 = vmatpush.msra.mxu0 %v1725
    %2938 = vmatpush.msra.mxu0 %v1721
    %2939 = vmatpush.msra.mxu0 %v1717
    %2940 = vmatpush.msra.mxu0 %v1713
    %2941 = vmatpush.msra.mxu0 %v1709
    %2942 = vmatpush.msra.mxu0 %v1705
    %2943 = vmatpush.msra.mxu0 %v1701
    %2944 = vmatpush.msra.mxu0 %v1697
    %2945 = vmatpush.msra.mxu0 %v1693
    %2946 = vmatpush.msra.mxu0 %v1689
    %2947 = vmatpush.msra.mxu0 %v1685
    %2948 = vmatpush.msra.mxu0 %v1681
    %2949 = vmatmul.f32.gmra.mxu0 %v2867
    %v2950 = vpop.f32.mrf.mxu0
    %v2951 = vadd.f32 0.0, %v2950
    %2952 = vdwg.mxu0
    %v2953 = vadd.f32 %v2869, %v2891
    %v2954 = vadd.f32 %v2870, %v2911
    %v2955 = vadd.f32 %v2871, %v2931
    %v2956 = vadd.f32 %v2872, %v2951
    %v2957 = vxor.u32 %v2953, 2147483648
    %v2958 = vmul.f32 %v2957, 1.442695
    %v2959 = vpow.pop %v2958
    %v2960 = vadd.f32 %v2959, 1.0
    %v2961 = vrcp.pop %v2960
    %v2962 = vmul.f32 %v2960, %v2961
    %v2963 = vsub.f32 1.0, %v2962
    %v2964 = vmul.f32 %v2961, %v2963
    %v2965 = vadd.f32 %v2961, %v2964
    %vm2966 = vweird.f32 %v2960
    %vm2967 = vweird.f32 %v2961
    %vm2968 = vmor %vm2966, %vm2967
    %v2969 = vsel %vm2968, %v2961, %v2965
    %v2970 = vand.u32 2147483647, %v2960
    %vm2971 = vcmp.eq.f32.partialorder %v2970, 8.507059e+37
    %v2972 = vand.u32 %v2960, 2147483648
    %v2973 = vor.u32 1.1754944e-38, %v2972
    %v2974 = vsel %vm2971, %v2973, %v2969
    %v2975 = vmul.f32 1.0, %v2974
    %v2976 = vxor.u32 %v2954, 2147483648
    %v2977 = vmul.f32 %v2976, 1.442695
    %v2978 = vpow.pop %v2977
    %v2979 = vadd.f32 %v2978, 1.0
    %v2980 = vrcp.pop %v2979
    %v2981 = vmul.f32 %v2979, %v2980
    %v2982 = vsub.f32 1.0, %v2981
    %v2983 = vmul.f32 %v2980, %v2982
    %v2984 = vadd.f32 %v2980, %v2983
    %vm2985 = vweird.f32 %v2979
    %vm2986 = vweird.f32 %v2980
    %vm2987 = vmor %vm2985, %vm2986
    %v2988 = vsel %vm2987, %v2980, %v2984
    %v2989 = vand.u32 2147483647, %v2979
    %vm2990 = vcmp.eq.f32.partialorder %v2989, 8.507059e+37
    %v2991 = vand.u32 %v2979, 2147483648
    %v2992 = vor.u32 1.1754944e-38, %v2991
    %v2993 = vsel %vm2990, %v2992, %v2988
    %v2994 = vmul.f32 1.0, %v2993
    %v2995 = vtanh.pop %v2955
    %v2996 = vxor.u32 %v2956, 2147483648
    %v2997 = vmul.f32 %v2996, 1.442695
    %v2998 = vpow.pop %v2997
    %v2999 = vadd.f32 %v2998, 1.0
    %v3000 = vrcp.pop %v2999
    %v3001 = vmul.f32 %v2999, %v3000
    %v3002 = vsub.f32 1.0, %v3001
    %v3003 = vmul.f32 %v3000, %v3002
    %v3004 = vadd.f32 %v3000, %v3003
    %vm3005 = vweird.f32 %v2999
    %vm3006 = vweird.f32 %v3000
    %vm3007 = vmor %vm3005, %vm3006
    %v3008 = vsel %vm3007, %v3000, %v3004
    %v3009 = vand.u32 2147483647, %v2999
    %vm3010 = vcmp.eq.f32.partialorder %v3009, 8.507059e+37
    %v3011 = vand.u32 %v2999, 2147483648
    %v3012 = vor.u32 1.1754944e-38, %v3011
    %v3013 = vsel %vm3010, %v3012, %v3008
    %v3014 = vmul.f32 1.0, %v3013
    %v3015 = vmul.f32 %v2994, %v2865
    %v3016 = vmul.f32 %v2975, %v2995
    %v3017 = vadd.f32 %v3015, %v3016
    %v3018 = vtanh.pop %v3017
    %v3019 = vmul.f32 %v3014, %v3018
    %3020 = vst [vmem:[%s4 + $0x30] sm:$0xff] %v3019
    %v3021 = vld [vmem:[#allocation3 + $0xe0] sm:$0xff]
    %v3022 = vld [vmem:[#allocation3 + $0xe8] sm:$0xff]
    %v3023 = vld [vmem:[#allocation3 + $0xf0] sm:$0xff]
    %v3024 = vld [vmem:[#allocation3 + $0xf8] sm:$0xff]
    %3025 = vmatpush.msra.mxu0 %v1738
    %3026 = vmatpush.msra.mxu0 %v1734
    %3027 = vmatpush.msra.mxu0 %v1730
    %3028 = vmatpush.msra.mxu0 %v1726
    %3029 = vmatpush.msra.mxu0 %v1722
    %3030 = vmatpush.msra.mxu0 %v1718
    %3031 = vmatpush.msra.mxu0 %v1714
    %3032 = vmatpush.msra.mxu0 %v1710
    %3033 = vmatpush.msra.mxu0 %v1706
    %3034 = vmatpush.msra.mxu0 %v1702
    %3035 = vmatpush.msra.mxu0 %v1698
    %3036 = vmatpush.msra.mxu0 %v1694
    %3037 = vmatpush.msra.mxu0 %v1690
    %3038 = vmatpush.msra.mxu0 %v1686
    %3039 = vmatpush.msra.mxu0 %v1682
    %3040 = vmatpush.msra.mxu0 %v1678
    %3041 = vmatmul.f32.gmra.mxu0 %v3019
    %v3042 = vpop.f32.mrf.mxu0
    %v3043 = vadd.f32 0.0, %v3042
    %3044 = vdwg.mxu0
    %3045 = vmatpush.msra.mxu0 %v1739
    %3046 = vmatpush.msra.mxu0 %v1735
    %3047 = vmatpush.msra.mxu0 %v1731
    %3048 = vmatpush.msra.mxu0 %v1727
    %3049 = vmatpush.msra.mxu0 %v1723
    %3050 = vmatpush.msra.mxu0 %v1719
    %3051 = vmatpush.msra.mxu0 %v1715
    %3052 = vmatpush.msra.mxu0 %v1711
    %3053 = vmatpush.msra.mxu0 %v1707
    %3054 = vmatpush.msra.mxu0 %v1703
    %3055 = vmatpush.msra.mxu0 %v1699
    %3056 = vmatpush.msra.mxu0 %v1695
    %3057 = vmatpush.msra.mxu0 %v1691
    %3058 = vmatpush.msra.mxu0 %v1687
    %3059 = vmatpush.msra.mxu0 %v1683
    %3060 = vmatpush.msra.mxu0 %v1679
    %3061 = vmatmul.f32.gmra.mxu0 %v3019
    %v3062 = vpop.f32.mrf.mxu0
    %v3063 = vadd.f32 0.0, %v3062
    %3064 = vdwg.mxu0
    %3065 = vmatpush.msra.mxu0 %v1740
    %3066 = vmatpush.msra.mxu0 %v1736
    %3067 = vmatpush.msra.mxu0 %v1732
    %3068 = vmatpush.msra.mxu0 %v1728
    %3069 = vmatpush.msra.mxu0 %v1724
    %3070 = vmatpush.msra.mxu0 %v1720
    %3071 = vmatpush.msra.mxu0 %v1716
    %3072 = vmatpush.msra.mxu0 %v1712
    %3073 = vmatpush.msra.mxu0 %v1708
    %3074 = vmatpush.msra.mxu0 %v1704
    %3075 = vmatpush.msra.mxu0 %v1700
    %3076 = vmatpush.msra.mxu0 %v1696
    %3077 = vmatpush.msra.mxu0 %v1692
    %3078 = vmatpush.msra.mxu0 %v1688
    %3079 = vmatpush.msra.mxu0 %v1684
    %3080 = vmatpush.msra.mxu0 %v1680
    %3081 = vmatmul.f32.gmra.mxu0 %v3019
    %v3082 = vpop.f32.mrf.mxu0
    %v3083 = vadd.f32 0.0, %v3082
    %3084 = vdwg.mxu0
    %3085 = vmatpush.msra.mxu0 %v1741
    %3086 = vmatpush.msra.mxu0 %v1737
    %3087 = vmatpush.msra.mxu0 %v1733
    %3088 = vmatpush.msra.mxu0 %v1729
    %3089 = vmatpush.msra.mxu0 %v1725
    %3090 = vmatpush.msra.mxu0 %v1721
    %3091 = vmatpush.msra.mxu0 %v1717
    %3092 = vmatpush.msra.mxu0 %v1713
    %3093 = vmatpush.msra.mxu0 %v1709
    %3094 = vmatpush.msra.mxu0 %v1705
    %3095 = vmatpush.msra.mxu0 %v1701
    %3096 = vmatpush.msra.mxu0 %v1697
    %3097 = vmatpush.msra.mxu0 %v1693
    %3098 = vmatpush.msra.mxu0 %v1689
    %3099 = vmatpush.msra.mxu0 %v1685
    %3100 = vmatpush.msra.mxu0 %v1681
    %3101 = vmatmul.f32.gmra.mxu0 %v3019
    %v3102 = vpop.f32.mrf.mxu0
    %v3103 = vadd.f32 0.0, %v3102
    %3104 = vdwg.mxu0
    %v3105 = vadd.f32 %v3021, %v3043
    %v3106 = vadd.f32 %v3022, %v3063
    %v3107 = vadd.f32 %v3023, %v3083
    %v3108 = vadd.f32 %v3024, %v3103
    %v3109 = vxor.u32 %v3105, 2147483648
    %v3110 = vmul.f32 %v3109, 1.442695
    %v3111 = vpow.pop %v3110
    %v3112 = vadd.f32 %v3111, 1.0
    %v3113 = vrcp.pop %v3112
    %v3114 = vmul.f32 %v3112, %v3113
    %v3115 = vsub.f32 1.0, %v3114
    %v3116 = vmul.f32 %v3113, %v3115
    %v3117 = vadd.f32 %v3113, %v3116
    %vm3118 = vweird.f32 %v3112
    %vm3119 = vweird.f32 %v3113
    %vm3120 = vmor %vm3118, %vm3119
    %v3121 = vsel %vm3120, %v3113, %v3117
    %v3122 = vand.u32 2147483647, %v3112
    %vm3123 = vcmp.eq.f32.partialorder %v3122, 8.507059e+37
    %v3124 = vand.u32 %v3112, 2147483648
    %v3125 = vor.u32 1.1754944e-38, %v3124
    %v3126 = vsel %vm3123, %v3125, %v3121
    %v3127 = vmul.f32 1.0, %v3126
    %v3128 = vxor.u32 %v3106, 2147483648
    %v3129 = vmul.f32 %v3128, 1.442695
    %v3130 = vpow.pop %v3129
    %v3131 = vadd.f32 %v3130, 1.0
    %v3132 = vrcp.pop %v3131
    %v3133 = vmul.f32 %v3131, %v3132
    %v3134 = vsub.f32 1.0, %v3133
    %v3135 = vmul.f32 %v3132, %v3134
    %v3136 = vadd.f32 %v3132, %v3135
    %vm3137 = vweird.f32 %v3131
    %vm3138 = vweird.f32 %v3132
    %vm3139 = vmor %vm3137, %vm3138
    %v3140 = vsel %vm3139, %v3132, %v3136
    %v3141 = vand.u32 2147483647, %v3131
    %vm3142 = vcmp.eq.f32.partialorder %v3141, 8.507059e+37
    %v3143 = vand.u32 %v3131, 2147483648
    %v3144 = vor.u32 1.1754944e-38, %v3143
    %v3145 = vsel %vm3142, %v3144, %v3140
    %v3146 = vmul.f32 1.0, %v3145
    %v3147 = vtanh.pop %v3107
    %v3148 = vxor.u32 %v3108, 2147483648
    %v3149 = vmul.f32 %v3148, 1.442695
    %v3150 = vpow.pop %v3149
    %v3151 = vadd.f32 %v3150, 1.0
    %v3152 = vrcp.pop %v3151
    %v3153 = vmul.f32 %v3151, %v3152
    %v3154 = vsub.f32 1.0, %v3153
    %v3155 = vmul.f32 %v3152, %v3154
    %v3156 = vadd.f32 %v3152, %v3155
    %vm3157 = vweird.f32 %v3151
    %vm3158 = vweird.f32 %v3152
    %vm3159 = vmor %vm3157, %vm3158
    %v3160 = vsel %vm3159, %v3152, %v3156
    %v3161 = vand.u32 2147483647, %v3151
    %vm3162 = vcmp.eq.f32.partialorder %v3161, 8.507059e+37
    %v3163 = vand.u32 %v3151, 2147483648
    %v3164 = vor.u32 1.1754944e-38, %v3163
    %v3165 = vsel %vm3162, %v3164, %v3160
    %v3166 = vmul.f32 1.0, %v3165
    %v3167 = vmul.f32 %v3146, %v3017
    %v3168 = vmul.f32 %v3127, %v3147
    %v3169 = vadd.f32 %v3167, %v3168
    %v3170 = vtanh.pop %v3169
    %v3171 = vmul.f32 %v3166, %v3170
    %3172 = vst [vmem:[%s4 + $0x38] sm:$0xff] %v3171
    %s3173 = scalar_lea.vmem %s5, 8
    %3174 = vst [vmem:[%s3173] sm:$0xff] %v3171
    %s3175 = scalar_lea.vmem %s6, 8
    %3176 = vst [vmem:[%s3175] sm:$0xff] %v3169
    // Predicated region
    $region26: #{encoder_lstm_forward.1} parent=1 // pred_check
      _
    $region27: #{encoder_lstm_forward.1} parent=1 // pred_check_branch
      %3178 = sbr.rel (0) target = $region29
    $region28: #{encoder_lstm_forward.1} parent=1 // pred_region
      _
    $region29: #{encoder_lstm_forward.1} parent=1 // pred_fallthru
      _
    // Predicated region
    $region30: #{encoder_lstm_forward.1} parent=1 // pred_check
      _
    $region31: #{encoder_lstm_forward.1} parent=1 // pred_check_branch
      %3180 = sbr.rel (0) target = $region33
    $region32: #{encoder_lstm_forward.1} parent=1 // pred_region
      _
    $region33: #{encoder_lstm_forward.1} parent=1 // pred_fallthru
      _
    // Predicated region
    $region34: #{encoder_lstm_forward.1} parent=1 // pred_check
      _
    $region35: #{encoder_lstm_forward.1} parent=1 // pred_check_branch
      %3182 = sbr.rel (0) target = $region37
    $region36: #{encoder_lstm_forward.1} parent=1 // pred_region
      _
    $region37: #{encoder_lstm_forward.1} parent=1 // pred_fallthru
      _
    // Predicated region
    $region38: #{encoder_lstm_forward.1} parent=1 // pred_check
      _
    $region39: #{encoder_lstm_forward.1} parent=1 // pred_check_branch
      %3184 = sbr.rel (0) target = $region41
    $region40: #{encoder_lstm_forward.1} parent=1 // pred_region
      _
    $region41: #{encoder_lstm_forward.1} parent=1 // pred_fallthru
      _
    // Predicated region
    $region42: #{encoder_lstm_forward.1} parent=1 // pred_check
      _
    $region43: #{encoder_lstm_forward.1} parent=1 // pred_check_branch
      %3186 = sbr.rel (0) target = $region45
    $region44: #{encoder_lstm_forward.1} parent=1 // pred_region
      _
    $region45: #{encoder_lstm_forward.1} parent=1 // pred_fallthru
      _
    // Predicated region
    $region46: #{encoder_lstm_forward.1} parent=1 // pred_check
      _
    $region47: #{encoder_lstm_forward.1} parent=1 // pred_check_branch
      %3188 = sbr.rel (0) target = $region49
    $region48: #{encoder_lstm_forward.1} parent=1 // pred_region
      _
    $region49: #{encoder_lstm_forward.1} parent=1 // pred_fallthru
      _
    %3189 = vsyncpa [#allocation5], 1
    %3190 = vsyncpa [#allocation7], 1

</llo_original>
